<compile_context>
chip_gen: v5e
topology: v5e:2x2
jax: 0.10.0
libtpu: 0.0.40
codegen_flags: <defaults>
</compile_context>

<pallas_src>
import functools

import jax
import jax.numpy as jnp
from jax.experimental import pallas as pl
from jax.experimental.pallas import tpu as pltpu


def _spatial_attention_kernel(w_ref, x_ref, o_ref, sum_ref, max_ref, pad_ref,
                              *, H, W, K, pad, C, conv_fori):
    # w_ref   : SMEM (2*K*K,) f32 conv weights, flat layout [in_ch(avg,max), kh, kw]
    # x_ref   : VMEM (NB, CB, H*W) lane-dense input block (native dtype)
    # o_ref   : VMEM (NB, 1, H*W) lane-dense output block (written on last C step)
    # sum_ref : VMEM (NB, H*W) f32 running channel sum
    # max_ref : VMEM (NB, H*W) f32 running channel max
    # pad_ref : VMEM (NB, 2, H+2p, W+2p) f32 zero-padded avg/max maps (epilogue only)
    c_idx = pl.program_id(1)
    last_c = pl.num_programs(1) - 1

    # ---- streamed channel reduce (mem-bound hot loop), lane-dense over H*W.
    # Keep the block in its native dtype (bf16 stays packed on v6e/v7x); accumulate
    # the sum in f32, compute the max natively and cast only the (NB,HW) partial.
    xb = x_ref[...]                                       # (NB, CB, HW)
    part_sum = jnp.sum(xb, axis=1, dtype=jnp.float32)     # (NB, HW) f32
    part_max = jnp.max(xb, axis=1)                        # (NB, HW) native dtype

    @pl.when(c_idx == 0)
    def _init():
        sum_ref[...] = jnp.zeros_like(sum_ref)
        max_ref[...] = jnp.full_like(max_ref, -jnp.inf)

    sum_ref[...] = sum_ref[...] + part_sum
    max_ref[...] = jnp.maximum(max_ref[...], part_max.astype(jnp.float32))

    # ---- epilogue: 7x7 conv over the two tiny (H, W) maps + sigmoid (pure VPU).
    @pl.when(c_idx == last_c)
    def _finalize():
        nb = sum_ref.shape[0]
        avg_flat = sum_ref[...] * (1.0 / C)               # (NB, HW) f32
        max_flat = max_ref[...]                           # (NB, HW) f32

        # Zero the halo (mean/max of zero-padded channels is 0, matching Conv2d's
        # zero padding), then scatter the flat lane-dense maps into the 2-D padded
        # scratch one image row per store (avoids an in-kernel lane->sublane
        # reshape that Mosaic may not lower for these unaligned shapes).
        pad_ref[...] = jnp.zeros_like(pad_ref)
        for h in range(H):
            row = slice(h * W, (h + 1) * W)
            pad_ref[:, 0, pad + h, pad:pad + W] = avg_flat[:, row]
            pad_ref[:, 1, pad + h, pad:pad + W] = max_flat[:, row]

        acc0 = jnp.zeros((nb, H, W), jnp.float32)

        if not conv_fori:
            # Small H*W: fully unrolled 2*K*K taps.  The lane-offset (kw) slices are
            # hoisted out of the kh loop, so the inner loop is cheap sublane slices
            # plus VPU multiply-adds.
            acc = acc0
            for kw in range(K):
                a_kw = pad_ref[:, 0, :, kw:kw + W]        # (NB, H+2p, W)
                m_kw = pad_ref[:, 1, :, kw:kw + W]
                for kh in range(K):
                    w_a = w_ref[kh * K + kw]              # avg-map weight
                    w_m = w_ref[K * K + kh * K + kw]      # max-map weight
                    acc = (acc + w_a * a_kw[:, kh:kh + H, :]
                               + w_m * m_kw[:, kh:kh + H, :])
        else:
            # Larger H*W: bound vreg live ranges — iterate the kh (sublane-shift)
            # axis with fori_loop so only one tap row's working set is live; keep
            # the kw taps unrolled for the scheduler.
            def kh_body(kh, acc):
                a_kh = pad_ref[:, 0, pl.ds(kh, H), :]     # (NB, H, W+2p)
                m_kh = pad_ref[:, 1, pl.ds(kh, H), :]
                for kw in range(K):
                    w_a = w_ref[kh * K + kw]
                    w_m = w_ref[K * K + kh * K + kw]
                    acc = (acc + w_a * a_kh[:, :, kw:kw + W]
                               + w_m * m_kh[:, :, kw:kw + W])
                return acc
            acc = jax.lax.fori_loop(0, K, kh_body, acc0)

        act = jax.nn.sigmoid(acc).astype(o_ref.dtype)     # (NB, H, W)
        # Gather rows back into the lane-dense output block; the HBM writeback of
        # this block is a single dense DMA.
        for h in range(H):
            o_ref[:, 0, h * W:(h + 1) * W] = act[:, h, :]


def _round_up(v, m):
    return (v + m - 1) // m * m


def _largest_divisor_leq(n, cap):
    cap = max(1, min(n, cap))
    for d in range(cap, 0, -1):
        if n % d == 0:
            return d
    return 1


def _vmem_budget_bytes():
    """Scoped-VMEM budget: ~3/4 of physical per-TensorCore VMEM, capped at 96 MiB.

    Falls back to 48 MiB (safe on v7x, whose entire per-TC VMEM is 64 MiB) when the
    hardware query is unavailable; v5e/v6e (128 MiB physical) get ~96 MiB.
    """
    try:
        phys = int(pltpu.get_tpu_info().vmem_capacity_bytes)
    except Exception:
        phys = 64 * 1024 * 1024
    return max(32 * 1024 * 1024, min((phys * 3) // 4, 96 * 1024 * 1024))


def spatial_attention(x, weight, *, kernel_size=7, batch_block=None, c_block=None):
    """CBAM spatial attention forward.

    x: (N, C, H, W); weight: (1, 2, K, K) conv weight (no bias).
    Returns sigmoid(conv2d(concat([mean_c(x), max_c(x)], 1))) of shape (N, 1, H, W).
    """
    assert kernel_size in (3, 7), "kernel size must be 3 or 7"
    pad = 3 if kernel_size == 7 else 1
    N, C, H, W = x.shape
    K = kernel_size
    HW = H * W

    itemsize = jnp.dtype(x.dtype).itemsize
    lane_hw = _round_up(HW, 128)                 # real (lane-padded) row footprint
    sub_mult = max(1, 32 // itemsize)            # sublane packing: 8 f32 / 16 bf16
    budget = _vmem_budget_bytes()

    # Batch blocking: amortize per-grid-step overhead, but keep >= 2 batch blocks
    # whenever N >= 2 so the "parallel" batch axis can shard across the two
    # TensorCores of a v7x chip; cap so the per-sample scratch stays small.
    if batch_block is None:
        bb_cap = max(1, (8 * 1024 * 1024) // (lane_hw * 4))
        batch_block = _largest_divisor_leq(N, max(1, min(8, N // 2, bb_cap)))
    assert N % batch_block == 0

    # Channel chunking: biggest chunk whose *padded* double-buffered input footprint
    # (plus accumulators, padded maps and double-buffered output) fits the budget.
    Hp, Wp = H + 2 * pad, W + 2 * pad
    scratch_bytes = (2 * _round_up(batch_block, 8) * lane_hw * 4
                     + batch_block * 2 * _round_up(Hp, 8) * _round_up(Wp, 128) * 4)
    out_bytes = 2 * batch_block * 8 * lane_hw * itemsize
    if c_block is None:
        per_buf_cap = max(1, (budget - scratch_bytes - out_bytes) // 2)
        per_buf_cap = min(per_buf_cap, 16 * 1024 * 1024)   # diminishing returns past ~16 MiB
        cap_c = max(1, per_buf_cap // (batch_block * lane_hw * itemsize))
        if C <= cap_c:
            c_block = C
        else:
            # Keep the second-minor block dim (8,128)-legal: a multiple of the
            # sublane packing that divides C (fall back to full C otherwise).
            cands = [d for d in range(sub_mult, cap_c + 1, sub_mult) if C % d == 0]
            c_block = max(cands) if cands else C
    assert C % c_block == 0

    x_flat = x.reshape(N, C, HW)                           # free, contiguous reshape
    w_flat = weight.reshape(-1).astype(jnp.float32)        # (2*K*K,) [in_ch, kh, kw]

    kernel = functools.partial(
        _spatial_attention_kernel, H=H, W=W, K=K, pad=pad, C=C,
        conv_fori=(batch_block * HW >= 8192))

    out_flat = pl.pallas_call(
        kernel,
        out_shape=jax.ShapeDtypeStruct((N, 1, HW), x.dtype),
        grid=(N // batch_block, C // c_block),
        in_specs=[
            pl.BlockSpec(memory_space=pltpu.SMEM),                    # conv weights
            pl.BlockSpec((batch_block, c_block, HW),
                         lambda n, c: (n, c, 0)),                     # lane-dense x
        ],
        out_specs=pl.BlockSpec((batch_block, 1, HW), lambda n, c: (n, 0, 0)),
        scratch_shapes=[
            pltpu.VMEM((batch_block, HW), jnp.float32),               # running sum
            pltpu.VMEM((batch_block, HW), jnp.float32),               # running max
            pltpu.VMEM((batch_block, 2, Hp, Wp), jnp.float32),        # padded maps
        ],
        compiler_params=pltpu.CompilerParams(
            dimension_semantics=("parallel", "arbitrary"),
            vmem_limit_bytes=budget),
    )(w_flat, x_flat)
    return out_flat.reshape(N, 1, H, W)


def _reference(x, weight, kernel_size=7):
    pad = 3 if kernel_size == 7 else 1
    avg = jnp.mean(x, axis=1, keepdims=True)
    mx = jnp.max(x, axis=1, keepdims=True)
    cat = jnp.concatenate([avg, mx], axis=1)
    y = jax.lax.conv_general_dilated(
        cat, weight, window_strides=(1, 1),
        padding=((pad, pad), (pad, pad)),
        dimension_numbers=("NCHW", "OIHW", "NCHW"))
    return jax.nn.sigmoid(y)


if __name__ == "__main__":
    key = jax.random.PRNGKey(0)
    kx, kw_key, kx2 = jax.random.split(key, 3)

    K = 7
    fan_in = 2 * K * K
    bound = float(fan_in) ** -0.5
    weight = jax.random.uniform(kw_key, (1, 2, K, K), dtype=jnp.float32,
                                minval=-bound, maxval=bound)

    # Primary small test: (N, C, H, W) = (2, 4, 16, 16), f32.
    N, C, H, W = 2, 4, 16, 16
    x = jax.random.normal(kx, (N, C, H, W), dtype=jnp.float32)
    ref = _reference(x, weight, kernel_size=K)
    out = jax.block_until_ready(spatial_attention(x, weight, kernel_size=K))
    assert out.shape == (N, 1, H, W)
    assert jnp.allclose(out, ref, atol=1e-4), "mismatch vs reference (f32 default)"

    # Chunked channel reduction + two batch blocks (exercises the accumulator path
    # and the 'parallel' batch axis): C=16 streamed as two chunks of 8.
    x2 = jax.random.normal(kx2, (2, 16, H, W), dtype=jnp.float32)
    ref2 = _reference(x2, weight, kernel_size=K)
    out2 = jax.block_until_ready(
        spatial_attention(x2, weight, kernel_size=K, batch_block=1, c_block=8))
    assert jnp.allclose(out2, ref2, atol=1e-4), "mismatch vs reference (chunked C)"

    # bf16 input path (native-dtype reduce, f32 sum accumulation, bf16 output).
    x_bf = x.astype(jnp.bfloat16)
    ref_bf = _reference(x_bf.astype(jnp.float32), weight, kernel_size=K)
    out_bf = jax.block_until_ready(spatial_attention(x_bf, weight, kernel_size=K))
    assert out_bf.dtype == jnp.bfloat16
    assert jnp.allclose(out_bf.astype(jnp.float32), ref_bf, atol=2e-2), \
        "mismatch vs reference (bf16)"

    print("KERNEL_OK")
</pallas_src>

<mosaic_0001>
module attributes {stable_mosaic.version = 11 : i64} {
  func.func @_spatial_attention_kernel(%arg0: i32, %arg1: i32, %arg2: memref<98xf32, #tpu.memory_space<smem>>, %arg3: memref<1x4x256xf32, #tpu.memory_space<vmem>>, %arg4: memref<1x1x256xf32, #tpu.memory_space<vmem>>, %arg5: memref<1x256xf32, #tpu.memory_space<vmem>>, %arg6: memref<1x256xf32, #tpu.memory_space<vmem>>, %arg7: memref<1x2x22x22xf32, #tpu.memory_space<vmem>>) attributes {dimension_semantics = [#tpu.dimension_semantics<parallel>, #tpu.dimension_semantics<arbitrary>], iteration_bounds = array<i64: 2, 1>, scalar_prefetch = 0 : i64, scratch_operands = 3 : i64, tpu.core_type = #tpu.core_type<tc>, window_params = [{transform_indices = @transform_0, window_bounds = array<i64: 98>}, {transform_indices = @transform_1, window_bounds = array<i64: 1, 4, 256>}, {transform_indices = @transform_2, window_bounds = array<i64: 1, 1, 256>}]} {
    %c0 = arith.constant 0 : index
    %c0_0 = arith.constant 0 : index
    %c0_1 = arith.constant 0 : index
    %0 = vector.load %arg3[%c0, %c0_0, %c0_1] : memref<1x4x256xf32, #tpu.memory_space<vmem>>, vector<1x4x256xf32>
    %cst = arith.constant dense<0.000000e+00> : vector<1x256xf32>
    %1 = vector.multi_reduction <add>, %0, %cst [1] : vector<1x4x256xf32> to vector<1x256xf32>
    %cst_2 = arith.constant dense<0xFF800000> : vector<1x256xf32>
    %2 = vector.multi_reduction <maximumf>, %0, %cst_2 [1] : vector<1x4x256xf32> to vector<1x256xf32>
    %c0_i32 = arith.constant 0 : i32
    %3 = arith.cmpi eq, %arg1, %c0_i32 : i32
    %4 = arith.extui %3 : i1 to i32
    %c0_i32_3 = arith.constant 0 : i32
    %5 = arith.cmpi ne, %4, %c0_i32_3 : i32
    scf.if %5 {
      %cst_14 = arith.constant 0.000000e+00 : f32
      %15 = vector.broadcast %cst_14 : f32 to vector<1x256xf32>
      %c0_15 = arith.constant 0 : index
      %c0_16 = arith.constant 0 : index
      %16 = vector.load %arg5[%c0_15, %c0_16] : memref<1x256xf32, #tpu.memory_space<vmem>>, vector<1x256xf32>
      tpu.vector_store %arg5[%c0_15, %c0_16], %15 {strides = array<i32>} : memref<1x256xf32, #tpu.memory_space<vmem>>, vector<1x256xf32>,
      %cst_17 = arith.constant 0xFF800000 : f32
      %17 = vector.broadcast %cst_17 : f32 to vector<1x256xf32>
      %c0_18 = arith.constant 0 : index
      %c0_19 = arith.constant 0 : index
      %18 = vector.load %arg6[%c0_18, %c0_19] : memref<1x256xf32, #tpu.memory_space<vmem>>, vector<1x256xf32>
      tpu.vector_store %arg6[%c0_18, %c0_19], %17 {strides = array<i32>} : memref<1x256xf32, #tpu.memory_space<vmem>>, vector<1x256xf32>,
    } else {
    }
    %c0_4 = arith.constant 0 : index
    %c0_5 = arith.constant 0 : index
    %6 = vector.load %arg5[%c0_4, %c0_5] : memref<1x256xf32, #tpu.memory_space<vmem>>, vector<1x256xf32>
    %7 = arith.addf %6, %1 : vector<1x256xf32>
    %c0_6 = arith.constant 0 : index
    %c0_7 = arith.constant 0 : index
    %8 = vector.load %arg5[%c0_6, %c0_7] : memref<1x256xf32, #tpu.memory_space<vmem>>, vector<1x256xf32>
    tpu.vector_store %arg5[%c0_6, %c0_7], %7 {strides = array<i32>} : memref<1x256xf32, #tpu.memory_space<vmem>>, vector<1x256xf32>,
    %c0_8 = arith.constant 0 : index
    %c0_9 = arith.constant 0 : index
    %9 = vector.load %arg6[%c0_8, %c0_9] : memref<1x256xf32, #tpu.memory_space<vmem>>, vector<1x256xf32>
    %10 = arith.maximumf %9, %2 : vector<1x256xf32>
    %c0_10 = arith.constant 0 : index
    %c0_11 = arith.constant 0 : index
    %11 = vector.load %arg6[%c0_10, %c0_11] : memref<1x256xf32, #tpu.memory_space<vmem>>, vector<1x256xf32>
    tpu.vector_store %arg6[%c0_10, %c0_11], %10 {strides = array<i32>} : memref<1x256xf32, #tpu.memory_space<vmem>>, vector<1x256xf32>,
    %c0_i32_12 = arith.constant 0 : i32
    %12 = arith.cmpi eq, %arg1, %c0_i32_12 : i32
    %13 = arith.extui %12 : i1 to i32
    %c0_i32_13 = arith.constant 0 : i32
    %14 = arith.cmpi ne, %13, %c0_i32_13 : i32
    scf.if %14 {
      %c0_14 = arith.constant 0 : index
      %c0_15 = arith.constant 0 : index
      %15 = vector.load %arg5[%c0_14, %c0_15] : memref<1x256xf32, #tpu.memory_space<vmem>>, vector<1x256xf32>
      %cst_16 = arith.constant 2.500000e-01 : f32
      %16 = vector.broadcast %cst_16 : f32 to vector<1x256xf32>
      %17 = arith.mulf %15, %16 : vector<1x256xf32>
      %c0_17 = arith.constant 0 : index
      %c0_18 = arith.constant 0 : index
      %18 = vector.load %arg6[%c0_17, %c0_18] : memref<1x256xf32, #tpu.memory_space<vmem>>, vector<1x256xf32>
      %cst_19 = arith.constant 0.000000e+00 : f32
      %19 = vector.broadcast %cst_19 : f32 to vector<1x2x22x22xf32>
      %c0_20 = arith.constant 0 : index
      %c0_21 = arith.constant 0 : index
      %c0_22 = arith.constant 0 : index
      %c0_23 = arith.constant 0 : index
      %20 = vector.load %arg7[%c0_20, %c0_21, %c0_22, %c0_23] : memref<1x2x22x22xf32, #tpu.memory_space<vmem>>, vector<1x2x22x22xf32>
      tpu.vector_store %arg7[%c0_20, %c0_21, %c0_22, %c0_23], %19 {strides = array<i32>} : memref<1x2x22x22xf32, #tpu.memory_space<vmem>>, vector<1x2x22x22xf32>,
      %21 = vector.extract_strided_slice %17 {offsets = [0, 0], sizes = [1, 16], strides = [1, 1]} : vector<1x256xf32> to vector<1x16xf32>
      %c0_24 = arith.constant 0 : index
      %c0_25 = arith.constant 0 : index
      %c3 = arith.constant 3 : index
      %c3_26 = arith.constant 3 : index
      %22 = vector.load %arg7[%c0_24, %c0_25, %c3, %c3_26] : memref<1x2x22x22xf32, #tpu.memory_space<vmem>>, vector<1x1x1x16xf32>
      %23 = vector.shape_cast %22 : vector<1x1x1x16xf32> to vector<1x16xf32>
      %24 = vector.shape_cast %21 : vector<1x16xf32> to vector<1x1x1x16xf32>
      tpu.vector_store %arg7[%c0_24, %c0_25, %c3, %c3_26], %24 {strides = array<i32>} : memref<1x2x22x22xf32, #tpu.memory_space<vmem>>, vector<1x1x1x16xf32>,
      %25 = vector.extract_strided_slice %18 {offsets = [0, 0], sizes = [1, 16], strides = [1, 1]} : vector<1x256xf32> to vector<1x16xf32>
      %c0_27 = arith.constant 0 : index
      %c1 = arith.constant 1 : index
      %c3_28 = arith.constant 3 : index
      %c3_29 = arith.constant 3 : index
      %26 = vector.load %arg7[%c0_27, %c1, %c3_28, %c3_29] : memref<1x2x22x22xf32, #tpu.memory_space<vmem>>, vector<1x1x1x16xf32>
      %27 = vector.shape_cast %26 : vector<1x1x1x16xf32> to vector<1x16xf32>
      %28 = vector.shape_cast %25 : vector<1x16xf32> to vector<1x1x1x16xf32>
      tpu.vector_store %arg7[%c0_27, %c1, %c3_28, %c3_29], %28 {strides = array<i32>} : memref<1x2x22x22xf32, #tpu.memory_space<vmem>>, vector<1x1x1x16xf32>,
      %29 = vector.extract_strided_slice %17 {offsets = [0, 16], sizes = [1, 16], strides = [1, 1]} : vector<1x256xf32> to vector<1x16xf32>
      %c0_30 = arith.constant 0 : index
      %c0_31 = arith.constant 0 : index
      %c4 = arith.constant 4 : index
      %c3_32 = arith.constant 3 : index
      %30 = vector.load %arg7[%c0_30, %c0_31, %c4, %c3_32] : memref<1x2x22x22xf32, #tpu.memory_space<vmem>>, vector<1x1x1x16xf32>
      %31 = vector.shape_cast %30 : vector<1x1x1x16xf32> to vector<1x16xf32>
      %32 = vector.shape_cast %29 : vector<1x16xf32> to vector<1x1x1x16xf32>
      tpu.vector_store %arg7[%c0_30, %c0_31, %c4, %c3_32], %32 {strides = array<i32>} : memref<1x2x22x22xf32, #tpu.memory_space<vmem>>, vector<1x1x1x16xf32>,
      %33 = vector.extract_strided_slice %18 {offsets = [0, 16], sizes = [1, 16], strides = [1, 1]} : vector<1x256xf32> to vector<1x16xf32>
      %c0_33 = arith.constant 0 : index
      %c1_34 = arith.constant 1 : index
      %c4_35 = arith.constant 4 : index
      %c3_36 = arith.constant 3 : index
      %34 = vector.load %arg7[%c0_33, %c1_34, %c4_35, %c3_36] : memref<1x2x22x22xf32, #tpu.memory_space<vmem>>, vector<1x1x1x16xf32>
      %35 = vector.shape_cast %34 : vector<1x1x1x16xf32> to vector<1x16xf32>
      %36 = vector.shape_cast %33 : vector<1x16xf32> to vector<1x1x1x16xf32>
      tpu.vector_store %arg7[%c0_33, %c1_34, %c4_35, %c3_36], %36 {strides = array<i32>} : memref<1x2x22x22xf32, #tpu.memory_space<vmem>>, vector<1x1x1x16xf32>,
      %37 = vector.extract_strided_slice %17 {offsets = [0, 32], sizes = [1, 16], strides = [1, 1]} : vector<1x256xf32> to vector<1x16xf32>
      %c0_37 = arith.constant 0 : index
      %c0_38 = arith.constant 0 : index
      %c5 = arith.constant 5 : index
      %c3_39 = arith.constant 3 : index
      %38 = vector.load %arg7[%c0_37, %c0_38, %c5, %c3_39] : memref<1x2x22x22xf32, #tpu.memory_space<vmem>>, vector<1x1x1x16xf32>
      %39 = vector.shape_cast %38 : vector<1x1x1x16xf32> to vector<1x16xf32>
      %40 = vector.shape_cast %37 : vector<1x16xf32> to vector<1x1x1x16xf32>
      tpu.vector_store %arg7[%c0_37, %c0_38, %c5, %c3_39], %40 {strides = array<i32>} : memref<1x2x22x22xf32, #tpu.memory_space<vmem>>, vector<1x1x1x16xf32>,
      %41 = vector.extract_strided_slice %18 {offsets = [0, 32], sizes = [1, 16], strides = [1, 1]} : vector<1x256xf32> to vector<1x16xf32>
      %c0_40 = arith.constant 0 : index
      %c1_41 = arith.constant 1 : index
      %c5_42 = arith.constant 5 : index
      %c3_43 = arith.constant 3 : index
      %42 = vector.load %arg7[%c0_40, %c1_41, %c5_42, %c3_43] : memref<1x2x22x22xf32, #tpu.memory_space<vmem>>, vector<1x1x1x16xf32>
      %43 = vector.shape_cast %42 : vector<1x1x1x16xf32> to vector<1x16xf32>
      %44 = vector.shape_cast %41 : vector<1x16xf32> to vector<1x1x1x16xf32>
      tpu.vector_store %arg7[%c0_40, %c1_41, %c5_42, %c3_43], %44 {strides = array<i32>} : memref<1x2x22x22xf32, #tpu.memory_space<vmem>>, vector<1x1x1x16xf32>,
      %45 = vector.extract_strided_slice %17 {offsets = [0, 48], sizes = [1, 16], strides = [1, 1]} : vector<1x256xf32> to vector<1x16xf32>
      %c0_44 = arith.constant 0 : index
      %c0_45 = arith.constant 0 : index
      %c6 = arith.constant 6 : index
      %c3_46 = arith.constant 3 : index
      %46 = vector.load %arg7[%c0_44, %c0_45, %c6, %c3_46] : memref<1x2x22x22xf32, #tpu.memory_space<vmem>>, vector<1x1x1x16xf32>
      %47 = vector.shape_cast %46 : vector<1x1x1x16xf32> to vector<1x16xf32>
      %48 = vector.shape_cast %45 : vector<1x16xf32> to vector<1x1x1x16xf32>
      tpu.vector_store %arg7[%c0_44, %c0_45, %c6, %c3_46], %48 {strides = array<i32>} : memref<1x2x22x22xf32, #tpu.memory_space<vmem>>, vector<1x1x1x16xf32>,
      %49 = vector.extract_strided_slice %18 {offsets = [0, 48], sizes = [1, 16], strides = [1, 1]} : vector<1x256xf32> to vector<1x16xf32>
      %c0_47 = arith.constant 0 : index
      %c1_48 = arith.constant 1 : index
      %c6_49 = arith.constant 6 : index
      %c3_50 = arith.constant 3 : index
      %50 = vector.load %arg7[%c0_47, %c1_48, %c6_49, %c3_50] : memref<1x2x22x22xf32, #tpu.memory_space<vmem>>, vector<1x1x1x16xf32>
      %51 = vector.shape_cast %50 : vector<1x1x1x16xf32> to vector<1x16xf32>
      %52 = vector.shape_cast %49 : vector<1x16xf32> to vector<1x1x1x16xf32>
      tpu.vector_store %arg7[%c0_47, %c1_48, %c6_49, %c3_50], %52 {strides = array<i32>} : memref<1x2x22x22xf32, #tpu.memory_space<vmem>>, vector<1x1x1x16xf32>,
      %53 = vector.extract_strided_slice %17 {offsets = [0, 64], sizes = [1, 16], strides = [1, 1]} : vector<1x256xf32> to vector<1x16xf32>
      %c0_51 = arith.constant 0 : index
      %c0_52 = arith.constant 0 : index
      %c7 = arith.constant 7 : index
      %c3_53 = arith.constant 3 : index
      %54 = vector.load %arg7[%c0_51, %c0_52, %c7, %c3_53] : memref<1x2x22x22xf32, #tpu.memory_space<vmem>>, vector<1x1x1x16xf32>
      %55 = vector.shape_cast %54 : vector<1x1x1x16xf32> to vector<1x16xf32>
      %56 = vector.shape_cast %53 : vector<1x16xf32> to vector<1x1x1x16xf32>
      tpu.vector_store %arg7[%c0_51, %c0_52, %c7, %c3_53], %56 {strides = array<i32>} : memref<1x2x22x22xf32, #tpu.memory_space<vmem>>, vector<1x1x1x16xf32>,
      %57 = vector.extract_strided_slice %18 {offsets = [0, 64], sizes = [1, 16], strides = [1, 1]} : vector<1x256xf32> to vector<1x16xf32>
      %c0_54 = arith.constant 0 : index
      %c1_55 = arith.constant 1 : index
      %c7_56 = arith.constant 7 : index
      %c3_57 = arith.constant 3 : index
      %58 = vector.load %arg7[%c0_54, %c1_55, %c7_56, %c3_57] : memref<1x2x22x22xf32, #tpu.memory_space<vmem>>, vector<1x1x1x16xf32>
      %59 = vector.shape_cast %58 : vector<1x1x1x16xf32> to vector<1x16xf32>
      %60 = vector.shape_cast %57 : vector<1x16xf32> to vector<1x1x1x16xf32>
      tpu.vector_store %arg7[%c0_54, %c1_55, %c7_56, %c3_57], %60 {strides = array<i32>} : memref<1x2x22x22xf32, #tpu.memory_space<vmem>>, vector<1x1x1x16xf32>,
      %61 = vector.extract_strided_slice %17 {offsets = [0, 80], sizes = [1, 16], strides = [1, 1]} : vector<1x256xf32> to vector<1x16xf32>
      %c0_58 = arith.constant 0 : index
      %c0_59 = arith.constant 0 : index
      %c8 = arith.constant 8 : index
      %c3_60 = arith.constant 3 : index
      %62 = vector.load %arg7[%c0_58, %c0_59, %c8, %c3_60] : memref<1x2x22x22xf32, #tpu.memory_space<vmem>>, vector<1x1x1x16xf32>
      %63 = vector.shape_cast %62 : vector<1x1x1x16xf32> to vector<1x16xf32>
      %64 = vector.shape_cast %61 : vector<1x16xf32> to vector<1x1x1x16xf32>
      tpu.vector_store %arg7[%c0_58, %c0_59, %c8, %c3_60], %64 {strides = array<i32>} : memref<1x2x22x22xf32, #tpu.memory_space<vmem>>, vector<1x1x1x16xf32>,
      %65 = vector.extract_strided_slice %18 {offsets = [0, 80], sizes = [1, 16], strides = [1, 1]} : vector<1x256xf32> to vector<1x16xf32>
      %c0_61 = arith.constant 0 : index
      %c1_62 = arith.constant 1 : index
      %c8_63 = arith.constant 8 : index
      %c3_64 = arith.constant 3 : index
      %66 = vector.load %arg7[%c0_61, %c1_62, %c8_63, %c3_64] : memref<1x2x22x22xf32, #tpu.memory_space<vmem>>, vector<1x1x1x16xf32>
      %67 = vector.shape_cast %66 : vector<1x1x1x16xf32> to vector<1x16xf32>
      %68 = vector.shape_cast %65 : vector<1x16xf32> to vector<1x1x1x16xf32>
      tpu.vector_store %arg7[%c0_61, %c1_62, %c8_63, %c3_64], %68 {strides = array<i32>} : memref<1x2x22x22xf32, #tpu.memory_space<vmem>>, vector<1x1x1x16xf32>,
      %69 = vector.extract_strided_slice %17 {offsets = [0, 96], sizes = [1, 16], strides = [1, 1]} : vector<1x256xf32> to vector<1x16xf32>
      %c0_65 = arith.constant 0 : index
      %c0_66 = arith.constant 0 : index
      %c9 = arith.constant 9 : index
      %c3_67 = arith.constant 3 : index
      %70 = vector.load %arg7[%c0_65, %c0_66, %c9, %c3_67] : memref<1x2x22x22xf32, #tpu.memory_space<vmem>>, vector<1x1x1x16xf32>
      %71 = vector.shape_cast %70 : vector<1x1x1x16xf32> to vector<1x16xf32>
      %72 = vector.shape_cast %69 : vector<1x16xf32> to vector<1x1x1x16xf32>
      tpu.vector_store %arg7[%c0_65, %c0_66, %c9, %c3_67], %72 {strides = array<i32>} : memref<1x2x22x22xf32, #tpu.memory_space<vmem>>, vector<1x1x1x16xf32>,
      %73 = vector.extract_strided_slice %18 {offsets = [0, 96], sizes = [1, 16], strides = [1, 1]} : vector<1x256xf32> to vector<1x16xf32>
      %c0_68 = arith.constant 0 : index
      %c1_69 = arith.constant 1 : index
      %c9_70 = arith.constant 9 : index
      %c3_71 = arith.constant 3 : index
      %74 = vector.load %arg7[%c0_68, %c1_69, %c9_70, %c3_71] : memref<1x2x22x22xf32, #tpu.memory_space<vmem>>, vector<1x1x1x16xf32>
      %75 = vector.shape_cast %74 : vector<1x1x1x16xf32> to vector<1x16xf32>
      %76 = vector.shape_cast %73 : vector<1x16xf32> to vector<1x1x1x16xf32>
      tpu.vector_store %arg7[%c0_68, %c1_69, %c9_70, %c3_71], %76 {strides = array<i32>} : memref<1x2x22x22xf32, #tpu.memory_space<vmem>>, vector<1x1x1x16xf32>,
      %77 = vector.extract_strided_slice %17 {offsets = [0, 112], sizes = [1, 16], strides = [1, 1]} : vector<1x256xf32> to vector<1x16xf32>
      %c0_72 = arith.constant 0 : index
      %c0_73 = arith.constant 0 : index
      %c10 = arith.constant 10 : index
      %c3_74 = arith.constant 3 : index
      %78 = vector.load %arg7[%c0_72, %c0_73, %c10, %c3_74] : memref<1x2x22x22xf32, #tpu.memory_space<vmem>>, vector<1x1x1x16xf32>
      %79 = vector.shape_cast %78 : vector<1x1x1x16xf32> to vector<1x16xf32>
      %80 = vector.shape_cast %77 : vector<1x16xf32> to vector<1x1x1x16xf32>
      tpu.vector_store %arg7[%c0_72, %c0_73, %c10, %c3_74], %80 {strides = array<i32>} : memref<1x2x22x22xf32, #tpu.memory_space<vmem>>, vector<1x1x1x16xf32>,
      %81 = vector.extract_strided_slice %18 {offsets = [0, 112], sizes = [1, 16], strides = [1, 1]} : vector<1x256xf32> to vector<1x16xf32>
      %c0_75 = arith.constant 0 : index
      %c1_76 = arith.constant 1 : index
      %c10_77 = arith.constant 10 : index
      %c3_78 = arith.constant 3 : index
      %82 = vector.load %arg7[%c0_75, %c1_76, %c10_77, %c3_78] : memref<1x2x22x22xf32, #tpu.memory_space<vmem>>, vector<1x1x1x16xf32>
      %83 = vector.shape_cast %82 : vector<1x1x1x16xf32> to vector<1x16xf32>
      %84 = vector.shape_cast %81 : vector<1x16xf32> to vector<1x1x1x16xf32>
      tpu.vector_store %arg7[%c0_75, %c1_76, %c10_77, %c3_78], %84 {strides = array<i32>} : memref<1x2x22x22xf32, #tpu.memory_space<vmem>>, vector<1x1x1x16xf32>,
      %85 = vector.extract_strided_slice %17 {offsets = [0, 128], sizes = [1, 16], strides = [1, 1]} : vector<1x256xf32> to vector<1x16xf32>
      %c0_79 = arith.constant 0 : index
      %c0_80 = arith.constant 0 : index
      %c11 = arith.constant 11 : index
      %c3_81 = arith.constant 3 : index
      %86 = vector.load %arg7[%c0_79, %c0_80, %c11, %c3_81] : memref<1x2x22x22xf32, #tpu.memory_space<vmem>>, vector<1x1x1x16xf32>
      %87 = vector.shape_cast %86 : vector<1x1x1x16xf32> to vector<1x16xf32>
      %88 = vector.shape_cast %85 : vector<1x16xf32> to vector<1x1x1x16xf32>
      tpu.vector_store %arg7[%c0_79, %c0_80, %c11, %c3_81], %88 {strides = array<i32>} : memref<1x2x22x22xf32, #tpu.memory_space<vmem>>, vector<1x1x1x16xf32>,
      %89 = vector.extract_strided_slice %18 {offsets = [0, 128], sizes = [1, 16], strides = [1, 1]} : vector<1x256xf32> to vector<1x16xf32>
      %c0_82 = arith.constant 0 : index
      %c1_83 = arith.constant 1 : index
      %c11_84 = arith.constant 11 : index
      %c3_85 = arith.constant 3 : index
      %90 = vector.load %arg7[%c0_82, %c1_83, %c11_84, %c3_85] : memref<1x2x22x22xf32, #tpu.memory_space<vmem>>, vector<1x1x1x16xf32>
      %91 = vector.shape_cast %90 : vector<1x1x1x16xf32> to vector<1x16xf32>
      %92 = vector.shape_cast %89 : vector<1x16xf32> to vector<1x1x1x16xf32>
      tpu.vector_store %arg7[%c0_82, %c1_83, %c11_84, %c3_85], %92 {strides = array<i32>} : memref<1x2x22x22xf32, #tpu.memory_space<vmem>>, vector<1x1x1x16xf32>,
      %93 = vector.extract_strided_slice %17 {offsets = [0, 144], sizes = [1, 16], strides = [1, 1]} : vector<1x256xf32> to vector<1x16xf32>
      %c0_86 = arith.constant 0 : index
      %c0_87 = arith.constant 0 : index
      %c12 = arith.constant 12 : index
      %c3_88 = arith.constant 3 : index
      %94 = vector.load %arg7[%c0_86, %c0_87, %c12, %c3_88] : memref<1x2x22x22xf32, #tpu.memory_space<vmem>>, vector<1x1x1x16xf32>
      %95 = vector.shape_cast %94 : vector<1x1x1x16xf32> to vector<1x16xf32>
      %96 = vector.shape_cast %93 : vector<1x16xf32> to vector<1x1x1x16xf32>
      tpu.vector_store %arg7[%c0_86, %c0_87, %c12, %c3_88], %96 {strides = array<i32>} : memref<1x2x22x22xf32, #tpu.memory_space<vmem>>, vector<1x1x1x16xf32>,
      %97 = vector.extract_strided_slice %18 {offsets = [0, 144], sizes = [1, 16], strides = [1, 1]} : vector<1x256xf32> to vector<1x16xf32>
      %c0_89 = arith.constant 0 : index
      %c1_90 = arith.constant 1 : index
      %c12_91 = arith.constant 12 : index
      %c3_92 = arith.constant 3 : index
      %98 = vector.load %arg7[%c0_89, %c1_90, %c12_91, %c3_92] : memref<1x2x22x22xf32, #tpu.memory_space<vmem>>, vector<1x1x1x16xf32>
      %99 = vector.shape_cast %98 : vector<1x1x1x16xf32> to vector<1x16xf32>
      %100 = vector.shape_cast %97 : vector<1x16xf32> to vector<1x1x1x16xf32>
      tpu.vector_store %arg7[%c0_89, %c1_90, %c12_91, %c3_92], %100 {strides = array<i32>} : memref<1x2x22x22xf32, #tpu.memory_space<vmem>>, vector<1x1x1x16xf32>,
      %101 = vector.extract_strided_slice %17 {offsets = [0, 160], sizes = [1, 16], strides = [1, 1]} : vector<1x256xf32> to vector<1x16xf32>
      %c0_93 = arith.constant 0 : index
      %c0_94 = arith.constant 0 : index
      %c13 = arith.constant 13 : index
      %c3_95 = arith.constant 3 : index
      %102 = vector.load %arg7[%c0_93, %c0_94, %c13, %c3_95] : memref<1x2x22x22xf32, #tpu.memory_space<vmem>>, vector<1x1x1x16xf32>
      %103 = vector.shape_cast %102 : vector<1x1x1x16xf32> to vector<1x16xf32>
      %104 = vector.shape_cast %101 : vector<1x16xf32> to vector<1x1x1x16xf32>
      tpu.vector_store %arg7[%c0_93, %c0_94, %c13, %c3_95], %104 {strides = array<i32>} : memref<1x2x22x22xf32, #tpu.memory_space<vmem>>, vector<1x1x1x16xf32>,
      %105 = vector.extract_strided_slice %18 {offsets = [0, 160], sizes = [1, 16], strides = [1, 1]} : vector<1x256xf32> to vector<1x16xf32>
      %c0_96 = arith.constant 0 : index
      %c1_97 = arith.constant 1 : index
      %c13_98 = arith.constant 13 : index
      %c3_99 = arith.constant 3 : index
      %106 = vector.load %arg7[%c0_96, %c1_97, %c13_98, %c3_99] : memref<1x2x22x22xf32, #tpu.memory_space<vmem>>, vector<1x1x1x16xf32>
      %107 = vector.shape_cast %106 : vector<1x1x1x16xf32> to vector<1x16xf32>
      %108 = vector.shape_cast %105 : vector<1x16xf32> to vector<1x1x1x16xf32>
      tpu.vector_store %arg7[%c0_96, %c1_97, %c13_98, %c3_99], %108 {strides = array<i32>} : memref<1x2x22x22xf32, #tpu.memory_space<vmem>>, vector<1x1x1x16xf32>,
      %109 = vector.extract_strided_slice %17 {offsets = [0, 176], sizes = [1, 16], strides = [1, 1]} : vector<1x256xf32> to vector<1x16xf32>
      %c0_100 = arith.constant 0 : index
      %c0_101 = arith.constant 0 : index
      %c14 = arith.constant 14 : index
      %c3_102 = arith.constant 3 : index
      %110 = vector.load %arg7[%c0_100, %c0_101, %c14, %c3_102] : memref<1x2x22x22xf32, #tpu.memory_space<vmem>>, vector<1x1x1x16xf32>
      %111 = vector.shape_cast %110 : vector<1x1x1x16xf32> to vector<1x16xf32>
      %112 = vector.shape_cast %109 : vector<1x16xf32> to vector<1x1x1x16xf32>
      tpu.vector_store %arg7[%c0_100, %c0_101, %c14, %c3_102], %112 {strides = array<i32>} : memref<1x2x22x22xf32, #tpu.memory_space<vmem>>, vector<1x1x1x16xf32>,
      %113 = vector.extract_strided_slice %18 {offsets = [0, 176], sizes = [1, 16], strides = [1, 1]} : vector<1x256xf32> to vector<1x16xf32>
      %c0_103 = arith.constant 0 : index
      %c1_104 = arith.constant 1 : index
      %c14_105 = arith.constant 14 : index
      %c3_106 = arith.constant 3 : index
      %114 = vector.load %arg7[%c0_103, %c1_104, %c14_105, %c3_106] : memref<1x2x22x22xf32, #tpu.memory_space<vmem>>, vector<1x1x1x16xf32>
      %115 = vector.shape_cast %114 : vector<1x1x1x16xf32> to vector<1x16xf32>
      %116 = vector.shape_cast %113 : vector<1x16xf32> to vector<1x1x1x16xf32>
      tpu.vector_store %arg7[%c0_103, %c1_104, %c14_105, %c3_106], %116 {strides = array<i32>} : memref<1x2x22x22xf32, #tpu.memory_space<vmem>>, vector<1x1x1x16xf32>,
      %117 = vector.extract_strided_slice %17 {offsets = [0, 192], sizes = [1, 16], strides = [1, 1]} : vector<1x256xf32> to vector<1x16xf32>
      %c0_107 = arith.constant 0 : index
      %c0_108 = arith.constant 0 : index
      %c15 = arith.constant 15 : index
      %c3_109 = arith.constant 3 : index
      %118 = vector.load %arg7[%c0_107, %c0_108, %c15, %c3_109] : memref<1x2x22x22xf32, #tpu.memory_space<vmem>>, vector<1x1x1x16xf32>
      %119 = vector.shape_cast %118 : vector<1x1x1x16xf32> to vector<1x16xf32>
      %120 = vector.shape_cast %117 : vector<1x16xf32> to vector<1x1x1x16xf32>
      tpu.vector_store %arg7[%c0_107, %c0_108, %c15, %c3_109], %120 {strides = array<i32>} : memref<1x2x22x22xf32, #tpu.memory_space<vmem>>, vector<1x1x1x16xf32>,
      %121 = vector.extract_strided_slice %18 {offsets = [0, 192], sizes = [1, 16], strides = [1, 1]} : vector<1x256xf32> to vector<1x16xf32>
      %c0_110 = arith.constant 0 : index
      %c1_111 = arith.constant 1 : index
      %c15_112 = arith.constant 15 : index
      %c3_113 = arith.constant 3 : index
      %122 = vector.load %arg7[%c0_110, %c1_111, %c15_112, %c3_113] : memref<1x2x22x22xf32, #tpu.memory_space<vmem>>, vector<1x1x1x16xf32>
      %123 = vector.shape_cast %122 : vector<1x1x1x16xf32> to vector<1x16xf32>
      %124 = vector.shape_cast %121 : vector<1x16xf32> to vector<1x1x1x16xf32>
      tpu.vector_store %arg7[%c0_110, %c1_111, %c15_112, %c3_113], %124 {strides = array<i32>} : memref<1x2x22x22xf32, #tpu.memory_space<vmem>>, vector<1x1x1x16xf32>,
      %125 = vector.extract_strided_slice %17 {offsets = [0, 208], sizes = [1, 16], strides = [1, 1]} : vector<1x256xf32> to vector<1x16xf32>
      %c0_114 = arith.constant 0 : index
      %c0_115 = arith.constant 0 : index
      %c16 = arith.constant 16 : index
      %c3_116 = arith.constant 3 : index
      %126 = vector.load %arg7[%c0_114, %c0_115, %c16, %c3_116] : memref<1x2x22x22xf32, #tpu.memory_space<vmem>>, vector<1x1x1x16xf32>
      %127 = vector.shape_cast %126 : vector<1x1x1x16xf32> to vector<1x16xf32>
      %128 = vector.shape_cast %125 : vector<1x16xf32> to vector<1x1x1x16xf32>
      tpu.vector_store %arg7[%c0_114, %c0_115, %c16, %c3_116], %128 {strides = array<i32>} : memref<1x2x22x22xf32, #tpu.memory_space<vmem>>, vector<1x1x1x16xf32>,
      %129 = vector.extract_strided_slice %18 {offsets = [0, 208], sizes = [1, 16], strides = [1, 1]} : vector<1x256xf32> to vector<1x16xf32>
      %c0_117 = arith.constant 0 : index
      %c1_118 = arith.constant 1 : index
      %c16_119 = arith.constant 16 : index
      %c3_120 = arith.constant 3 : index
      %130 = vector.load %arg7[%c0_117, %c1_118, %c16_119, %c3_120] : memref<1x2x22x22xf32, #tpu.memory_space<vmem>>, vector<1x1x1x16xf32>
      %131 = vector.shape_cast %130 : vector<1x1x1x16xf32> to vector<1x16xf32>
      %132 = vector.shape_cast %129 : vector<1x16xf32> to vector<1x1x1x16xf32>
      tpu.vector_store %arg7[%c0_117, %c1_118, %c16_119, %c3_120], %132 {strides = array<i32>} : memref<1x2x22x22xf32, #tpu.memory_space<vmem>>, vector<1x1x1x16xf32>,
      %133 = vector.extract_strided_slice %17 {offsets = [0, 224], sizes = [1, 16], strides = [1, 1]} : vector<1x256xf32> to vector<1x16xf32>
      %c0_121 = arith.constant 0 : index
      %c0_122 = arith.constant 0 : index
      %c17 = arith.constant 17 : index
      %c3_123 = arith.constant 3 : index
      %134 = vector.load %arg7[%c0_121, %c0_122, %c17, %c3_123] : memref<1x2x22x22xf32, #tpu.memory_space<vmem>>, vector<1x1x1x16xf32>
      %135 = vector.shape_cast %134 : vector<1x1x1x16xf32> to vector<1x16xf32>
      %136 = vector.shape_cast %133 : vector<1x16xf32> to vector<1x1x1x16xf32>
      tpu.vector_store %arg7[%c0_121, %c0_122, %c17, %c3_123], %136 {strides = array<i32>} : memref<1x2x22x22xf32, #tpu.memory_space<vmem>>, vector<1x1x1x16xf32>,
      %137 = vector.extract_strided_slice %18 {offsets = [0, 224], sizes = [1, 16], strides = [1, 1]} : vector<1x256xf32> to vector<1x16xf32>
      %c0_124 = arith.constant 0 : index
      %c1_125 = arith.constant 1 : index
      %c17_126 = arith.constant 17 : index
      %c3_127 = arith.constant 3 : index
      %138 = vector.load %arg7[%c0_124, %c1_125, %c17_126, %c3_127] : memref<1x2x22x22xf32, #tpu.memory_space<vmem>>, vector<1x1x1x16xf32>
      %139 = vector.shape_cast %138 : vector<1x1x1x16xf32> to vector<1x16xf32>
      %140 = vector.shape_cast %137 : vector<1x16xf32> to vector<1x1x1x16xf32>
      tpu.vector_store %arg7[%c0_124, %c1_125, %c17_126, %c3_127], %140 {strides = array<i32>} : memref<1x2x22x22xf32, #tpu.memory_space<vmem>>, vector<1x1x1x16xf32>,
      %141 = vector.extract_strided_slice %17 {offsets = [0, 240], sizes = [1, 16], strides = [1, 1]} : vector<1x256xf32> to vector<1x16xf32>
      %c0_128 = arith.constant 0 : index
      %c0_129 = arith.constant 0 : index
      %c18 = arith.constant 18 : index
      %c3_130 = arith.constant 3 : index
      %142 = vector.load %arg7[%c0_128, %c0_129, %c18, %c3_130] : memref<1x2x22x22xf32, #tpu.memory_space<vmem>>, vector<1x1x1x16xf32>
      %143 = vector.shape_cast %142 : vector<1x1x1x16xf32> to vector<1x16xf32>
      %144 = vector.shape_cast %141 : vector<1x16xf32> to vector<1x1x1x16xf32>
      tpu.vector_store %arg7[%c0_128, %c0_129, %c18, %c3_130], %144 {strides = array<i32>} : memref<1x2x22x22xf32, #tpu.memory_space<vmem>>, vector<1x1x1x16xf32>,
      %145 = vector.extract_strided_slice %18 {offsets = [0, 240], sizes = [1, 16], strides = [1, 1]} : vector<1x256xf32> to vector<1x16xf32>
      %c0_131 = arith.constant 0 : index
      %c1_132 = arith.constant 1 : index
      %c18_133 = arith.constant 18 : index
      %c3_134 = arith.constant 3 : index
      %146 = vector.load %arg7[%c0_131, %c1_132, %c18_133, %c3_134] : memref<1x2x22x22xf32, #tpu.memory_space<vmem>>, vector<1x1x1x16xf32>
      %147 = vector.shape_cast %146 : vector<1x1x1x16xf32> to vector<1x16xf32>
      %148 = vector.shape_cast %145 : vector<1x16xf32> to vector<1x1x1x16xf32>
      tpu.vector_store %arg7[%c0_131, %c1_132, %c18_133, %c3_134], %148 {strides = array<i32>} : memref<1x2x22x22xf32, #tpu.memory_space<vmem>>, vector<1x1x1x16xf32>,
      %cst_135 = arith.constant 0.000000e+00 : f32
      %149 = vector.broadcast %cst_135 : f32 to vector<1x16x16xf32>
      %c0_136 = arith.constant 0 : index
      %c0_137 = arith.constant 0 : index
      %c0_138 = arith.constant 0 : index
      %c0_139 = arith.constant 0 : index
      %150 = vector.load %arg7[%c0_136, %c0_137, %c0_138, %c0_139] : memref<1x2x22x22xf32, #tpu.memory_space<vmem>>, vector<1x1x22x16xf32>
      %151 = vector.shape_cast %150 : vector<1x1x22x16xf32> to vector<1x22x16xf32>
      %c0_140 = arith.constant 0 : index
      %c1_141 = arith.constant 1 : index
      %c0_142 = arith.constant 0 : index
      %c0_143 = arith.constant 0 : index
      %152 = vector.load %arg7[%c0_140, %c1_141, %c0_142, %c0_143] : memref<1x2x22x22xf32, #tpu.memory_space<vmem>>, vector<1x1x22x16xf32>
      %153 = vector.shape_cast %152 : vector<1x1x22x16xf32> to vector<1x22x16xf32>
      %c0_144 = arith.constant 0 : index
      %154 = memref.load %arg2[%c0_144] : memref<98xf32, #tpu.memory_space<smem>>
      %c49 = arith.constant 49 : index
      %155 = memref.load %arg2[%c49] : memref<98xf32, #tpu.memory_space<smem>>
      %156 = vector.extract_strided_slice %151 {offsets = [0, 0, 0], sizes = [1, 16, 16], strides = [1, 1, 1]} : vector<1x22x16xf32> to vector<1x16x16xf32>
      %157 = vector.broadcast %154 : f32 to vector<1x16x16xf32>
      %158 = arith.mulf %157, %156 : vector<1x16x16xf32>
      %159 = arith.addf %149, %158 : vector<1x16x16xf32>
      %160 = vector.extract_strided_slice %153 {offsets = [0, 0, 0], sizes = [1, 16, 16], strides = [1, 1, 1]} : vector<1x22x16xf32> to vector<1x16x16xf32>
      %161 = vector.broadcast %155 : f32 to vector<1x16x16xf32>
      %162 = arith.mulf %161, %160 : vector<1x16x16xf32>
      %163 = arith.addf %159, %162 : vector<1x16x16xf32>
      %c7_145 = arith.constant 7 : index
      %164 = memref.load %arg2[%c7_145] : memref<98xf32, #tpu.memory_space<smem>>
      %c56 = arith.constant 56 : index
      %165 = memref.load %arg2[%c56] : memref<98xf32, #tpu.memory_space<smem>>
      %166 = vector.extract_strided_slice %151 {offsets = [0, 1, 0], sizes = [1, 16, 16], strides = [1, 1, 1]} : vector<1x22x16xf32> to vector<1x16x16xf32>
      %167 = vector.broadcast %164 : f32 to vector<1x16x16xf32>
      %168 = arith.mulf %167, %166 : vector<1x16x16xf32>
      %169 = arith.addf %163, %168 : vector<1x16x16xf32>
      %170 = vector.extract_strided_slice %153 {offsets = [0, 1, 0], sizes = [1, 16, 16], strides = [1, 1, 1]} : vector<1x22x16xf32> to vector<1x16x16xf32>
      %171 = vector.broadcast %165 : f32 to vector<1x16x16xf32>
      %172 = arith.mulf %171, %170 : vector<1x16x16xf32>
      %173 = arith.addf %169, %172 : vector<1x16x16xf32>
      %c14_146 = arith.constant 14 : index
      %174 = memref.load %arg2[%c14_146] : memref<98xf32, #tpu.memory_space<smem>>
      %c63 = arith.constant 63 : index
      %175 = memref.load %arg2[%c63] : memref<98xf32, #tpu.memory_space<smem>>
      %176 = vector.extract_strided_slice %151 {offsets = [0, 2, 0], sizes = [1, 16, 16], strides = [1, 1, 1]} : vector<1x22x16xf32> to vector<1x16x16xf32>
      %177 = vector.broadcast %174 : f32 to vector<1x16x16xf32>
      %178 = arith.mulf %177, %176 : vector<1x16x16xf32>
      %179 = arith.addf %173, %178 : vector<1x16x16xf32>
      %180 = vector.extract_strided_slice %153 {offsets = [0, 2, 0], sizes = [1, 16, 16], strides = [1, 1, 1]} : vector<1x22x16xf32> to vector<1x16x16xf32>
      %181 = vector.broadcast %175 : f32 to vector<1x16x16xf32>
      %182 = arith.mulf %181, %180 : vector<1x16x16xf32>
      %183 = arith.addf %179, %182 : vector<1x16x16xf32>
      %c21 = arith.constant 21 : index
      %184 = memref.load %arg2[%c21] : memref<98xf32, #tpu.memory_space<smem>>
      %c70 = arith.constant 70 : index
      %185 = memref.load %arg2[%c70] : memref<98xf32, #tpu.memory_space<smem>>
      %186 = vector.extract_strided_slice %151 {offsets = [0, 3, 0], sizes = [1, 16, 16], strides = [1, 1, 1]} : vector<1x22x16xf32> to vector<1x16x16xf32>
      %187 = vector.broadcast %184 : f32 to vector<1x16x16xf32>
      %188 = arith.mulf %187, %186 : vector<1x16x16xf32>
      %189 = arith.addf %183, %188 : vector<1x16x16xf32>
      %190 = vector.extract_strided_slice %153 {offsets = [0, 3, 0], sizes = [1, 16, 16], strides = [1, 1, 1]} : vector<1x22x16xf32> to vector<1x16x16xf32>
      %191 = vector.broadcast %185 : f32 to vector<1x16x16xf32>
      %192 = arith.mulf %191, %190 : vector<1x16x16xf32>
      %193 = arith.addf %189, %192 : vector<1x16x16xf32>
      %c28 = arith.constant 28 : index
      %194 = memref.load %arg2[%c28] : memref<98xf32, #tpu.memory_space<smem>>
      %c77 = arith.constant 77 : index
      %195 = memref.load %arg2[%c77] : memref<98xf32, #tpu.memory_space<smem>>
      %196 = vector.extract_strided_slice %151 {offsets = [0, 4, 0], sizes = [1, 16, 16], strides = [1, 1, 1]} : vector<1x22x16xf32> to vector<1x16x16xf32>
      %197 = vector.broadcast %194 : f32 to vector<1x16x16xf32>
      %198 = arith.mulf %197, %196 : vector<1x16x16xf32>
      %199 = arith.addf %193, %198 : vector<1x16x16xf32>
      %200 = vector.extract_strided_slice %153 {offsets = [0, 4, 0], sizes = [1, 16, 16], strides = [1, 1, 1]} : vector<1x22x16xf32> to vector<1x16x16xf32>
      %201 = vector.broadcast %195 : f32 to vector<1x16x16xf32>
      %202 = arith.mulf %201, %200 : vector<1x16x16xf32>
      %203 = arith.addf %199, %202 : vector<1x16x16xf32>
      %c35 = arith.constant 35 : index
      %204 = memref.load %arg2[%c35] : memref<98xf32, #tpu.memory_space<smem>>
      %c84 = arith.constant 84 : index
      %205 = memref.load %arg2[%c84] : memref<98xf32, #tpu.memory_space<smem>>
      %206 = vector.extract_strided_slice %151 {offsets = [0, 5, 0], sizes = [1, 16, 16], strides = [1, 1, 1]} : vector<1x22x16xf32> to vector<1x16x16xf32>
      %207 = vector.broadcast %204 : f32 to vector<1x16x16xf32>
      %208 = arith.mulf %207, %206 : vector<1x16x16xf32>
      %209 = arith.addf %203, %208 : vector<1x16x16xf32>
      %210 = vector.extract_strided_slice %153 {offsets = [0, 5, 0], sizes = [1, 16, 16], strides = [1, 1, 1]} : vector<1x22x16xf32> to vector<1x16x16xf32>
      %211 = vector.broadcast %205 : f32 to vector<1x16x16xf32>
      %212 = arith.mulf %211, %210 : vector<1x16x16xf32>
      %213 = arith.addf %209, %212 : vector<1x16x16xf32>
      %c42 = arith.constant 42 : index
      %214 = memref.load %arg2[%c42] : memref<98xf32, #tpu.memory_space<smem>>
      %c91 = arith.constant 91 : index
      %215 = memref.load %arg2[%c91] : memref<98xf32, #tpu.memory_space<smem>>
      %216 = vector.extract_strided_slice %151 {offsets = [0, 6, 0], sizes = [1, 16, 16], strides = [1, 1, 1]} : vector<1x22x16xf32> to vector<1x16x16xf32>
      %217 = vector.broadcast %214 : f32 to vector<1x16x16xf32>
      %218 = arith.mulf %217, %216 : vector<1x16x16xf32>
      %219 = arith.addf %213, %218 : vector<1x16x16xf32>
      %220 = vector.extract_strided_slice %153 {offsets = [0, 6, 0], sizes = [1, 16, 16], strides = [1, 1, 1]} : vector<1x22x16xf32> to vector<1x16x16xf32>
      %221 = vector.broadcast %215 : f32 to vector<1x16x16xf32>
      %222 = arith.mulf %221, %220 : vector<1x16x16xf32>
      %223 = arith.addf %219, %222 : vector<1x16x16xf32>
      %c0_147 = arith.constant 0 : index
      %c0_148 = arith.constant 0 : index
      %c0_149 = arith.constant 0 : index
      %c1_150 = arith.constant 1 : index
      %224 = vector.load %arg7[%c0_147, %c0_148, %c0_149, %c1_150] : memref<1x2x22x22xf32, #tpu.memory_space<vmem>>, vector<1x1x22x16xf32>
      %225 = vector.shape_cast %224 : vector<1x1x22x16xf32> to vector<1x22x16xf32>
      %c0_151 = arith.constant 0 : index
      %c1_152 = arith.constant 1 : index
      %c0_153 = arith.constant 0 : index
      %c1_154 = arith.constant 1 : index
      %226 = vector.load %arg7[%c0_151, %c1_152, %c0_153, %c1_154] : memref<1x2x22x22xf32, #tpu.memory_space<vmem>>, vector<1x1x22x16xf32>
      %227 = vector.shape_cast %226 : vector<1x1x22x16xf32> to vector<1x22x16xf32>
      %c1_155 = arith.constant 1 : index
      %228 = memref.load %arg2[%c1_155] : memref<98xf32, #tpu.memory_space<smem>>
      %c50 = arith.constant 50 : index
      %229 = memref.load %arg2[%c50] : memref<98xf32, #tpu.memory_space<smem>>
      %230 = vector.extract_strided_slice %225 {offsets = [0, 0, 0], sizes = [1, 16, 16], strides = [1, 1, 1]} : vector<1x22x16xf32> to vector<1x16x16xf32>
      %231 = vector.broadcast %228 : f32 to vector<1x16x16xf32>
      %232 = arith.mulf %231, %230 : vector<1x16x16xf32>
      %233 = arith.addf %223, %232 : vector<1x16x16xf32>
      %234 = vector.extract_strided_slice %227 {offsets = [0, 0, 0], sizes = [1, 16, 16], strides = [1, 1, 1]} : vector<1x22x16xf32> to vector<1x16x16xf32>
      %235 = vector.broadcast %229 : f32 to vector<1x16x16xf32>
      %236 = arith.mulf %235, %234 : vector<1x16x16xf32>
      %237 = arith.addf %233, %236 : vector<1x16x16xf32>
      %c8_156 = arith.constant 8 : index
      %238 = memref.load %arg2[%c8_156] : memref<98xf32, #tpu.memory_space<smem>>
      %c57 = arith.constant 57 : index
      %239 = memref.load %arg2[%c57] : memref<98xf32, #tpu.memory_space<smem>>
      %240 = vector.extract_strided_slice %225 {offsets = [0, 1, 0], sizes = [1, 16, 16], strides = [1, 1, 1]} : vector<1x22x16xf32> to vector<1x16x16xf32>
      %241 = vector.broadcast %238 : f32 to vector<1x16x16xf32>
      %242 = arith.mulf %241, %240 : vector<1x16x16xf32>
      %243 = arith.addf %237, %242 : vector<1x16x16xf32>
      %244 = vector.extract_strided_slice %227 {offsets = [0, 1, 0], sizes = [1, 16, 16], strides = [1, 1, 1]} : vector<1x22x16xf32> to vector<1x16x16xf32>
      %245 = vector.broadcast %239 : f32 to vector<1x16x16xf32>
      %246 = arith.mulf %245, %244 : vector<1x16x16xf32>
      %247 = arith.addf %243, %246 : vector<1x16x16xf32>
      %c15_157 = arith.constant 15 : index
      %248 = memref.load %arg2[%c15_157] : memref<98xf32, #tpu.memory_space<smem>>
      %c64 = arith.constant 64 : index
      %249 = memref.load %arg2[%c64] : memref<98xf32, #tpu.memory_space<smem>>
      %250 = vector.extract_strided_slice %225 {offsets = [0, 2, 0], sizes = [1, 16, 16], strides = [1, 1, 1]} : vector<1x22x16xf32> to vector<1x16x16xf32>
      %251 = vector.broadcast %248 : f32 to vector<1x16x16xf32>
      %252 = arith.mulf %251, %250 : vector<1x16x16xf32>
      %253 = arith.addf %247, %252 : vector<1x16x16xf32>
      %254 = vector.extract_strided_slice %227 {offsets = [0, 2, 0], sizes = [1, 16, 16], strides = [1, 1, 1]} : vector<1x22x16xf32> to vector<1x16x16xf32>
      %255 = vector.broadcast %249 : f32 to vector<1x16x16xf32>
      %256 = arith.mulf %255, %254 : vector<1x16x16xf32>
      %257 = arith.addf %253, %256 : vector<1x16x16xf32>
      %c22 = arith.constant 22 : index
      %258 = memref.load %arg2[%c22] : memref<98xf32, #tpu.memory_space<smem>>
      %c71 = arith.constant 71 : index
      %259 = memref.load %arg2[%c71] : memref<98xf32, #tpu.memory_space<smem>>
      %260 = vector.extract_strided_slice %225 {offsets = [0, 3, 0], sizes = [1, 16, 16], strides = [1, 1, 1]} : vector<1x22x16xf32> to vector<1x16x16xf32>
      %261 = vector.broadcast %258 : f32 to vector<1x16x16xf32>
      %262 = arith.mulf %261, %260 : vector<1x16x16xf32>
      %263 = arith.addf %257, %262 : vector<1x16x16xf32>
      %264 = vector.extract_strided_slice %227 {offsets = [0, 3, 0], sizes = [1, 16, 16], strides = [1, 1, 1]} : vector<1x22x16xf32> to vector<1x16x16xf32>
      %265 = vector.broadcast %259 : f32 to vector<1x16x16xf32>
      %266 = arith.mulf %265, %264 : vector<1x16x16xf32>
      %267 = arith.addf %263, %266 : vector<1x16x16xf32>
      %c29 = arith.constant 29 : index
      %268 = memref.load %arg2[%c29] : memref<98xf32, #tpu.memory_space<smem>>
      %c78 = arith.constant 78 : index
      %269 = memref.load %arg2[%c78] : memref<98xf32, #tpu.memory_space<smem>>
      %270 = vector.extract_strided_slice %225 {offsets = [0, 4, 0], sizes = [1, 16, 16], strides = [1, 1, 1]} : vector<1x22x16xf32> to vector<1x16x16xf32>
      %271 = vector.broadcast %268 : f32 to vector<1x16x16xf32>
      %272 = arith.mulf %271, %270 : vector<1x16x16xf32>
      %273 = arith.addf %267, %272 : vector<1x16x16xf32>
      %274 = vector.extract_strided_slice %227 {offsets = [0, 4, 0], sizes = [1, 16, 16], strides = [1, 1, 1]} : vector<1x22x16xf32> to vector<1x16x16xf32>
      %275 = vector.broadcast %269 : f32 to vector<1x16x16xf32>
      %276 = arith.mulf %275, %274 : vector<1x16x16xf32>
      %277 = arith.addf %273, %276 : vector<1x16x16xf32>
      %c36 = arith.constant 36 : index
      %278 = memref.load %arg2[%c36] : memref<98xf32, #tpu.memory_space<smem>>
      %c85 = arith.constant 85 : index
      %279 = memref.load %arg2[%c85] : memref<98xf32, #tpu.memory_space<smem>>
      %280 = vector.extract_strided_slice %225 {offsets = [0, 5, 0], sizes = [1, 16, 16], strides = [1, 1, 1]} : vector<1x22x16xf32> to vector<1x16x16xf32>
      %281 = vector.broadcast %278 : f32 to vector<1x16x16xf32>
      %282 = arith.mulf %281, %280 : vector<1x16x16xf32>
      %283 = arith.addf %277, %282 : vector<1x16x16xf32>
      %284 = vector.extract_strided_slice %227 {offsets = [0, 5, 0], sizes = [1, 16, 16], strides = [1, 1, 1]} : vector<1x22x16xf32> to vector<1x16x16xf32>
      %285 = vector.broadcast %279 : f32 to vector<1x16x16xf32>
      %286 = arith.mulf %285, %284 : vector<1x16x16xf32>
      %287 = arith.addf %283, %286 : vector<1x16x16xf32>
      %c43 = arith.constant 43 : index
      %288 = memref.load %arg2[%c43] : memref<98xf32, #tpu.memory_space<smem>>
      %c92 = arith.constant 92 : index
      %289 = memref.load %arg2[%c92] : memref<98xf32, #tpu.memory_space<smem>>
      %290 = vector.extract_strided_slice %225 {offsets = [0, 6, 0], sizes = [1, 16, 16], strides = [1, 1, 1]} : vector<1x22x16xf32> to vector<1x16x16xf32>
      %291 = vector.broadcast %288 : f32 to vector<1x16x16xf32>
      %292 = arith.mulf %291, %290 : vector<1x16x16xf32>
      %293 = arith.addf %287, %292 : vector<1x16x16xf32>
      %294 = vector.extract_strided_slice %227 {offsets = [0, 6, 0], sizes = [1, 16, 16], strides = [1, 1, 1]} : vector<1x22x16xf32> to vector<1x16x16xf32>
      %295 = vector.broadcast %289 : f32 to vector<1x16x16xf32>
      %296 = arith.mulf %295, %294 : vector<1x16x16xf32>
      %297 = arith.addf %293, %296 : vector<1x16x16xf32>
      %c0_158 = arith.constant 0 : index
      %c0_159 = arith.constant 0 : index
      %c0_160 = arith.constant 0 : index
      %c2 = arith.constant 2 : index
      %298 = vector.load %arg7[%c0_158, %c0_159, %c0_160, %c2] : memref<1x2x22x22xf32, #tpu.memory_space<vmem>>, vector<1x1x22x16xf32>
      %299 = vector.shape_cast %298 : vector<1x1x22x16xf32> to vector<1x22x16xf32>
      %c0_161 = arith.constant 0 : index
      %c1_162 = arith.constant 1 : index
      %c0_163 = arith.constant 0 : index
      %c2_164 = arith.constant 2 : index
      %300 = vector.load %arg7[%c0_161, %c1_162, %c0_163, %c2_164] : memref<1x2x22x22xf32, #tpu.memory_space<vmem>>, vector<1x1x22x16xf32>
      %301 = vector.shape_cast %300 : vector<1x1x22x16xf32> to vector<1x22x16xf32>
      %c2_165 = arith.constant 2 : index
      %302 = memref.load %arg2[%c2_165] : memref<98xf32, #tpu.memory_space<smem>>
      %c51 = arith.constant 51 : index
      %303 = memref.load %arg2[%c51] : memref<98xf32, #tpu.memory_space<smem>>
      %304 = vector.extract_strided_slice %299 {offsets = [0, 0, 0], sizes = [1, 16, 16], strides = [1, 1, 1]} : vector<1x22x16xf32> to vector<1x16x16xf32>
      %305 = vector.broadcast %302 : f32 to vector<1x16x16xf32>
      %306 = arith.mulf %305, %304 : vector<1x16x16xf32>
      %307 = arith.addf %297, %306 : vector<1x16x16xf32>
      %308 = vector.extract_strided_slice %301 {offsets = [0, 0, 0], sizes = [1, 16, 16], strides = [1, 1, 1]} : vector<1x22x16xf32> to vector<1x16x16xf32>
      %309 = vector.broadcast %303 : f32 to vector<1x16x16xf32>
      %310 = arith.mulf %309, %308 : vector<1x16x16xf32>
      %311 = arith.addf %307, %310 : vector<1x16x16xf32>
      %c9_166 = arith.constant 9 : index
      %312 = memref.load %arg2[%c9_166] : memref<98xf32, #tpu.memory_space<smem>>
      %c58 = arith.constant 58 : index
      %313 = memref.load %arg2[%c58] : memref<98xf32, #tpu.memory_space<smem>>
      %314 = vector.extract_strided_slice %299 {offsets = [0, 1, 0], sizes = [1, 16, 16], strides = [1, 1, 1]} : vector<1x22x16xf32> to vector<1x16x16xf32>
      %315 = vector.broadcast %312 : f32 to vector<1x16x16xf32>
      %316 = arith.mulf %315, %314 : vector<1x16x16xf32>
      %317 = arith.addf %311, %316 : vector<1x16x16xf32>
      %318 = vector.extract_strided_slice %301 {offsets = [0, 1, 0], sizes = [1, 16, 16], strides = [1, 1, 1]} : vector<1x22x16xf32> to vector<1x16x16xf32>
      %319 = vector.broadcast %313 : f32 to vector<1x16x16xf32>
      %320 = arith.mulf %319, %318 : vector<1x16x16xf32>
      %321 = arith.addf %317, %320 : vector<1x16x16xf32>
      %c16_167 = arith.constant 16 : index
      %322 = memref.load %arg2[%c16_167] : memref<98xf32, #tpu.memory_space<smem>>
      %c65 = arith.constant 65 : index
      %323 = memref.load %arg2[%c65] : memref<98xf32, #tpu.memory_space<smem>>
      %324 = vector.extract_strided_slice %299 {offsets = [0, 2, 0], sizes = [1, 16, 16], strides = [1, 1, 1]} : vector<1x22x16xf32> to vector<1x16x16xf32>
      %325 = vector.broadcast %322 : f32 to vector<1x16x16xf32>
      %326 = arith.mulf %325, %324 : vector<1x16x16xf32>
      %327 = arith.addf %321, %326 : vector<1x16x16xf32>
      %328 = vector.extract_strided_slice %301 {offsets = [0, 2, 0], sizes = [1, 16, 16], strides = [1, 1, 1]} : vector<1x22x16xf32> to vector<1x16x16xf32>
      %329 = vector.broadcast %323 : f32 to vector<1x16x16xf32>
      %330 = arith.mulf %329, %328 : vector<1x16x16xf32>
      %331 = arith.addf %327, %330 : vector<1x16x16xf32>
      %c23 = arith.constant 23 : index
      %332 = memref.load %arg2[%c23] : memref<98xf32, #tpu.memory_space<smem>>
      %c72 = arith.constant 72 : index
      %333 = memref.load %arg2[%c72] : memref<98xf32, #tpu.memory_space<smem>>
      %334 = vector.extract_strided_slice %299 {offsets = [0, 3, 0], sizes = [1, 16, 16], strides = [1, 1, 1]} : vector<1x22x16xf32> to vector<1x16x16xf32>
      %335 = vector.broadcast %332 : f32 to vector<1x16x16xf32>
      %336 = arith.mulf %335, %334 : vector<1x16x16xf32>
      %337 = arith.addf %331, %336 : vector<1x16x16xf32>
      %338 = vector.extract_strided_slice %301 {offsets = [0, 3, 0], sizes = [1, 16, 16], strides = [1, 1, 1]} : vector<1x22x16xf32> to vector<1x16x16xf32>
      %339 = vector.broadcast %333 : f32 to vector<1x16x16xf32>
      %340 = arith.mulf %339, %338 : vector<1x16x16xf32>
      %341 = arith.addf %337, %340 : vector<1x16x16xf32>
      %c30 = arith.constant 30 : index
      %342 = memref.load %arg2[%c30] : memref<98xf32, #tpu.memory_space<smem>>
      %c79 = arith.constant 79 : index
      %343 = memref.load %arg2[%c79] : memref<98xf32, #tpu.memory_space<smem>>
      %344 = vector.extract_strided_slice %299 {offsets = [0, 4, 0], sizes = [1, 16, 16], strides = [1, 1, 1]} : vector<1x22x16xf32> to vector<1x16x16xf32>
      %345 = vector.broadcast %342 : f32 to vector<1x16x16xf32>
      %346 = arith.mulf %345, %344 : vector<1x16x16xf32>
      %347 = arith.addf %341, %346 : vector<1x16x16xf32>
      %348 = vector.extract_strided_slice %301 {offsets = [0, 4, 0], sizes = [1, 16, 16], strides = [1, 1, 1]} : vector<1x22x16xf32> to vector<1x16x16xf32>
      %349 = vector.broadcast %343 : f32 to vector<1x16x16xf32>
      %350 = arith.mulf %349, %348 : vector<1x16x16xf32>
      %351 = arith.addf %347, %350 : vector<1x16x16xf32>
      %c37 = arith.constant 37 : index
      %352 = memref.load %arg2[%c37] : memref<98xf32, #tpu.memory_space<smem>>
      %c86 = arith.constant 86 : index
      %353 = memref.load %arg2[%c86] : memref<98xf32, #tpu.memory_space<smem>>
      %354 = vector.extract_strided_slice %299 {offsets = [0, 5, 0], sizes = [1, 16, 16], strides = [1, 1, 1]} : vector<1x22x16xf32> to vector<1x16x16xf32>
      %355 = vector.broadcast %352 : f32 to vector<1x16x16xf32>
      %356 = arith.mulf %355, %354 : vector<1x16x16xf32>
      %357 = arith.addf %351, %356 : vector<1x16x16xf32>
      %358 = vector.extract_strided_slice %301 {offsets = [0, 5, 0], sizes = [1, 16, 16], strides = [1, 1, 1]} : vector<1x22x16xf32> to vector<1x16x16xf32>
      %359 = vector.broadcast %353 : f32 to vector<1x16x16xf32>
      %360 = arith.mulf %359, %358 : vector<1x16x16xf32>
      %361 = arith.addf %357, %360 : vector<1x16x16xf32>
      %c44 = arith.constant 44 : index
      %362 = memref.load %arg2[%c44] : memref<98xf32, #tpu.memory_space<smem>>
      %c93 = arith.constant 93 : index
      %363 = memref.load %arg2[%c93] : memref<98xf32, #tpu.memory_space<smem>>
      %364 = vector.extract_strided_slice %299 {offsets = [0, 6, 0], sizes = [1, 16, 16], strides = [1, 1, 1]} : vector<1x22x16xf32> to vector<1x16x16xf32>
      %365 = vector.broadcast %362 : f32 to vector<1x16x16xf32>
      %366 = arith.mulf %365, %364 : vector<1x16x16xf32>
      %367 = arith.addf %361, %366 : vector<1x16x16xf32>
      %368 = vector.extract_strided_slice %301 {offsets = [0, 6, 0], sizes = [1, 16, 16], strides = [1, 1, 1]} : vector<1x22x16xf32> to vector<1x16x16xf32>
      %369 = vector.broadcast %363 : f32 to vector<1x16x16xf32>
      %370 = arith.mulf %369, %368 : vector<1x16x16xf32>
      %371 = arith.addf %367, %370 : vector<1x16x16xf32>
      %c0_168 = arith.constant 0 : index
      %c0_169 = arith.constant 0 : index
      %c0_170 = arith.constant 0 : index
      %c3_171 = arith.constant 3 : index
      %372 = vector.load %arg7[%c0_168, %c0_169, %c0_170, %c3_171] : memref<1x2x22x22xf32, #tpu.memory_space<vmem>>, vector<1x1x22x16xf32>
      %373 = vector.shape_cast %372 : vector<1x1x22x16xf32> to vector<1x22x16xf32>
      %c0_172 = arith.constant 0 : index
      %c1_173 = arith.constant 1 : index
      %c0_174 = arith.constant 0 : index
      %c3_175 = arith.constant 3 : index
      %374 = vector.load %arg7[%c0_172, %c1_173, %c0_174, %c3_175] : memref<1x2x22x22xf32, #tpu.memory_space<vmem>>, vector<1x1x22x16xf32>
      %375 = vector.shape_cast %374 : vector<1x1x22x16xf32> to vector<1x22x16xf32>
      %c3_176 = arith.constant 3 : index
      %376 = memref.load %arg2[%c3_176] : memref<98xf32, #tpu.memory_space<smem>>
      %c52 = arith.constant 52 : index
      %377 = memref.load %arg2[%c52] : memref<98xf32, #tpu.memory_space<smem>>
      %378 = vector.extract_strided_slice %373 {offsets = [0, 0, 0], sizes = [1, 16, 16], strides = [1, 1, 1]} : vector<1x22x16xf32> to vector<1x16x16xf32>
      %379 = vector.broadcast %376 : f32 to vector<1x16x16xf32>
      %380 = arith.mulf %379, %378 : vector<1x16x16xf32>
      %381 = arith.addf %371, %380 : vector<1x16x16xf32>
      %382 = vector.extract_strided_slice %375 {offsets = [0, 0, 0], sizes = [1, 16, 16], strides = [1, 1, 1]} : vector<1x22x16xf32> to vector<1x16x16xf32>
      %383 = vector.broadcast %377 : f32 to vector<1x16x16xf32>
      %384 = arith.mulf %383, %382 : vector<1x16x16xf32>
      %385 = arith.addf %381, %384 : vector<1x16x16xf32>
      %c10_177 = arith.constant 10 : index
      %386 = memref.load %arg2[%c10_177] : memref<98xf32, #tpu.memory_space<smem>>
      %c59 = arith.constant 59 : index
      %387 = memref.load %arg2[%c59] : memref<98xf32, #tpu.memory_space<smem>>
      %388 = vector.extract_strided_slice %373 {offsets = [0, 1, 0], sizes = [1, 16, 16], strides = [1, 1, 1]} : vector<1x22x16xf32> to vector<1x16x16xf32>
      %389 = vector.broadcast %386 : f32 to vector<1x16x16xf32>
      %390 = arith.mulf %389, %388 : vector<1x16x16xf32>
      %391 = arith.addf %385, %390 : vector<1x16x16xf32>
      %392 = vector.extract_strided_slice %375 {offsets = [0, 1, 0], sizes = [1, 16, 16], strides = [1, 1, 1]} : vector<1x22x16xf32> to vector<1x16x16xf32>
      %393 = vector.broadcast %387 : f32 to vector<1x16x16xf32>
      %394 = arith.mulf %393, %392 : vector<1x16x16xf32>
      %395 = arith.addf %391, %394 : vector<1x16x16xf32>
      %c17_178 = arith.constant 17 : index
      %396 = memref.load %arg2[%c17_178] : memref<98xf32, #tpu.memory_space<smem>>
      %c66 = arith.constant 66 : index
      %397 = memref.load %arg2[%c66] : memref<98xf32, #tpu.memory_space<smem>>
      %398 = vector.extract_strided_slice %373 {offsets = [0, 2, 0], sizes = [1, 16, 16], strides = [1, 1, 1]} : vector<1x22x16xf32> to vector<1x16x16xf32>
      %399 = vector.broadcast %396 : f32 to vector<1x16x16xf32>
      %400 = arith.mulf %399, %398 : vector<1x16x16xf32>
      %401 = arith.addf %395, %400 : vector<1x16x16xf32>
      %402 = vector.extract_strided_slice %375 {offsets = [0, 2, 0], sizes = [1, 16, 16], strides = [1, 1, 1]} : vector<1x22x16xf32> to vector<1x16x16xf32>
      %403 = vector.broadcast %397 : f32 to vector<1x16x16xf32>
      %404 = arith.mulf %403, %402 : vector<1x16x16xf32>
      %405 = arith.addf %401, %404 : vector<1x16x16xf32>
      %c24 = arith.constant 24 : index
      %406 = memref.load %arg2[%c24] : memref<98xf32, #tpu.memory_space<smem>>
      %c73 = arith.constant 73 : index
      %407 = memref.load %arg2[%c73] : memref<98xf32, #tpu.memory_space<smem>>
      %408 = vector.extract_strided_slice %373 {offsets = [0, 3, 0], sizes = [1, 16, 16], strides = [1, 1, 1]} : vector<1x22x16xf32> to vector<1x16x16xf32>
      %409 = vector.broadcast %406 : f32 to vector<1x16x16xf32>
      %410 = arith.mulf %409, %408 : vector<1x16x16xf32>
      %411 = arith.addf %405, %410 : vector<1x16x16xf32>
      %412 = vector.extract_strided_slice %375 {offsets = [0, 3, 0], sizes = [1, 16, 16], strides = [1, 1, 1]} : vector<1x22x16xf32> to vector<1x16x16xf32>
      %413 = vector.broadcast %407 : f32 to vector<1x16x16xf32>
      %414 = arith.mulf %413, %412 : vector<1x16x16xf32>
      %415 = arith.addf %411, %414 : vector<1x16x16xf32>
      %c31 = arith.constant 31 : index
      %416 = memref.load %arg2[%c31] : memref<98xf32, #tpu.memory_space<smem>>
      %c80 = arith.constant 80 : index
      %417 = memref.load %arg2[%c80] : memref<98xf32, #tpu.memory_space<smem>>
      %418 = vector.extract_strided_slice %373 {offsets = [0, 4, 0], sizes = [1, 16, 16], strides = [1, 1, 1]} : vector<1x22x16xf32> to vector<1x16x16xf32>
      %419 = vector.broadcast %416 : f32 to vector<1x16x16xf32>
      %420 = arith.mulf %419, %418 : vector<1x16x16xf32>
      %421 = arith.addf %415, %420 : vector<1x16x16xf32>
      %422 = vector.extract_strided_slice %375 {offsets = [0, 4, 0], sizes = [1, 16, 16], strides = [1, 1, 1]} : vector<1x22x16xf32> to vector<1x16x16xf32>
      %423 = vector.broadcast %417 : f32 to vector<1x16x16xf32>
      %424 = arith.mulf %423, %422 : vector<1x16x16xf32>
      %425 = arith.addf %421, %424 : vector<1x16x16xf32>
      %c38 = arith.constant 38 : index
      %426 = memref.load %arg2[%c38] : memref<98xf32, #tpu.memory_space<smem>>
      %c87 = arith.constant 87 : index
      %427 = memref.load %arg2[%c87] : memref<98xf32, #tpu.memory_space<smem>>
      %428 = vector.extract_strided_slice %373 {offsets = [0, 5, 0], sizes = [1, 16, 16], strides = [1, 1, 1]} : vector<1x22x16xf32> to vector<1x16x16xf32>
      %429 = vector.broadcast %426 : f32 to vector<1x16x16xf32>
      %430 = arith.mulf %429, %428 : vector<1x16x16xf32>
      %431 = arith.addf %425, %430 : vector<1x16x16xf32>
      %432 = vector.extract_strided_slice %375 {offsets = [0, 5, 0], sizes = [1, 16, 16], strides = [1, 1, 1]} : vector<1x22x16xf32> to vector<1x16x16xf32>
      %433 = vector.broadcast %427 : f32 to vector<1x16x16xf32>
      %434 = arith.mulf %433, %432 : vector<1x16x16xf32>
      %435 = arith.addf %431, %434 : vector<1x16x16xf32>
      %c45 = arith.constant 45 : index
      %436 = memref.load %arg2[%c45] : memref<98xf32, #tpu.memory_space<smem>>
      %c94 = arith.constant 94 : index
      %437 = memref.load %arg2[%c94] : memref<98xf32, #tpu.memory_space<smem>>
      %438 = vector.extract_strided_slice %373 {offsets = [0, 6, 0], sizes = [1, 16, 16], strides = [1, 1, 1]} : vector<1x22x16xf32> to vector<1x16x16xf32>
      %439 = vector.broadcast %436 : f32 to vector<1x16x16xf32>
      %440 = arith.mulf %439, %438 : vector<1x16x16xf32>
      %441 = arith.addf %435, %440 : vector<1x16x16xf32>
      %442 = vector.extract_strided_slice %375 {offsets = [0, 6, 0], sizes = [1, 16, 16], strides = [1, 1, 1]} : vector<1x22x16xf32> to vector<1x16x16xf32>
      %443 = vector.broadcast %437 : f32 to vector<1x16x16xf32>
      %444 = arith.mulf %443, %442 : vector<1x16x16xf32>
      %445 = arith.addf %441, %444 : vector<1x16x16xf32>
      %c0_179 = arith.constant 0 : index
      %c0_180 = arith.constant 0 : index
      %c0_181 = arith.constant 0 : index
      %c4_182 = arith.constant 4 : index
      %446 = vector.load %arg7[%c0_179, %c0_180, %c0_181, %c4_182] : memref<1x2x22x22xf32, #tpu.memory_space<vmem>>, vector<1x1x22x16xf32>
      %447 = vector.shape_cast %446 : vector<1x1x22x16xf32> to vector<1x22x16xf32>
      %c0_183 = arith.constant 0 : index
      %c1_184 = arith.constant 1 : index
      %c0_185 = arith.constant 0 : index
      %c4_186 = arith.constant 4 : index
      %448 = vector.load %arg7[%c0_183, %c1_184, %c0_185, %c4_186] : memref<1x2x22x22xf32, #tpu.memory_space<vmem>>, vector<1x1x22x16xf32>
      %449 = vector.shape_cast %448 : vector<1x1x22x16xf32> to vector<1x22x16xf32>
      %c4_187 = arith.constant 4 : index
      %450 = memref.load %arg2[%c4_187] : memref<98xf32, #tpu.memory_space<smem>>
      %c53 = arith.constant 53 : index
      %451 = memref.load %arg2[%c53] : memref<98xf32, #tpu.memory_space<smem>>
      %452 = vector.extract_strided_slice %447 {offsets = [0, 0, 0], sizes = [1, 16, 16], strides = [1, 1, 1]} : vector<1x22x16xf32> to vector<1x16x16xf32>
      %453 = vector.broadcast %450 : f32 to vector<1x16x16xf32>
      %454 = arith.mulf %453, %452 : vector<1x16x16xf32>
      %455 = arith.addf %445, %454 : vector<1x16x16xf32>
      %456 = vector.extract_strided_slice %449 {offsets = [0, 0, 0], sizes = [1, 16, 16], strides = [1, 1, 1]} : vector<1x22x16xf32> to vector<1x16x16xf32>
      %457 = vector.broadcast %451 : f32 to vector<1x16x16xf32>
      %458 = arith.mulf %457, %456 : vector<1x16x16xf32>
      %459 = arith.addf %455, %458 : vector<1x16x16xf32>
      %c11_188 = arith.constant 11 : index
      %460 = memref.load %arg2[%c11_188] : memref<98xf32, #tpu.memory_space<smem>>
      %c60 = arith.constant 60 : index
      %461 = memref.load %arg2[%c60] : memref<98xf32, #tpu.memory_space<smem>>
      %462 = vector.extract_strided_slice %447 {offsets = [0, 1, 0], sizes = [1, 16, 16], strides = [1, 1, 1]} : vector<1x22x16xf32> to vector<1x16x16xf32>
      %463 = vector.broadcast %460 : f32 to vector<1x16x16xf32>
      %464 = arith.mulf %463, %462 : vector<1x16x16xf32>
      %465 = arith.addf %459, %464 : vector<1x16x16xf32>
      %466 = vector.extract_strided_slice %449 {offsets = [0, 1, 0], sizes = [1, 16, 16], strides = [1, 1, 1]} : vector<1x22x16xf32> to vector<1x16x16xf32>
      %467 = vector.broadcast %461 : f32 to vector<1x16x16xf32>
      %468 = arith.mulf %467, %466 : vector<1x16x16xf32>
      %469 = arith.addf %465, %468 : vector<1x16x16xf32>
      %c18_189 = arith.constant 18 : index
      %470 = memref.load %arg2[%c18_189] : memref<98xf32, #tpu.memory_space<smem>>
      %c67 = arith.constant 67 : index
      %471 = memref.load %arg2[%c67] : memref<98xf32, #tpu.memory_space<smem>>
      %472 = vector.extract_strided_slice %447 {offsets = [0, 2, 0], sizes = [1, 16, 16], strides = [1, 1, 1]} : vector<1x22x16xf32> to vector<1x16x16xf32>
      %473 = vector.broadcast %470 : f32 to vector<1x16x16xf32>
      %474 = arith.mulf %473, %472 : vector<1x16x16xf32>
      %475 = arith.addf %469, %474 : vector<1x16x16xf32>
      %476 = vector.extract_strided_slice %449 {offsets = [0, 2, 0], sizes = [1, 16, 16], strides = [1, 1, 1]} : vector<1x22x16xf32> to vector<1x16x16xf32>
      %477 = vector.broadcast %471 : f32 to vector<1x16x16xf32>
      %478 = arith.mulf %477, %476 : vector<1x16x16xf32>
      %479 = arith.addf %475, %478 : vector<1x16x16xf32>
      %c25 = arith.constant 25 : index
      %480 = memref.load %arg2[%c25] : memref<98xf32, #tpu.memory_space<smem>>
      %c74 = arith.constant 74 : index
      %481 = memref.load %arg2[%c74] : memref<98xf32, #tpu.memory_space<smem>>
      %482 = vector.extract_strided_slice %447 {offsets = [0, 3, 0], sizes = [1, 16, 16], strides = [1, 1, 1]} : vector<1x22x16xf32> to vector<1x16x16xf32>
      %483 = vector.broadcast %480 : f32 to vector<1x16x16xf32>
      %484 = arith.mulf %483, %482 : vector<1x16x16xf32>
      %485 = arith.addf %479, %484 : vector<1x16x16xf32>
      %486 = vector.extract_strided_slice %449 {offsets = [0, 3, 0], sizes = [1, 16, 16], strides = [1, 1, 1]} : vector<1x22x16xf32> to vector<1x16x16xf32>
      %487 = vector.broadcast %481 : f32 to vector<1x16x16xf32>
      %488 = arith.mulf %487, %486 : vector<1x16x16xf32>
      %489 = arith.addf %485, %488 : vector<1x16x16xf32>
      %c32 = arith.constant 32 : index
      %490 = memref.load %arg2[%c32] : memref<98xf32, #tpu.memory_space<smem>>
      %c81 = arith.constant 81 : index
      %491 = memref.load %arg2[%c81] : memref<98xf32, #tpu.memory_space<smem>>
      %492 = vector.extract_strided_slice %447 {offsets = [0, 4, 0], sizes = [1, 16, 16], strides = [1, 1, 1]} : vector<1x22x16xf32> to vector<1x16x16xf32>
      %493 = vector.broadcast %490 : f32 to vector<1x16x16xf32>
      %494 = arith.mulf %493, %492 : vector<1x16x16xf32>
      %495 = arith.addf %489, %494 : vector<1x16x16xf32>
      %496 = vector.extract_strided_slice %449 {offsets = [0, 4, 0], sizes = [1, 16, 16], strides = [1, 1, 1]} : vector<1x22x16xf32> to vector<1x16x16xf32>
      %497 = vector.broadcast %491 : f32 to vector<1x16x16xf32>
      %498 = arith.mulf %497, %496 : vector<1x16x16xf32>
      %499 = arith.addf %495, %498 : vector<1x16x16xf32>
      %c39 = arith.constant 39 : index
      %500 = memref.load %arg2[%c39] : memref<98xf32, #tpu.memory_space<smem>>
      %c88 = arith.constant 88 : index
      %501 = memref.load %arg2[%c88] : memref<98xf32, #tpu.memory_space<smem>>
      %502 = vector.extract_strided_slice %447 {offsets = [0, 5, 0], sizes = [1, 16, 16], strides = [1, 1, 1]} : vector<1x22x16xf32> to vector<1x16x16xf32>
      %503 = vector.broadcast %500 : f32 to vector<1x16x16xf32>
      %504 = arith.mulf %503, %502 : vector<1x16x16xf32>
      %505 = arith.addf %499, %504 : vector<1x16x16xf32>
      %506 = vector.extract_strided_slice %449 {offsets = [0, 5, 0], sizes = [1, 16, 16], strides = [1, 1, 1]} : vector<1x22x16xf32> to vector<1x16x16xf32>
      %507 = vector.broadcast %501 : f32 to vector<1x16x16xf32>
      %508 = arith.mulf %507, %506 : vector<1x16x16xf32>
      %509 = arith.addf %505, %508 : vector<1x16x16xf32>
      %c46 = arith.constant 46 : index
      %510 = memref.load %arg2[%c46] : memref<98xf32, #tpu.memory_space<smem>>
      %c95 = arith.constant 95 : index
      %511 = memref.load %arg2[%c95] : memref<98xf32, #tpu.memory_space<smem>>
      %512 = vector.extract_strided_slice %447 {offsets = [0, 6, 0], sizes = [1, 16, 16], strides = [1, 1, 1]} : vector<1x22x16xf32> to vector<1x16x16xf32>
      %513 = vector.broadcast %510 : f32 to vector<1x16x16xf32>
      %514 = arith.mulf %513, %512 : vector<1x16x16xf32>
      %515 = arith.addf %509, %514 : vector<1x16x16xf32>
      %516 = vector.extract_strided_slice %449 {offsets = [0, 6, 0], sizes = [1, 16, 16], strides = [1, 1, 1]} : vector<1x22x16xf32> to vector<1x16x16xf32>
      %517 = vector.broadcast %511 : f32 to vector<1x16x16xf32>
      %518 = arith.mulf %517, %516 : vector<1x16x16xf32>
      %519 = arith.addf %515, %518 : vector<1x16x16xf32>
      %c0_190 = arith.constant 0 : index
      %c0_191 = arith.constant 0 : index
      %c0_192 = arith.constant 0 : index
      %c5_193 = arith.constant 5 : index
      %520 = vector.load %arg7[%c0_190, %c0_191, %c0_192, %c5_193] : memref<1x2x22x22xf32, #tpu.memory_space<vmem>>, vector<1x1x22x16xf32>
      %521 = vector.shape_cast %520 : vector<1x1x22x16xf32> to vector<1x22x16xf32>
      %c0_194 = arith.constant 0 : index
      %c1_195 = arith.constant 1 : index
      %c0_196 = arith.constant 0 : index
      %c5_197 = arith.constant 5 : index
      %522 = vector.load %arg7[%c0_194, %c1_195, %c0_196, %c5_197] : memref<1x2x22x22xf32, #tpu.memory_space<vmem>>, vector<1x1x22x16xf32>
      %523 = vector.shape_cast %522 : vector<1x1x22x16xf32> to vector<1x22x16xf32>
      %c5_198 = arith.constant 5 : index
      %524 = memref.load %arg2[%c5_198] : memref<98xf32, #tpu.memory_space<smem>>
      %c54 = arith.constant 54 : index
      %525 = memref.load %arg2[%c54] : memref<98xf32, #tpu.memory_space<smem>>
      %526 = vector.extract_strided_slice %521 {offsets = [0, 0, 0], sizes = [1, 16, 16], strides = [1, 1, 1]} : vector<1x22x16xf32> to vector<1x16x16xf32>
      %527 = vector.broadcast %524 : f32 to vector<1x16x16xf32>
      %528 = arith.mulf %527, %526 : vector<1x16x16xf32>
      %529 = arith.addf %519, %528 : vector<1x16x16xf32>
      %530 = vector.extract_strided_slice %523 {offsets = [0, 0, 0], sizes = [1, 16, 16], strides = [1, 1, 1]} : vector<1x22x16xf32> to vector<1x16x16xf32>
      %531 = vector.broadcast %525 : f32 to vector<1x16x16xf32>
      %532 = arith.mulf %531, %530 : vector<1x16x16xf32>
      %533 = arith.addf %529, %532 : vector<1x16x16xf32>
      %c12_199 = arith.constant 12 : index
      %534 = memref.load %arg2[%c12_199] : memref<98xf32, #tpu.memory_space<smem>>
      %c61 = arith.constant 61 : index
      %535 = memref.load %arg2[%c61] : memref<98xf32, #tpu.memory_space<smem>>
      %536 = vector.extract_strided_slice %521 {offsets = [0, 1, 0], sizes = [1, 16, 16], strides = [1, 1, 1]} : vector<1x22x16xf32> to vector<1x16x16xf32>
      %537 = vector.broadcast %534 : f32 to vector<1x16x16xf32>
      %538 = arith.mulf %537, %536 : vector<1x16x16xf32>
      %539 = arith.addf %533, %538 : vector<1x16x16xf32>
      %540 = vector.extract_strided_slice %523 {offsets = [0, 1, 0], sizes = [1, 16, 16], strides = [1, 1, 1]} : vector<1x22x16xf32> to vector<1x16x16xf32>
      %541 = vector.broadcast %535 : f32 to vector<1x16x16xf32>
      %542 = arith.mulf %541, %540 : vector<1x16x16xf32>
      %543 = arith.addf %539, %542 : vector<1x16x16xf32>
      %c19 = arith.constant 19 : index
      %544 = memref.load %arg2[%c19] : memref<98xf32, #tpu.memory_space<smem>>
      %c68 = arith.constant 68 : index
      %545 = memref.load %arg2[%c68] : memref<98xf32, #tpu.memory_space<smem>>
      %546 = vector.extract_strided_slice %521 {offsets = [0, 2, 0], sizes = [1, 16, 16], strides = [1, 1, 1]} : vector<1x22x16xf32> to vector<1x16x16xf32>
      %547 = vector.broadcast %544 : f32 to vector<1x16x16xf32>
      %548 = arith.mulf %547, %546 : vector<1x16x16xf32>
      %549 = arith.addf %543, %548 : vector<1x16x16xf32>
      %550 = vector.extract_strided_slice %523 {offsets = [0, 2, 0], sizes = [1, 16, 16], strides = [1, 1, 1]} : vector<1x22x16xf32> to vector<1x16x16xf32>
      %551 = vector.broadcast %545 : f32 to vector<1x16x16xf32>
      %552 = arith.mulf %551, %550 : vector<1x16x16xf32>
      %553 = arith.addf %549, %552 : vector<1x16x16xf32>
      %c26 = arith.constant 26 : index
      %554 = memref.load %arg2[%c26] : memref<98xf32, #tpu.memory_space<smem>>
      %c75 = arith.constant 75 : index
      %555 = memref.load %arg2[%c75] : memref<98xf32, #tpu.memory_space<smem>>
      %556 = vector.extract_strided_slice %521 {offsets = [0, 3, 0], sizes = [1, 16, 16], strides = [1, 1, 1]} : vector<1x22x16xf32> to vector<1x16x16xf32>
      %557 = vector.broadcast %554 : f32 to vector<1x16x16xf32>
      %558 = arith.mulf %557, %556 : vector<1x16x16xf32>
      %559 = arith.addf %553, %558 : vector<1x16x16xf32>
      %560 = vector.extract_strided_slice %523 {offsets = [0, 3, 0], sizes = [1, 16, 16], strides = [1, 1, 1]} : vector<1x22x16xf32> to vector<1x16x16xf32>
      %561 = vector.broadcast %555 : f32 to vector<1x16x16xf32>
      %562 = arith.mulf %561, %560 : vector<1x16x16xf32>
      %563 = arith.addf %559, %562 : vector<1x16x16xf32>
      %c33 = arith.constant 33 : index
      %564 = memref.load %arg2[%c33] : memref<98xf32, #tpu.memory_space<smem>>
      %c82 = arith.constant 82 : index
      %565 = memref.load %arg2[%c82] : memref<98xf32, #tpu.memory_space<smem>>
      %566 = vector.extract_strided_slice %521 {offsets = [0, 4, 0], sizes = [1, 16, 16], strides = [1, 1, 1]} : vector<1x22x16xf32> to vector<1x16x16xf32>
      %567 = vector.broadcast %564 : f32 to vector<1x16x16xf32>
      %568 = arith.mulf %567, %566 : vector<1x16x16xf32>
      %569 = arith.addf %563, %568 : vector<1x16x16xf32>
      %570 = vector.extract_strided_slice %523 {offsets = [0, 4, 0], sizes = [1, 16, 16], strides = [1, 1, 1]} : vector<1x22x16xf32> to vector<1x16x16xf32>
      %571 = vector.broadcast %565 : f32 to vector<1x16x16xf32>
      %572 = arith.mulf %571, %570 : vector<1x16x16xf32>
      %573 = arith.addf %569, %572 : vector<1x16x16xf32>
      %c40 = arith.constant 40 : index
      %574 = memref.load %arg2[%c40] : memref<98xf32, #tpu.memory_space<smem>>
      %c89 = arith.constant 89 : index
      %575 = memref.load %arg2[%c89] : memref<98xf32, #tpu.memory_space<smem>>
      %576 = vector.extract_strided_slice %521 {offsets = [0, 5, 0], sizes = [1, 16, 16], strides = [1, 1, 1]} : vector<1x22x16xf32> to vector<1x16x16xf32>
      %577 = vector.broadcast %574 : f32 to vector<1x16x16xf32>
      %578 = arith.mulf %577, %576 : vector<1x16x16xf32>
      %579 = arith.addf %573, %578 : vector<1x16x16xf32>
      %580 = vector.extract_strided_slice %523 {offsets = [0, 5, 0], sizes = [1, 16, 16], strides = [1, 1, 1]} : vector<1x22x16xf32> to vector<1x16x16xf32>
      %581 = vector.broadcast %575 : f32 to vector<1x16x16xf32>
      %582 = arith.mulf %581, %580 : vector<1x16x16xf32>
      %583 = arith.addf %579, %582 : vector<1x16x16xf32>
      %c47 = arith.constant 47 : index
      %584 = memref.load %arg2[%c47] : memref<98xf32, #tpu.memory_space<smem>>
      %c96 = arith.constant 96 : index
      %585 = memref.load %arg2[%c96] : memref<98xf32, #tpu.memory_space<smem>>
      %586 = vector.extract_strided_slice %521 {offsets = [0, 6, 0], sizes = [1, 16, 16], strides = [1, 1, 1]} : vector<1x22x16xf32> to vector<1x16x16xf32>
      %587 = vector.broadcast %584 : f32 to vector<1x16x16xf32>
      %588 = arith.mulf %587, %586 : vector<1x16x16xf32>
      %589 = arith.addf %583, %588 : vector<1x16x16xf32>
      %590 = vector.extract_strided_slice %523 {offsets = [0, 6, 0], sizes = [1, 16, 16], strides = [1, 1, 1]} : vector<1x22x16xf32> to vector<1x16x16xf32>
      %591 = vector.broadcast %585 : f32 to vector<1x16x16xf32>
      %592 = arith.mulf %591, %590 : vector<1x16x16xf32>
      %593 = arith.addf %589, %592 : vector<1x16x16xf32>
      %c0_200 = arith.constant 0 : index
      %c0_201 = arith.constant 0 : index
      %c0_202 = arith.constant 0 : index
      %c6_203 = arith.constant 6 : index
      %594 = vector.load %arg7[%c0_200, %c0_201, %c0_202, %c6_203] : memref<1x2x22x22xf32, #tpu.memory_space<vmem>>, vector<1x1x22x16xf32>
      %595 = vector.shape_cast %594 : vector<1x1x22x16xf32> to vector<1x22x16xf32>
      %c0_204 = arith.constant 0 : index
      %c1_205 = arith.constant 1 : index
      %c0_206 = arith.constant 0 : index
      %c6_207 = arith.constant 6 : index
      %596 = vector.load %arg7[%c0_204, %c1_205, %c0_206, %c6_207] : memref<1x2x22x22xf32, #tpu.memory_space<vmem>>, vector<1x1x22x16xf32>
      %597 = vector.shape_cast %596 : vector<1x1x22x16xf32> to vector<1x22x16xf32>
      %c6_208 = arith.constant 6 : index
      %598 = memref.load %arg2[%c6_208] : memref<98xf32, #tpu.memory_space<smem>>
      %c55 = arith.constant 55 : index
      %599 = memref.load %arg2[%c55] : memref<98xf32, #tpu.memory_space<smem>>
      %600 = vector.extract_strided_slice %595 {offsets = [0, 0, 0], sizes = [1, 16, 16], strides = [1, 1, 1]} : vector<1x22x16xf32> to vector<1x16x16xf32>
      %601 = vector.broadcast %598 : f32 to vector<1x16x16xf32>
      %602 = arith.mulf %601, %600 : vector<1x16x16xf32>
      %603 = arith.addf %593, %602 : vector<1x16x16xf32>
      %604 = vector.extract_strided_slice %597 {offsets = [0, 0, 0], sizes = [1, 16, 16], strides = [1, 1, 1]} : vector<1x22x16xf32> to vector<1x16x16xf32>
      %605 = vector.broadcast %599 : f32 to vector<1x16x16xf32>
      %606 = arith.mulf %605, %604 : vector<1x16x16xf32>
      %607 = arith.addf %603, %606 : vector<1x16x16xf32>
      %c13_209 = arith.constant 13 : index
      %608 = memref.load %arg2[%c13_209] : memref<98xf32, #tpu.memory_space<smem>>
      %c62 = arith.constant 62 : index
      %609 = memref.load %arg2[%c62] : memref<98xf32, #tpu.memory_space<smem>>
      %610 = vector.extract_strided_slice %595 {offsets = [0, 1, 0], sizes = [1, 16, 16], strides = [1, 1, 1]} : vector<1x22x16xf32> to vector<1x16x16xf32>
      %611 = vector.broadcast %608 : f32 to vector<1x16x16xf32>
      %612 = arith.mulf %611, %610 : vector<1x16x16xf32>
      %613 = arith.addf %607, %612 : vector<1x16x16xf32>
      %614 = vector.extract_strided_slice %597 {offsets = [0, 1, 0], sizes = [1, 16, 16], strides = [1, 1, 1]} : vector<1x22x16xf32> to vector<1x16x16xf32>
      %615 = vector.broadcast %609 : f32 to vector<1x16x16xf32>
      %616 = arith.mulf %615, %614 : vector<1x16x16xf32>
      %617 = arith.addf %613, %616 : vector<1x16x16xf32>
      %c20 = arith.constant 20 : index
      %618 = memref.load %arg2[%c20] : memref<98xf32, #tpu.memory_space<smem>>
      %c69 = arith.constant 69 : index
      %619 = memref.load %arg2[%c69] : memref<98xf32, #tpu.memory_space<smem>>
      %620 = vector.extract_strided_slice %595 {offsets = [0, 2, 0], sizes = [1, 16, 16], strides = [1, 1, 1]} : vector<1x22x16xf32> to vector<1x16x16xf32>
      %621 = vector.broadcast %618 : f32 to vector<1x16x16xf32>
      %622 = arith.mulf %621, %620 : vector<1x16x16xf32>
      %623 = arith.addf %617, %622 : vector<1x16x16xf32>
      %624 = vector.extract_strided_slice %597 {offsets = [0, 2, 0], sizes = [1, 16, 16], strides = [1, 1, 1]} : vector<1x22x16xf32> to vector<1x16x16xf32>
      %625 = vector.broadcast %619 : f32 to vector<1x16x16xf32>
      %626 = arith.mulf %625, %624 : vector<1x16x16xf32>
      %627 = arith.addf %623, %626 : vector<1x16x16xf32>
      %c27 = arith.constant 27 : index
      %628 = memref.load %arg2[%c27] : memref<98xf32, #tpu.memory_space<smem>>
      %c76 = arith.constant 76 : index
      %629 = memref.load %arg2[%c76] : memref<98xf32, #tpu.memory_space<smem>>
      %630 = vector.extract_strided_slice %595 {offsets = [0, 3, 0], sizes = [1, 16, 16], strides = [1, 1, 1]} : vector<1x22x16xf32> to vector<1x16x16xf32>
      %631 = vector.broadcast %628 : f32 to vector<1x16x16xf32>
      %632 = arith.mulf %631, %630 : vector<1x16x16xf32>
      %633 = arith.addf %627, %632 : vector<1x16x16xf32>
      %634 = vector.extract_strided_slice %597 {offsets = [0, 3, 0], sizes = [1, 16, 16], strides = [1, 1, 1]} : vector<1x22x16xf32> to vector<1x16x16xf32>
      %635 = vector.broadcast %629 : f32 to vector<1x16x16xf32>
      %636 = arith.mulf %635, %634 : vector<1x16x16xf32>
      %637 = arith.addf %633, %636 : vector<1x16x16xf32>
      %c34 = arith.constant 34 : index
      %638 = memref.load %arg2[%c34] : memref<98xf32, #tpu.memory_space<smem>>
      %c83 = arith.constant 83 : index
      %639 = memref.load %arg2[%c83] : memref<98xf32, #tpu.memory_space<smem>>
      %640 = vector.extract_strided_slice %595 {offsets = [0, 4, 0], sizes = [1, 16, 16], strides = [1, 1, 1]} : vector<1x22x16xf32> to vector<1x16x16xf32>
      %641 = vector.broadcast %638 : f32 to vector<1x16x16xf32>
      %642 = arith.mulf %641, %640 : vector<1x16x16xf32>
      %643 = arith.addf %637, %642 : vector<1x16x16xf32>
      %644 = vector.extract_strided_slice %597 {offsets = [0, 4, 0], sizes = [1, 16, 16], strides = [1, 1, 1]} : vector<1x22x16xf32> to vector<1x16x16xf32>
      %645 = vector.broadcast %639 : f32 to vector<1x16x16xf32>
      %646 = arith.mulf %645, %644 : vector<1x16x16xf32>
      %647 = arith.addf %643, %646 : vector<1x16x16xf32>
      %c41 = arith.constant 41 : index
      %648 = memref.load %arg2[%c41] : memref<98xf32, #tpu.memory_space<smem>>
      %c90 = arith.constant 90 : index
      %649 = memref.load %arg2[%c90] : memref<98xf32, #tpu.memory_space<smem>>
      %650 = vector.extract_strided_slice %595 {offsets = [0, 5, 0], sizes = [1, 16, 16], strides = [1, 1, 1]} : vector<1x22x16xf32> to vector<1x16x16xf32>
      %651 = vector.broadcast %648 : f32 to vector<1x16x16xf32>
      %652 = arith.mulf %651, %650 : vector<1x16x16xf32>
      %653 = arith.addf %647, %652 : vector<1x16x16xf32>
      %654 = vector.extract_strided_slice %597 {offsets = [0, 5, 0], sizes = [1, 16, 16], strides = [1, 1, 1]} : vector<1x22x16xf32> to vector<1x16x16xf32>
      %655 = vector.broadcast %649 : f32 to vector<1x16x16xf32>
      %656 = arith.mulf %655, %654 : vector<1x16x16xf32>
      %657 = arith.addf %653, %656 : vector<1x16x16xf32>
      %c48 = arith.constant 48 : index
      %658 = memref.load %arg2[%c48] : memref<98xf32, #tpu.memory_space<smem>>
      %c97 = arith.constant 97 : index
      %659 = memref.load %arg2[%c97] : memref<98xf32, #tpu.memory_space<smem>>
      %660 = vector.extract_strided_slice %595 {offsets = [0, 6, 0], sizes = [1, 16, 16], strides = [1, 1, 1]} : vector<1x22x16xf32> to vector<1x16x16xf32>
      %661 = vector.broadcast %658 : f32 to vector<1x16x16xf32>
      %662 = arith.mulf %661, %660 : vector<1x16x16xf32>
      %663 = arith.addf %657, %662 : vector<1x16x16xf32>
      %664 = vector.extract_strided_slice %597 {offsets = [0, 6, 0], sizes = [1, 16, 16], strides = [1, 1, 1]} : vector<1x22x16xf32> to vector<1x16x16xf32>
      %665 = vector.broadcast %659 : f32 to vector<1x16x16xf32>
      %666 = arith.mulf %665, %664 : vector<1x16x16xf32>
      %667 = arith.addf %663, %666 : vector<1x16x16xf32>
      %668 = arith.negf %667 : vector<1x16x16xf32>
      %669 = math.exp %668 : vector<1x16x16xf32>
      %cst_210 = arith.constant 1.000000e+00 : f32
      %670 = vector.broadcast %cst_210 : f32 to vector<1x16x16xf32>
      %671 = arith.addf %670, %669 : vector<1x16x16xf32>
      %672 = arith.divf %670, %671 : vector<1x16x16xf32>
      %673 = vector.extract_strided_slice %672 {offsets = [0, 0, 0], sizes = [1, 1, 16], strides = [1, 1, 1]} : vector<1x16x16xf32> to vector<1x1x16xf32>
      %674 = vector.shape_cast %673 : vector<1x1x16xf32> to vector<1x16xf32>
      %c0_211 = arith.constant 0 : index
      %c0_212 = arith.constant 0 : index
      %c0_213 = arith.constant 0 : index
      %675 = vector.load %arg4[%c0_211, %c0_212, %c0_213] : memref<1x1x256xf32, #tpu.memory_space<vmem>>, vector<1x1x16xf32>
      %676 = vector.shape_cast %675 : vector<1x1x16xf32> to vector<1x16xf32>
      %677 = vector.shape_cast %674 : vector<1x16xf32> to vector<1x1x16xf32>
      tpu.vector_store %arg4[%c0_211, %c0_212, %c0_213], %677 {strides = array<i32>} : memref<1x1x256xf32, #tpu.memory_space<vmem>>, vector<1x1x16xf32>,
      %678 = vector.extract_strided_slice %672 {offsets = [0, 1, 0], sizes = [1, 1, 16], strides = [1, 1, 1]} : vector<1x16x16xf32> to vector<1x1x16xf32>
      %679 = vector.shape_cast %678 : vector<1x1x16xf32> to vector<1x16xf32>
      %c0_214 = arith.constant 0 : index
      %c0_215 = arith.constant 0 : index
      %c16_216 = arith.constant 16 : index
      %680 = vector.load %arg4[%c0_214, %c0_215, %c16_216] : memref<1x1x256xf32, #tpu.memory_space<vmem>>, vector<1x1x16xf32>
      %681 = vector.shape_cast %680 : vector<1x1x16xf32> to vector<1x16xf32>
      %682 = vector.shape_cast %679 : vector<1x16xf32> to vector<1x1x16xf32>
      tpu.vector_store %arg4[%c0_214, %c0_215, %c16_216], %682 {strides = array<i32>} : memref<1x1x256xf32, #tpu.memory_space<vmem>>, vector<1x1x16xf32>,
      %683 = vector.extract_strided_slice %672 {offsets = [0, 2, 0], sizes = [1, 1, 16], strides = [1, 1, 1]} : vector<1x16x16xf32> to vector<1x1x16xf32>
      %684 = vector.shape_cast %683 : vector<1x1x16xf32> to vector<1x16xf32>
      %c0_217 = arith.constant 0 : index
      %c0_218 = arith.constant 0 : index
      %c32_219 = arith.constant 32 : index
      %685 = vector.load %arg4[%c0_217, %c0_218, %c32_219] : memref<1x1x256xf32, #tpu.memory_space<vmem>>, vector<1x1x16xf32>
      %686 = vector.shape_cast %685 : vector<1x1x16xf32> to vector<1x16xf32>
      %687 = vector.shape_cast %684 : vector<1x16xf32> to vector<1x1x16xf32>
      tpu.vector_store %arg4[%c0_217, %c0_218, %c32_219], %687 {strides = array<i32>} : memref<1x1x256xf32, #tpu.memory_space<vmem>>, vector<1x1x16xf32>,
      %688 = vector.extract_strided_slice %672 {offsets = [0, 3, 0], sizes = [1, 1, 16], strides = [1, 1, 1]} : vector<1x16x16xf32> to vector<1x1x16xf32>
      %689 = vector.shape_cast %688 : vector<1x1x16xf32> to vector<1x16xf32>
      %c0_220 = arith.constant 0 : index
      %c0_221 = arith.constant 0 : index
      %c48_222 = arith.constant 48 : index
      %690 = vector.load %arg4[%c0_220, %c0_221, %c48_222] : memref<1x1x256xf32, #tpu.memory_space<vmem>>, vector<1x1x16xf32>
      %691 = vector.shape_cast %690 : vector<1x1x16xf32> to vector<1x16xf32>
      %692 = vector.shape_cast %689 : vector<1x16xf32> to vector<1x1x16xf32>
      tpu.vector_store %arg4[%c0_220, %c0_221, %c48_222], %692 {strides = array<i32>} : memref<1x1x256xf32, #tpu.memory_space<vmem>>, vector<1x1x16xf32>,
      %693 = vector.extract_strided_slice %672 {offsets = [0, 4, 0], sizes = [1, 1, 16], strides = [1, 1, 1]} : vector<1x16x16xf32> to vector<1x1x16xf32>
      %694 = vector.shape_cast %693 : vector<1x1x16xf32> to vector<1x16xf32>
      %c0_223 = arith.constant 0 : index
      %c0_224 = arith.constant 0 : index
      %c64_225 = arith.constant 64 : index
      %695 = vector.load %arg4[%c0_223, %c0_224, %c64_225] : memref<1x1x256xf32, #tpu.memory_space<vmem>>, vector<1x1x16xf32>
      %696 = vector.shape_cast %695 : vector<1x1x16xf32> to vector<1x16xf32>
      %697 = vector.shape_cast %694 : vector<1x16xf32> to vector<1x1x16xf32>
      tpu.vector_store %arg4[%c0_223, %c0_224, %c64_225], %697 {strides = array<i32>} : memref<1x1x256xf32, #tpu.memory_space<vmem>>, vector<1x1x16xf32>,
      %698 = vector.extract_strided_slice %672 {offsets = [0, 5, 0], sizes = [1, 1, 16], strides = [1, 1, 1]} : vector<1x16x16xf32> to vector<1x1x16xf32>
      %699 = vector.shape_cast %698 : vector<1x1x16xf32> to vector<1x16xf32>
      %c0_226 = arith.constant 0 : index
      %c0_227 = arith.constant 0 : index
      %c80_228 = arith.constant 80 : index
      %700 = vector.load %arg4[%c0_226, %c0_227, %c80_228] : memref<1x1x256xf32, #tpu.memory_space<vmem>>, vector<1x1x16xf32>
      %701 = vector.shape_cast %700 : vector<1x1x16xf32> to vector<1x16xf32>
      %702 = vector.shape_cast %699 : vector<1x16xf32> to vector<1x1x16xf32>
      tpu.vector_store %arg4[%c0_226, %c0_227, %c80_228], %702 {strides = array<i32>} : memref<1x1x256xf32, #tpu.memory_space<vmem>>, vector<1x1x16xf32>,
      %703 = vector.extract_strided_slice %672 {offsets = [0, 6, 0], sizes = [1, 1, 16], strides = [1, 1, 1]} : vector<1x16x16xf32> to vector<1x1x16xf32>
      %704 = vector.shape_cast %703 : vector<1x1x16xf32> to vector<1x16xf32>
      %c0_229 = arith.constant 0 : index
      %c0_230 = arith.constant 0 : index
      %c96_231 = arith.constant 96 : index
      %705 = vector.load %arg4[%c0_229, %c0_230, %c96_231] : memref<1x1x256xf32, #tpu.memory_space<vmem>>, vector<1x1x16xf32>
      %706 = vector.shape_cast %705 : vector<1x1x16xf32> to vector<1x16xf32>
      %707 = vector.shape_cast %704 : vector<1x16xf32> to vector<1x1x16xf32>
      tpu.vector_store %arg4[%c0_229, %c0_230, %c96_231], %707 {strides = array<i32>} : memref<1x1x256xf32, #tpu.memory_space<vmem>>, vector<1x1x16xf32>,
      %708 = vector.extract_strided_slice %672 {offsets = [0, 7, 0], sizes = [1, 1, 16], strides = [1, 1, 1]} : vector<1x16x16xf32> to vector<1x1x16xf32>
      %709 = vector.shape_cast %708 : vector<1x1x16xf32> to vector<1x16xf32>
      %c0_232 = arith.constant 0 : index
      %c0_233 = arith.constant 0 : index
      %c112 = arith.constant 112 : index
      %710 = vector.load %arg4[%c0_232, %c0_233, %c112] : memref<1x1x256xf32, #tpu.memory_space<vmem>>, vector<1x1x16xf32>
      %711 = vector.shape_cast %710 : vector<1x1x16xf32> to vector<1x16xf32>
      %712 = vector.shape_cast %709 : vector<1x16xf32> to vector<1x1x16xf32>
      tpu.vector_store %arg4[%c0_232, %c0_233, %c112], %712 {strides = array<i32>} : memref<1x1x256xf32, #tpu.memory_space<vmem>>, vector<1x1x16xf32>,
      %713 = vector.extract_strided_slice %672 {offsets = [0, 8, 0], sizes = [1, 1, 16], strides = [1, 1, 1]} : vector<1x16x16xf32> to vector<1x1x16xf32>
      %714 = vector.shape_cast %713 : vector<1x1x16xf32> to vector<1x16xf32>
      %c0_234 = arith.constant 0 : index
      %c0_235 = arith.constant 0 : index
      %c128 = arith.constant 128 : index
      %715 = vector.load %arg4[%c0_234, %c0_235, %c128] : memref<1x1x256xf32, #tpu.memory_space<vmem>>, vector<1x1x16xf32>
      %716 = vector.shape_cast %715 : vector<1x1x16xf32> to vector<1x16xf32>
      %717 = vector.shape_cast %714 : vector<1x16xf32> to vector<1x1x16xf32>
      tpu.vector_store %arg4[%c0_234, %c0_235, %c128], %717 {strides = array<i32>} : memref<1x1x256xf32, #tpu.memory_space<vmem>>, vector<1x1x16xf32>,
      %718 = vector.extract_strided_slice %672 {offsets = [0, 9, 0], sizes = [1, 1, 16], strides = [1, 1, 1]} : vector<1x16x16xf32> to vector<1x1x16xf32>
      %719 = vector.shape_cast %718 : vector<1x1x16xf32> to vector<1x16xf32>
      %c0_236 = arith.constant 0 : index
      %c0_237 = arith.constant 0 : index
      %c144 = arith.constant 144 : index
      %720 = vector.load %arg4[%c0_236, %c0_237, %c144] : memref<1x1x256xf32, #tpu.memory_space<vmem>>, vector<1x1x16xf32>
      %721 = vector.shape_cast %720 : vector<1x1x16xf32> to vector<1x16xf32>
      %722 = vector.shape_cast %719 : vector<1x16xf32> to vector<1x1x16xf32>
      tpu.vector_store %arg4[%c0_236, %c0_237, %c144], %722 {strides = array<i32>} : memref<1x1x256xf32, #tpu.memory_space<vmem>>, vector<1x1x16xf32>,
      %723 = vector.extract_strided_slice %672 {offsets = [0, 10, 0], sizes = [1, 1, 16], strides = [1, 1, 1]} : vector<1x16x16xf32> to vector<1x1x16xf32>
      %724 = vector.shape_cast %723 : vector<1x1x16xf32> to vector<1x16xf32>
      %c0_238 = arith.constant 0 : index
      %c0_239 = arith.constant 0 : index
      %c160 = arith.constant 160 : index
      %725 = vector.load %arg4[%c0_238, %c0_239, %c160] : memref<1x1x256xf32, #tpu.memory_space<vmem>>, vector<1x1x16xf32>
      %726 = vector.shape_cast %725 : vector<1x1x16xf32> to vector<1x16xf32>
      %727 = vector.shape_cast %724 : vector<1x16xf32> to vector<1x1x16xf32>
      tpu.vector_store %arg4[%c0_238, %c0_239, %c160], %727 {strides = array<i32>} : memref<1x1x256xf32, #tpu.memory_space<vmem>>, vector<1x1x16xf32>,
      %728 = vector.extract_strided_slice %672 {offsets = [0, 11, 0], sizes = [1, 1, 16], strides = [1, 1, 1]} : vector<1x16x16xf32> to vector<1x1x16xf32>
      %729 = vector.shape_cast %728 : vector<1x1x16xf32> to vector<1x16xf32>
      %c0_240 = arith.constant 0 : index
      %c0_241 = arith.constant 0 : index
      %c176 = arith.constant 176 : index
      %730 = vector.load %arg4[%c0_240, %c0_241, %c176] : memref<1x1x256xf32, #tpu.memory_space<vmem>>, vector<1x1x16xf32>
      %731 = vector.shape_cast %730 : vector<1x1x16xf32> to vector<1x16xf32>
      %732 = vector.shape_cast %729 : vector<1x16xf32> to vector<1x1x16xf32>
      tpu.vector_store %arg4[%c0_240, %c0_241, %c176], %732 {strides = array<i32>} : memref<1x1x256xf32, #tpu.memory_space<vmem>>, vector<1x1x16xf32>,
      %733 = vector.extract_strided_slice %672 {offsets = [0, 12, 0], sizes = [1, 1, 16], strides = [1, 1, 1]} : vector<1x16x16xf32> to vector<1x1x16xf32>
      %734 = vector.shape_cast %733 : vector<1x1x16xf32> to vector<1x16xf32>
      %c0_242 = arith.constant 0 : index
      %c0_243 = arith.constant 0 : index
      %c192 = arith.constant 192 : index
      %735 = vector.load %arg4[%c0_242, %c0_243, %c192] : memref<1x1x256xf32, #tpu.memory_space<vmem>>, vector<1x1x16xf32>
      %736 = vector.shape_cast %735 : vector<1x1x16xf32> to vector<1x16xf32>
      %737 = vector.shape_cast %734 : vector<1x16xf32> to vector<1x1x16xf32>
      tpu.vector_store %arg4[%c0_242, %c0_243, %c192], %737 {strides = array<i32>} : memref<1x1x256xf32, #tpu.memory_space<vmem>>, vector<1x1x16xf32>,
      %738 = vector.extract_strided_slice %672 {offsets = [0, 13, 0], sizes = [1, 1, 16], strides = [1, 1, 1]} : vector<1x16x16xf32> to vector<1x1x16xf32>
      %739 = vector.shape_cast %738 : vector<1x1x16xf32> to vector<1x16xf32>
      %c0_244 = arith.constant 0 : index
      %c0_245 = arith.constant 0 : index
      %c208 = arith.constant 208 : index
      %740 = vector.load %arg4[%c0_244, %c0_245, %c208] : memref<1x1x256xf32, #tpu.memory_space<vmem>>, vector<1x1x16xf32>
      %741 = vector.shape_cast %740 : vector<1x1x16xf32> to vector<1x16xf32>
      %742 = vector.shape_cast %739 : vector<1x16xf32> to vector<1x1x16xf32>
      tpu.vector_store %arg4[%c0_244, %c0_245, %c208], %742 {strides = array<i32>} : memref<1x1x256xf32, #tpu.memory_space<vmem>>, vector<1x1x16xf32>,
      %743 = vector.extract_strided_slice %672 {offsets = [0, 14, 0], sizes = [1, 1, 16], strides = [1, 1, 1]} : vector<1x16x16xf32> to vector<1x1x16xf32>
      %744 = vector.shape_cast %743 : vector<1x1x16xf32> to vector<1x16xf32>
      %c0_246 = arith.constant 0 : index
      %c0_247 = arith.constant 0 : index
      %c224 = arith.constant 224 : index
      %745 = vector.load %arg4[%c0_246, %c0_247, %c224] : memref<1x1x256xf32, #tpu.memory_space<vmem>>, vector<1x1x16xf32>
      %746 = vector.shape_cast %745 : vector<1x1x16xf32> to vector<1x16xf32>
      %747 = vector.shape_cast %744 : vector<1x16xf32> to vector<1x1x16xf32>
      tpu.vector_store %arg4[%c0_246, %c0_247, %c224], %747 {strides = array<i32>} : memref<1x1x256xf32, #tpu.memory_space<vmem>>, vector<1x1x16xf32>,
      %748 = vector.extract_strided_slice %672 {offsets = [0, 15, 0], sizes = [1, 1, 16], strides = [1, 1, 1]} : vector<1x16x16xf32> to vector<1x1x16xf32>
      %749 = vector.shape_cast %748 : vector<1x1x16xf32> to vector<1x16xf32>
      %c0_248 = arith.constant 0 : index
      %c0_249 = arith.constant 0 : index
      %c240 = arith.constant 240 : index
      %750 = vector.load %arg4[%c0_248, %c0_249, %c240] : memref<1x1x256xf32, #tpu.memory_space<vmem>>, vector<1x1x16xf32>
      %751 = vector.shape_cast %750 : vector<1x1x16xf32> to vector<1x16xf32>
      %752 = vector.shape_cast %749 : vector<1x16xf32> to vector<1x1x16xf32>
      tpu.vector_store %arg4[%c0_248, %c0_249, %c240], %752 {strides = array<i32>} : memref<1x1x256xf32, #tpu.memory_space<vmem>>, vector<1x1x16xf32>,
    } else {
    }
    return
  }
  func.func @transform_0(%arg0: i32, %arg1: i32) -> i32 {
    %c0_i32 = arith.constant 0 : i32
    %c0_i32_0 = arith.constant 0 : i32
    return %c0_i32 : i32
  }
  func.func @transform_1(%arg0: i32, %arg1: i32) -> (i32, i32, i32) {
    %c0_i32 = arith.constant 0 : i32
    %c0_i32_0 = arith.constant 0 : i32
    return %arg0, %arg1, %c0_i32 : i32, i32, i32
  }
  func.func @transform_2(%arg0: i32, %arg1: i32) -> (i32, i32, i32) {
    %c0_i32 = arith.constant 0 : i32
    %c0_i32_0 = arith.constant 0 : i32
    %c0_i32_1 = arith.constant 0 : i32
    return %arg0, %c0_i32, %c0_i32_0 : i32, i32, i32
  }
}

</mosaic_0001>

<llo_original>
// kernel: tpu_custom_call.1
$region0: #{tpu_custom_call.1}
  #allocation0 [shape = 'u32[]', space=smem, size = 0x4, offset = 0x4, fixed_abs, tag = 'smem constant byte address 0x4 - core index']
  #allocation1 [shape = 'u32[72,128]{1,0:T(1,128)}', space=vmem, size = 0x9000, scoped, tag = 'internal scratch']
  #allocation2 [shape = 'f32[1,256]{1,0:T(1,128)}', space=vmem, size = 0x400, scoped, tag = 'scratch operand']
  #allocation3 [shape = 'f32[1,256]{1,0:T(1,128)}', space=vmem, size = 0x400, scoped, tag = 'scratch operand']
  #allocation4 [shape = 'f32[1,2,22,22]{3,2,1,0:T(8,128)}', space=vmem, size = 0x6000, scoped, tag = 'scratch operand']
  %s0 = inlined_call_operand.hbm [shape: f32[98], index: 0, kind: input, shape index: {}]
  %s1 = inlined_call_operand.hbm [shape: f32[2,4,256], index: 1, kind: input, shape index: {}]
  %s2 = inlined_call_operand.hbm [shape: f32[2,1,256], index: 2, kind: output, shape index: {}]
  %s3 = sld [smem:[#allocation0]]
  $region57: #{tpu_custom_call.1} parent=0
    _
  %s5 = ssub.s32 1, %s3
  %s6 = scalar_select 0, %s5, %s3
  $region1: #{tpu_custom_call.1} parent=0
    #allocation5 [shape = 'u8[512]{0}', space=smem, size = 0x200, scoped, tag = 'input window, operand 0, single buffered']
    #allocation6 [shape = 's32[2]{0}', space=sflag, size = 0x8, scoped, tag = 'scoped memory for tpu_custom_call.1']
    #allocation7 [shape = 's32[2]{0}', space=sflag, size = 0x8, scoped, tag = 'scoped memory for tpu_custom_call.1']
    #allocation8 [shape = 's32[2]{0}', space=sflag, size = 0x8, scoped, tag = 'scoped memory for tpu_custom_call.1']
    #allocation9 [shape = 'u8[8192]{0}', space=vmem, size = 0x2000, scoped, tag = 'input window, operand 1']
    #allocation10 [shape = 'u8[2048]{0}', space=vmem, size = 0x800, scoped, tag = 'output window, operand 0']
    %7 = vsyncpa [#allocation8], 0
    %8 = vsyncpa [#allocation6], 0
    %s9 = scalar_lea.sflag [#allocation6], 1
    %10 = vsyncpa %s9, 0
    %11 = vsyncpa [#allocation7], 0
    %s12 = scalar_lea.sflag [#allocation7], 1
    %13 = vsyncpa %s12, 0
    loop: start=0, step=1, limit=4
    $region2: #{tpu_custom_call.1} parent=1 // loop_pre_header
      _
    $region3: #{tpu_custom_call.1} parent=1 // loop_header
      %s15 = sphi 0, %s19
      %p16 = scmp.ge.s32.totalorder %s15, 4
      %s22 = sphi 0, %s34
      %s23 = sphi 0, %s30
      %s24 = sphi 0, %s22
      %s25 = sphi 0, %s23
      %s26 = sphi 0, %s24
      %s27 = sphi 0, %s25
      %s35 = sphi 0, %s35
      %s37 = sphi 0, %s35
      %s38 = sphi 0, %s37
      %s52 = sphi 0, %s38
      %s60 = sphi 0, %s62
      %s63 = sphi 0, %s60
      %s64 = sphi 0, %s63
      %s80 = sphi 0, %s64
      %s86 = sphi 0, %s88
      %s89 = sphi 0, %s86
      %s90 = sphi 0, %s89
      %s106 = sphi 0, %s90
    $region4: #{tpu_custom_call.1} parent=1 // loop_header_branch
      %18 = sbr.rel (%p16) target = $region8
    $region5: #{tpu_custom_call.1} parent=1 // loop_body
      %s20 = ssub.s32 %s15, 1
      %s21 = ssub.s32 %s15, 2
      %s28 = sadd.s32 1, %s23
      %p29 = scmp.ge.s32.totalorder %s28, 1
      %s30 = scalar_select %p29, 0, %s28
      %s31 = sadd.s32 1, %s22
      %s32 = scalar_select %p29, %s31, %s22
      %p33 = scmp.ge.s32.totalorder %s32, 2
      %s34 = scalar_select %p33, 0, %s32
      %s36 = sadd.s32 %s35, 1
      %p39 = scmp.eq.s32.totalorder %s15, 1
      %p40 = scmp.ne.s32.totalorder %s35, %s37
      %p41 = scmp.eq.s32.totalorder %s15, 0
      %p42 = por %p40, %p41
      %p43 = scmp.ne.s32.totalorder %s35, %s37
      %p44 = scmp.eq.s32.totalorder %s20, 1
      %p45 = por %p43, %p44
      %p46 = scmp.ne.s32.totalorder %s37, %s38
      %p47 = scmp.eq.s32.totalorder %s20, 0
      %p48 = por %p46, %p47
      %p49 = scmp.ne.s32.totalorder %s37, %s38
      %p50 = scmp.eq.s32.totalorder %s21, 1
      %p51 = por %p49, %p50
      %p53 = scmp.ne.s32.totalorder %s38, %s52
      %p54 = scmp.eq.s32.totalorder %s21, 0
      %p55 = por %p53, %p54
      %s56 = ssub.s32 %s22, %s34
      %s57 = ssub.s32 %s23, %s30
      %s58 = sor.u32 %s56, %s57
      %p59 = scmp.eq.s32.totalorder %s58, 0
      %s61 = sadd.s32 %s60, 1
      %s62 = scalar_select %p59, %s60, %s61
      %p65 = pneg %p59
      %p66 = scmp.eq.s32.totalorder %s15, 1
      %p67 = por %p65, %p66
      %p68 = scmp.ne.s32.totalorder %s60, %s63
      %p69 = scmp.eq.s32.totalorder %s15, 0
      %p70 = por %p68, %p69
      %p71 = scmp.ne.s32.totalorder %s60, %s63
      %p72 = scmp.eq.s32.totalorder %s20, 1
      %p73 = por %p71, %p72
      %p74 = scmp.ne.s32.totalorder %s63, %s64
      %p75 = scmp.eq.s32.totalorder %s20, 0
      %p76 = por %p74, %p75
      %p77 = scmp.ne.s32.totalorder %s63, %s64
      %p78 = scmp.eq.s32.totalorder %s21, 1
      %p79 = por %p77, %p78
      %p81 = scmp.ne.s32.totalorder %s64, %s80
      %p82 = scmp.eq.s32.totalorder %s21, 0
      %p83 = por %p81, %p82
      %s84 = ssub.s32 %s22, %s34
      %p85 = scmp.eq.s32.totalorder %s84, 0
      %s87 = sadd.s32 %s86, 1
      %s88 = scalar_select %p85, %s86, %s87
      %p91 = pneg %p85
      %p92 = scmp.eq.s32.totalorder %s15, 1
      %p93 = por %p91, %p92
      %p94 = scmp.ne.s32.totalorder %s86, %s89
      %p95 = scmp.eq.s32.totalorder %s15, 0
      %p96 = por %p94, %p95
      %p97 = scmp.ne.s32.totalorder %s86, %s89
      %p98 = scmp.eq.s32.totalorder %s20, 1
      %p99 = por %p97, %p98
      %p100 = scmp.ne.s32.totalorder %s89, %s90
      %p101 = scmp.eq.s32.totalorder %s20, 0
      %p102 = por %p100, %p101
      %p103 = scmp.ne.s32.totalorder %s89, %s90
      %p104 = scmp.eq.s32.totalorder %s21, 1
      %p105 = por %p103, %p104
      %p107 = scmp.ne.s32.totalorder %s90, %s106
      %p108 = scmp.eq.s32.totalorder %s21, 0
      %p109 = por %p107, %p108
      %p110 = scmp.le.s32.totalorder 1, %s15
      %p111 = scmp.lt.s32.totalorder %s15, 3
      %p112 = pnand %p110, %p111
      %p113 = pneg %p112
      // Predicated region
      $region9: #{tpu_custom_call.1} parent=5 // pred_check
        _
      $region10: #{tpu_custom_call.1} parent=5 // pred_check_branch
        %115 = sbr.rel (%p112) target = $region12
      $region11: #{tpu_custom_call.1} parent=5 // pred_region
        %s116 = ssub.s32 %s15, 1
        // Predicated region
        $region13: #{tpu_custom_call.1} parent=11 // pred_check
          %p117 = pneg %p48
        $region14: #{tpu_custom_call.1} parent=11 // pred_check_branch
          %119 = sbr.rel (%p117) target = $region16
        $region15: #{tpu_custom_call.1} parent=11 // pred_region
          %121 = vsyncadd [#allocation8], 0
          %s123 = sshll.u32 %s0, 4
          %s124 = int_to_ptr.hbm [resolvable:$true] %s123
          %126 = dma.hbm_to_smem %s124, 16, [#allocation5], [#allocation8]
        $region16: #{tpu_custom_call.1} parent=11 // pred_fallthru
          _
      $region12: #{tpu_custom_call.1} parent=5 // pred_fallthru
        _
      %p127 = scmp.lt.s32.totalorder %s15, 2
      // Predicated region
      $region17: #{tpu_custom_call.1} parent=5 // pred_check
        %p128 = pneg %p127
      $region18: #{tpu_custom_call.1} parent=5 // pred_check_branch
        %130 = sbr.rel (%p128) target = $region20
      $region19: #{tpu_custom_call.1} parent=5 // pred_region
        // Predicated region
        $region21: #{tpu_custom_call.1} parent=19 // pred_check
          %p131 = pneg %p70
        $region22: #{tpu_custom_call.1} parent=19 // pred_check_branch
          %133 = sbr.rel (%p131) target = $region24
        $region23: #{tpu_custom_call.1} parent=19 // pred_region
          %s134 = sand.u32 %s60, 1
          %s135 = scalar_lea.sflag [#allocation6], %s134
          %s136 = sand.u32 %s60, 1
          %s137 = smul.addr %s136, 8
          %s138 = scalar_lea.vmem [#allocation9], %s137
          %140 = vsyncadd %s135, 0
          %s141 = smul.addr %s23, 2
          %s142 = smul.addr %s22, 2
          %s143 = sadd.s32 %s141, %s142
          %s144 = smul.addr %s143, 4
          %s145 = scalar_lea.hbm %s1, %s144
          %s147 = sshll.u32 %s145, 4
          %s148 = int_to_ptr.hbm [resolvable:$true] %s147
          %s149 = sshll.u32 %s138, 4
          %s150 = int_to_ptr.vmem [resolvable:$true] %s149
          %152 = dma.hbm_to_vmem [thread:$0]  %s148, 128, %s150, %s135
        $region24: #{tpu_custom_call.1} parent=19 // pred_fallthru
          _
      $region20: #{tpu_custom_call.1} parent=5 // pred_fallthru
        _
      %p153 = scmp.le.s32.totalorder 1, %s15
      %p154 = scmp.lt.s32.totalorder %s15, 3
      %p155 = pnand %p153, %p154
      %p156 = pneg %p155
      // Predicated region
      $region25: #{tpu_custom_call.1} parent=5 // pred_check
        _
      $region26: #{tpu_custom_call.1} parent=5 // pred_check_branch
        %158 = sbr.rel (%p155) target = $region28
      $region27: #{tpu_custom_call.1} parent=5 // pred_region
        %s159 = ssub.s32 %s15, 1
        // Predicated region
        $region29: #{tpu_custom_call.1} parent=27 // pred_check
          %p160 = pneg %p48
        $region30: #{tpu_custom_call.1} parent=27 // pred_check_branch
          %162 = sbr.rel (%p160) target = $region32
        $region31: #{tpu_custom_call.1} parent=27 // pred_region
          %164 = dma.done [#allocation8], 16
        $region32: #{tpu_custom_call.1} parent=27 // pred_fallthru
          _
        %s165 = sand.u32 %s63, 1
        %s166 = scalar_lea.sflag [#allocation6], %s165
        %s167 = sand.u32 %s63, 1
        %s168 = smul.addr %s167, 8
        %s169 = scalar_lea.vmem [#allocation9], %s168
        // Predicated region
        $region33: #{tpu_custom_call.1} parent=27 // pred_check
          %p170 = pneg %p76
        $region34: #{tpu_custom_call.1} parent=27 // pred_check_branch
          %172 = sbr.rel (%p170) target = $region36
        $region35: #{tpu_custom_call.1} parent=27 // pred_region
          %174 = dma.done %s166, 128
        $region36: #{tpu_custom_call.1} parent=27 // pred_fallthru
          _
        %175 = sfence
        %p176 = pneg %p48
        %p177 = pneg %p45
        %s178 = sand.u32 %s63, 1
        %s179 = scalar_lea.sflag [#allocation6], %s178
        %s180 = sand.u32 %s63, 1
        %s181 = smul.addr %s180, 8
        %s182 = scalar_lea.vmem [#allocation9], %s181
        %p183 = pneg %p76
        %p184 = pneg %p73
        %p185 = pneg %p102
        %p186 = pneg %p99
        %s187 = sand.u32 %s89, 1
        %s188 = scalar_lea.sflag [#allocation7], %s187
        %s189 = sand.u32 %s89, 1
        %s190 = smul.addr %s189, 2
        %s191 = scalar_lea.vmem [#allocation10], %s190
        %v192 = vld [vmem:[%s169] sm:$0xff]
        %194 = vst [vmem:[#allocation1] ss:$2 sm:$0xff] %v192
        %v195 = vld.sshfl [vmem:[#allocation1] sm:$0xff pattern:$0x75316420]
        %v196 = vld.sshfl [vmem:[#allocation1 + $0x8] sm:$0xff pattern:$0x75316420]
        %vm199 = vcmask 1043456
        %v200 = vsel %vm199, %v195, 0.0
        %v201 = vrot.slane %v200, 4
        %v202 = vadd.f32 %v200, %v201
        %v203 = vrot.slane %v202, 2
        %v204 = vadd.f32 %v202, %v203
        %v205 = vrot.slane %v204, 1
        %v206 = vadd.f32 %v204, %v205
        %v207 = vsel %vm199, %v196, 0.0
        %v208 = vrot.slane %v207, 4
        %v209 = vadd.f32 %v207, %v208
        %v210 = vrot.slane %v209, 2
        %v211 = vadd.f32 %v209, %v210
        %v212 = vrot.slane %v211, 1
        %v213 = vadd.f32 %v211, %v212
        %214 = vst [vmem:[#allocation1] ss:$2 sm:$0xff] %v192
        %v215 = vld.sshfl [vmem:[#allocation1] sm:$0xff pattern:$0x75316420]
        %v216 = vld.sshfl [vmem:[#allocation1 + $0x8] sm:$0xff pattern:$0x75316420]
        %v219 = vsel %vm199, %v215, -inf
        %v220 = vrot.slane %v219, 4
        %v221 = vmax.f32 %v219, %v220
        %v222 = vrot.slane %v221, 2
        %v223 = vmax.f32 %v221, %v222
        %v224 = vrot.slane %v223, 1
        %v225 = vmax.f32 %v223, %v224
        %v226 = vsel %vm199, %v216, -inf
        %v227 = vrot.slane %v226, 4
        %v228 = vmax.f32 %v226, %v227
        %v229 = vrot.slane %v228, 2
        %v230 = vmax.f32 %v228, %v229
        %v231 = vrot.slane %v230, 1
        %v232 = vmax.f32 %v230, %v231
        %p233 = scmp.eq.s32.totalorder %s25, 0
        // Predicated region
        $region37: #{tpu_custom_call.1} parent=27 // pred_check
          %p234 = pneg %p233
        $region38: #{tpu_custom_call.1} parent=27 // pred_check_branch
          %236 = sbr.rel (%p234) target = $region40
        $region39: #{tpu_custom_call.1} parent=27 // pred_region
          %v237 = vlaneseq
          %vm238 = vcmp.ge.s32.totalorder %v237, 0
          %vm239 = vcmp.lt.s32.totalorder %v237, 256
          %vm240 = vmand %vm238, %vm239
          %241 = vst.msk [vmem:[#allocation2] sm:$0x3] %vm240, 0.0
          %242 = vst.msk [vmem:[#allocation3] sm:$0x3] %vm240, -inf
        $region40: #{tpu_custom_call.1} parent=27 // pred_fallthru
          _
        %v243 = vld [vmem:[#allocation2] sm:$0x3]
        %v246 = vrot.slane %v213, 7
        %vm247 = vcmask 1040384
        %v248 = vsel %vm247, %v206, %v246
        %v250 = vadd.f32 %v243, %v248
        %v251 = vlaneseq
        %vm252 = vcmp.ge.s32.totalorder %v251, 0
        %vm253 = vcmp.lt.s32.totalorder %v251, 256
        %vm254 = vmand %vm252, %vm253
        %255 = vst.msk [vmem:[#allocation2] sm:$0x3] %vm254, %v250
        %v256 = vld [vmem:[#allocation3] sm:$0x3]
        %v259 = vrot.slane %v232, 7
        %v260 = vsel %vm247, %v225, %v259
        %v262 = vmax.f32 %v256, %v260
        %263 = vst.msk [vmem:[#allocation3] sm:$0x3] %vm254, %v262
        // Predicated region
        $region41: #{tpu_custom_call.1} parent=27 // pred_check
          %p264 = pneg %p233
        $region42: #{tpu_custom_call.1} parent=27 // pred_check_branch
          %266 = sbr.rel (%p264) target = $region44
        $region43: #{tpu_custom_call.1} parent=27 // pred_region
          %v267 = vld [vmem:[#allocation2] sm:$0x3]
          %v268 = vmul.f32 %v267, 0.25
          %v269 = vld [vmem:[#allocation3] sm:$0x3]
          %vm270 = vcmask 179200
          %271 = vst.msk [vmem:[#allocation4] sm:$0xff] %vm270, 0.0
          %272 = vst.msk [vmem:[#allocation4 + $0x8] sm:$0xff] %vm270, 0.0
          %vm273 = vcmask 177152
          %274 = vst.msk [vmem:[#allocation4 + $0x10] sm:$0x3f] %vm273, 0.0
          %275 = vst.msk [vmem:[#allocation4 + $0x18] sm:$0xff] %vm270, 0.0
          %276 = vst.msk [vmem:[#allocation4 + $0x20] sm:$0xff] %vm270, 0.0
          %277 = vst.msk [vmem:[#allocation4 + $0x28] sm:$0x3f] %vm273, 0.0
          %v279 = vperm.slane %v268, 0
          %280 = vrot.lane.b32.xlu0 %v279, 3
          %v281 = vpop.permute.xlu0 %280
          %vm283 = vcmask 147480
          %284 = vst.msk [vmem:[#allocation4 + $0x3] sm:$0x1] %vm283, %v281
          %v286 = vperm.slane %v269, 0
          %287 = vrot.lane.b32.xlu0 %v286, 3
          %v288 = vpop.permute.xlu0 %287
          %s290 = scalar_lea.vmem [#allocation4], 24
          %291 = vst.msk [vmem:[%s290 + $0x3] sm:$0x1] %vm283, %v288
          %292 = vrot.lane.b32.xlu0 %v279, 115
          %v293 = vpop.permute.xlu0 %292
          %295 = vst.msk [vmem:[#allocation4 + $0x4] sm:$0x1] %vm283, %v293
          %296 = vrot.lane.b32.xlu0 %v286, 115
          %v297 = vpop.permute.xlu0 %296
          %299 = vst.msk [vmem:[%s290 + $0x4] sm:$0x1] %vm283, %v297
          %300 = vrot.lane.b32.xlu0 %v279, 99
          %v301 = vpop.permute.xlu0 %300
          %303 = vst.msk [vmem:[#allocation4 + $0x5] sm:$0x1] %vm283, %v301
          %304 = vrot.lane.b32.xlu0 %v286, 99
          %v305 = vpop.permute.xlu0 %304
          %307 = vst.msk [vmem:[%s290 + $0x5] sm:$0x1] %vm283, %v305
          %308 = vrot.lane.b32.xlu0 %v279, 83
          %v309 = vpop.permute.xlu0 %308
          %311 = vst.msk [vmem:[#allocation4 + $0x6] sm:$0x1] %vm283, %v309
          %312 = vrot.lane.b32.xlu0 %v286, 83
          %v313 = vpop.permute.xlu0 %312
          %315 = vst.msk [vmem:[%s290 + $0x6] sm:$0x1] %vm283, %v313
          %316 = vrot.lane.b32.xlu0 %v279, 67
          %v317 = vpop.permute.xlu0 %316
          %319 = vst.msk [vmem:[#allocation4 + $0x7] sm:$0x1] %vm283, %v317
          %320 = vrot.lane.b32.xlu0 %v286, 67
          %v321 = vpop.permute.xlu0 %320
          %323 = vst.msk [vmem:[%s290 + $0x7] sm:$0x1] %vm283, %v321
          %324 = vrot.lane.b32.xlu0 %v279, 51
          %v325 = vpop.permute.xlu0 %324
          %327 = vst.msk [vmem:[#allocation4 + $0x8] sm:$0x1] %vm283, %v325
          %328 = vrot.lane.b32.xlu0 %v286, 51
          %v329 = vpop.permute.xlu0 %328
          %331 = vst.msk [vmem:[%s290 + $0x8] sm:$0x1] %vm283, %v329
          %332 = vrot.lane.b32.xlu0 %v279, 35
          %v333 = vpop.permute.xlu0 %332
          %335 = vst.msk [vmem:[#allocation4 + $0x9] sm:$0x1] %vm283, %v333
          %336 = vrot.lane.b32.xlu0 %v286, 35
          %v337 = vpop.permute.xlu0 %336
          %339 = vst.msk [vmem:[%s290 + $0x9] sm:$0x1] %vm283, %v337
          %340 = vrot.lane.b32.xlu0 %v279, 19
          %v341 = vpop.permute.xlu0 %340
          %343 = vst.msk [vmem:[#allocation4 + $0xa] sm:$0x1] %vm283, %v341
          %344 = vrot.lane.b32.xlu0 %v286, 19
          %v345 = vpop.permute.xlu0 %344
          %347 = vst.msk [vmem:[%s290 + $0xa] sm:$0x1] %vm283, %v345
          %v348 = vrot.slane %v268, 1
          %v349 = vperm.slane %v348, 0
          %350 = vrot.lane.b32.xlu0 %v349, 3
          %v351 = vpop.permute.xlu0 %350
          %353 = vst.msk [vmem:[#allocation4 + $0xb] sm:$0x1] %vm283, %v351
          %v354 = vrot.slane %v269, 1
          %v355 = vperm.slane %v354, 0
          %356 = vrot.lane.b32.xlu0 %v355, 3
          %v357 = vpop.permute.xlu0 %356
          %359 = vst.msk [vmem:[%s290 + $0xb] sm:$0x1] %vm283, %v357
          %360 = vrot.lane.b32.xlu0 %v268, 112
          %v361 = vpop.permute.xlu0 %360
          %v362 = vrot.slane %v361, 1
          %v363 = vperm.slane %v362, 0
          %364 = vrot.lane.b32.xlu0 %v363, 3
          %v365 = vpop.permute.xlu0 %364
          %367 = vst.msk [vmem:[#allocation4 + $0xc] sm:$0x1] %vm283, %v365
          %368 = vrot.lane.b32.xlu0 %v269, 112
          %v369 = vpop.permute.xlu0 %368
          %v370 = vrot.slane %v369, 1
          %v371 = vperm.slane %v370, 0
          %372 = vrot.lane.b32.xlu0 %v371, 3
          %v373 = vpop.permute.xlu0 %372
          %375 = vst.msk [vmem:[%s290 + $0xc] sm:$0x1] %vm283, %v373
          %376 = vrot.lane.b32.xlu0 %v268, 96
          %v377 = vpop.permute.xlu0 %376
          %v378 = vrot.slane %v377, 1
          %v379 = vperm.slane %v378, 0
          %380 = vrot.lane.b32.xlu0 %v379, 3
          %v381 = vpop.permute.xlu0 %380
          %383 = vst.msk [vmem:[#allocation4 + $0xd] sm:$0x1] %vm283, %v381
          %384 = vrot.lane.b32.xlu0 %v269, 96
          %v385 = vpop.permute.xlu0 %384
          %v386 = vrot.slane %v385, 1
          %v387 = vperm.slane %v386, 0
          %388 = vrot.lane.b32.xlu0 %v387, 3
          %v389 = vpop.permute.xlu0 %388
          %391 = vst.msk [vmem:[%s290 + $0xd] sm:$0x1] %vm283, %v389
          %392 = vrot.lane.b32.xlu0 %v268, 80
          %v393 = vpop.permute.xlu0 %392
          %v394 = vrot.slane %v393, 1
          %v395 = vperm.slane %v394, 0
          %396 = vrot.lane.b32.xlu0 %v395, 3
          %v397 = vpop.permute.xlu0 %396
          %399 = vst.msk [vmem:[#allocation4 + $0xe] sm:$0x1] %vm283, %v397
          %400 = vrot.lane.b32.xlu0 %v269, 80
          %v401 = vpop.permute.xlu0 %400
          %v402 = vrot.slane %v401, 1
          %v403 = vperm.slane %v402, 0
          %404 = vrot.lane.b32.xlu0 %v403, 3
          %v405 = vpop.permute.xlu0 %404
          %407 = vst.msk [vmem:[%s290 + $0xe] sm:$0x1] %vm283, %v405
          %408 = vrot.lane.b32.xlu0 %v268, 64
          %v409 = vpop.permute.xlu0 %408
          %v410 = vrot.slane %v409, 1
          %v411 = vperm.slane %v410, 0
          %412 = vrot.lane.b32.xlu0 %v411, 3
          %v413 = vpop.permute.xlu0 %412
          %415 = vst.msk [vmem:[#allocation4 + $0xf] sm:$0x1] %vm283, %v413
          %416 = vrot.lane.b32.xlu0 %v269, 64
          %v417 = vpop.permute.xlu0 %416
          %v418 = vrot.slane %v417, 1
          %v419 = vperm.slane %v418, 0
          %420 = vrot.lane.b32.xlu0 %v419, 3
          %v421 = vpop.permute.xlu0 %420
          %423 = vst.msk [vmem:[%s290 + $0xf] sm:$0x1] %vm283, %v421
          %424 = vrot.lane.b32.xlu0 %v268, 48
          %v425 = vpop.permute.xlu0 %424
          %v426 = vrot.slane %v425, 1
          %v427 = vperm.slane %v426, 0
          %428 = vrot.lane.b32.xlu0 %v427, 3
          %v429 = vpop.permute.xlu0 %428
          %431 = vst.msk [vmem:[#allocation4 + $0x10] sm:$0x1] %vm283, %v429
          %432 = vrot.lane.b32.xlu0 %v269, 48
          %v433 = vpop.permute.xlu0 %432
          %v434 = vrot.slane %v433, 1
          %v435 = vperm.slane %v434, 0
          %436 = vrot.lane.b32.xlu0 %v435, 3
          %v437 = vpop.permute.xlu0 %436
          %439 = vst.msk [vmem:[%s290 + $0x10] sm:$0x1] %vm283, %v437
          %440 = vrot.lane.b32.xlu0 %v268, 32
          %v441 = vpop.permute.xlu0 %440
          %v442 = vrot.slane %v441, 1
          %v443 = vperm.slane %v442, 0
          %444 = vrot.lane.b32.xlu0 %v443, 3
          %v445 = vpop.permute.xlu0 %444
          %447 = vst.msk [vmem:[#allocation4 + $0x11] sm:$0x1] %vm283, %v445
          %448 = vrot.lane.b32.xlu0 %v269, 32
          %v449 = vpop.permute.xlu0 %448
          %v450 = vrot.slane %v449, 1
          %v451 = vperm.slane %v450, 0
          %452 = vrot.lane.b32.xlu0 %v451, 3
          %v453 = vpop.permute.xlu0 %452
          %455 = vst.msk [vmem:[%s290 + $0x11] sm:$0x1] %vm283, %v453
          %456 = vrot.lane.b32.xlu0 %v268, 16
          %v457 = vpop.permute.xlu0 %456
          %v458 = vrot.slane %v457, 1
          %v459 = vperm.slane %v458, 0
          %460 = vrot.lane.b32.xlu0 %v459, 3
          %v461 = vpop.permute.xlu0 %460
          %463 = vst.msk [vmem:[#allocation4 + $0x12] sm:$0x1] %vm283, %v461
          %464 = vrot.lane.b32.xlu0 %v269, 16
          %v465 = vpop.permute.xlu0 %464
          %v466 = vrot.slane %v465, 1
          %v467 = vperm.slane %v466, 0
          %468 = vrot.lane.b32.xlu0 %v467, 3
          %v469 = vpop.permute.xlu0 %468
          %471 = vst.msk [vmem:[%s290 + $0x12] sm:$0x1] %vm283, %v469
          %v472 = vld [vmem:[#allocation4] sm:$0xff]
          %v473 = vld [vmem:[#allocation4 + $0x8] sm:$0xff]
          %v474 = vld [vmem:[#allocation4 + $0x10] sm:$0x3f]
          %v475 = vld [vmem:[%s290] sm:$0xff]
          %v476 = vld [vmem:[%s290 + $0x8] sm:$0xff]
          %v477 = vld [vmem:[%s290 + $0x10] sm:$0x3f]
          %s478 = sld [smem:[#allocation5]]
          %s479 = sld [smem:[#allocation5 + $0x31]]
          %v480 = vstv %s478
          %v481 = vmul.f32 %v480, %v472
          %v482 = vmul.f32 %v480, %v473
          %v483 = vadd.f32 %v481, 0.0
          %v484 = vadd.f32 %v482, 0.0
          %v485 = vstv %s479
          %v486 = vmul.f32 %v485, %v475
          %v487 = vmul.f32 %v485, %v476
          %v488 = vadd.f32 %v483, %v486
          %v489 = vadd.f32 %v484, %v487
          %s490 = sld [smem:[#allocation5 + $0x7]]
          %s491 = sld [smem:[#allocation5 + $0x38]]
          %v492 = vstv %s490
          %v493 = vmul.f32 %v492, %v472
          %v494 = vmul.f32 %v492, %v473
          %v495 = vmul.f32 %v492, %v474
          %vm499 = vcmask 1046528
          %v500 = vrot.slane %v493, 1
          %v501 = vrot.slane %v494, 1
          %v502 = vsel %vm499, %v500, %v501
          %v503 = vrot.slane %v495, 1
          %v504 = vsel %vm499, %v501, %v503
          %v507 = vadd.f32 %v488, %v502
          %v508 = vadd.f32 %v489, %v504
          %v509 = vstv %s491
          %v510 = vmul.f32 %v509, %v475
          %v511 = vmul.f32 %v509, %v476
          %v512 = vmul.f32 %v509, %v477
          %v516 = vrot.slane %v510, 1
          %v517 = vrot.slane %v511, 1
          %v518 = vsel %vm499, %v516, %v517
          %v519 = vrot.slane %v512, 1
          %v520 = vsel %vm499, %v517, %v519
          %v523 = vadd.f32 %v507, %v518
          %v524 = vadd.f32 %v508, %v520
          %s525 = sld [smem:[#allocation5 + $0xe]]
          %s526 = sld [smem:[#allocation5 + $0x3f]]
          %v527 = vstv %s525
          %v528 = vmul.f32 %v527, %v472
          %v529 = vmul.f32 %v527, %v473
          %v530 = vmul.f32 %v527, %v474
          %vm534 = vcmask 1045504
          %v535 = vrot.slane %v528, 2
          %v536 = vrot.slane %v529, 2
          %v537 = vsel %vm534, %v535, %v536
          %v538 = vrot.slane %v530, 2
          %v539 = vsel %vm534, %v536, %v538
          %v542 = vadd.f32 %v523, %v537
          %v543 = vadd.f32 %v524, %v539
          %v544 = vstv %s526
          %v545 = vmul.f32 %v544, %v475
          %v546 = vmul.f32 %v544, %v476
          %v547 = vmul.f32 %v544, %v477
          %v551 = vrot.slane %v545, 2
          %v552 = vrot.slane %v546, 2
          %v553 = vsel %vm534, %v551, %v552
          %v554 = vrot.slane %v547, 2
          %v555 = vsel %vm534, %v552, %v554
          %v558 = vadd.f32 %v542, %v553
          %v559 = vadd.f32 %v543, %v555
          %s560 = sld [smem:[#allocation5 + $0x15]]
          %s561 = sld [smem:[#allocation5 + $0x46]]
          %v562 = vstv %s560
          %v563 = vmul.f32 %v562, %v472
          %v564 = vmul.f32 %v562, %v473
          %v565 = vmul.f32 %v562, %v474
          %vm569 = vcmask 1044480
          %v570 = vrot.slane %v563, 3
          %v571 = vrot.slane %v564, 3
          %v572 = vsel %vm569, %v570, %v571
          %v573 = vrot.slane %v565, 3
          %v574 = vsel %vm569, %v571, %v573
          %v577 = vadd.f32 %v558, %v572
          %v578 = vadd.f32 %v559, %v574
          %v579 = vstv %s561
          %v580 = vmul.f32 %v579, %v475
          %v581 = vmul.f32 %v579, %v476
          %v582 = vmul.f32 %v579, %v477
          %v586 = vrot.slane %v580, 3
          %v587 = vrot.slane %v581, 3
          %v588 = vsel %vm569, %v586, %v587
          %v589 = vrot.slane %v582, 3
          %v590 = vsel %vm569, %v587, %v589
          %v593 = vadd.f32 %v577, %v588
          %v594 = vadd.f32 %v578, %v590
          %s595 = sld [smem:[#allocation5 + $0x1c]]
          %s596 = sld [smem:[#allocation5 + $0x4d]]
          %v597 = vstv %s595
          %v598 = vmul.f32 %v597, %v472
          %v599 = vmul.f32 %v597, %v473
          %v600 = vmul.f32 %v597, %v474
          %v604 = vrot.slane %v598, 4
          %v605 = vrot.slane %v599, 4
          %v606 = vsel %vm199, %v604, %v605
          %v607 = vrot.slane %v600, 4
          %v608 = vsel %vm199, %v605, %v607
          %v611 = vadd.f32 %v593, %v606
          %v612 = vadd.f32 %v594, %v608
          %v613 = vstv %s596
          %v614 = vmul.f32 %v613, %v475
          %v615 = vmul.f32 %v613, %v476
          %v616 = vmul.f32 %v613, %v477
          %v620 = vrot.slane %v614, 4
          %v621 = vrot.slane %v615, 4
          %v622 = vsel %vm199, %v620, %v621
          %v623 = vrot.slane %v616, 4
          %v624 = vsel %vm199, %v621, %v623
          %v627 = vadd.f32 %v611, %v622
          %v628 = vadd.f32 %v612, %v624
          %s629 = sld [smem:[#allocation5 + $0x23]]
          %s630 = sld [smem:[#allocation5 + $0x54]]
          %v631 = vstv %s629
          %v632 = vmul.f32 %v631, %v472
          %v633 = vmul.f32 %v631, %v473
          %v634 = vmul.f32 %v631, %v474
          %vm638 = vcmask 1042432
          %v639 = vrot.slane %v632, 5
          %v640 = vrot.slane %v633, 5
          %v641 = vsel %vm638, %v639, %v640
          %v642 = vrot.slane %v634, 5
          %v643 = vsel %vm638, %v640, %v642
          %v646 = vadd.f32 %v627, %v641
          %v647 = vadd.f32 %v628, %v643
          %v648 = vstv %s630
          %v649 = vmul.f32 %v648, %v475
          %v650 = vmul.f32 %v648, %v476
          %v651 = vmul.f32 %v648, %v477
          %v655 = vrot.slane %v649, 5
          %v656 = vrot.slane %v650, 5
          %v657 = vsel %vm638, %v655, %v656
          %v658 = vrot.slane %v651, 5
          %v659 = vsel %vm638, %v656, %v658
          %v662 = vadd.f32 %v646, %v657
          %v663 = vadd.f32 %v647, %v659
          %s664 = sld [smem:[#allocation5 + $0x2a]]
          %s665 = sld [smem:[#allocation5 + $0x5b]]
          %v666 = vstv %s664
          %v667 = vmul.f32 %v666, %v472
          %v668 = vmul.f32 %v666, %v473
          %v669 = vmul.f32 %v666, %v474
          %vm673 = vcmask 1041408
          %v674 = vrot.slane %v667, 6
          %v675 = vrot.slane %v668, 6
          %v676 = vsel %vm673, %v674, %v675
          %v677 = vrot.slane %v669, 6
          %v678 = vsel %vm673, %v675, %v677
          %v681 = vadd.f32 %v662, %v676
          %v682 = vadd.f32 %v663, %v678
          %v683 = vstv %s665
          %v684 = vmul.f32 %v683, %v475
          %v685 = vmul.f32 %v683, %v476
          %v686 = vmul.f32 %v683, %v477
          %v690 = vrot.slane %v684, 6
          %v691 = vrot.slane %v685, 6
          %v692 = vsel %vm673, %v690, %v691
          %v693 = vrot.slane %v686, 6
          %v694 = vsel %vm673, %v691, %v693
          %v697 = vadd.f32 %v681, %v692
          %v698 = vadd.f32 %v682, %v694
          %s699 = sld [smem:[#allocation5 + $0x1]]
          %s700 = sld [smem:[#allocation5 + $0x32]]
          %v701 = vstv %s699
          %v702 = vmul.f32 %v701, %v472
          %v703 = vmul.f32 %v701, %v473
          %706 = vrot.lane.b32.xlu0 %v702, 127
          %v707 = vpop.permute.xlu0 %706
          %708 = vrot.lane.b32.xlu0 %v703, 127
          %v709 = vpop.permute.xlu0 %708
          %v712 = vadd.f32 %v697, %v707
          %v713 = vadd.f32 %v698, %v709
          %v714 = vstv %s700
          %v715 = vmul.f32 %v714, %v475
          %v716 = vmul.f32 %v714, %v476
          %719 = vrot.lane.b32.xlu0 %v715, 127
          %v720 = vpop.permute.xlu0 %719
          %721 = vrot.lane.b32.xlu0 %v716, 127
          %v722 = vpop.permute.xlu0 %721
          %v725 = vadd.f32 %v712, %v720
          %v726 = vadd.f32 %v713, %v722
          %s727 = sld [smem:[#allocation5 + $0x8]]
          %s728 = sld [smem:[#allocation5 + $0x39]]
          %v729 = vstv %s727
          %v730 = vmul.f32 %v729, %v472
          %v731 = vmul.f32 %v729, %v473
          %v732 = vmul.f32 %v729, %v474
          %v736 = vrot.slane %v730, 1
          %v737 = vrot.slane %v731, 1
          %v738 = vsel %vm499, %v736, %v737
          %v739 = vrot.slane %v732, 1
          %v740 = vsel %vm499, %v737, %v739
          %741 = vrot.lane.b32.xlu0 %v738, 127
          %v742 = vpop.permute.xlu0 %741
          %743 = vrot.lane.b32.xlu0 %v740, 127
          %v744 = vpop.permute.xlu0 %743
          %v747 = vadd.f32 %v725, %v742
          %v748 = vadd.f32 %v726, %v744
          %v749 = vstv %s728
          %v750 = vmul.f32 %v749, %v475
          %v751 = vmul.f32 %v749, %v476
          %v752 = vmul.f32 %v749, %v477
          %v756 = vrot.slane %v750, 1
          %v757 = vrot.slane %v751, 1
          %v758 = vsel %vm499, %v756, %v757
          %v759 = vrot.slane %v752, 1
          %v760 = vsel %vm499, %v757, %v759
          %761 = vrot.lane.b32.xlu0 %v758, 127
          %v762 = vpop.permute.xlu0 %761
          %763 = vrot.lane.b32.xlu0 %v760, 127
          %v764 = vpop.permute.xlu0 %763
          %v767 = vadd.f32 %v747, %v762
          %v768 = vadd.f32 %v748, %v764
          %s769 = sld [smem:[#allocation5 + $0xf]]
          %s770 = sld [smem:[#allocation5 + $0x40]]
          %v771 = vstv %s769
          %v772 = vmul.f32 %v771, %v472
          %v773 = vmul.f32 %v771, %v473
          %v774 = vmul.f32 %v771, %v474
          %v778 = vrot.slane %v772, 2
          %v779 = vrot.slane %v773, 2
          %v780 = vsel %vm534, %v778, %v779
          %v781 = vrot.slane %v774, 2
          %v782 = vsel %vm534, %v779, %v781
          %783 = vrot.lane.b32.xlu0 %v780, 127
          %v784 = vpop.permute.xlu0 %783
          %785 = vrot.lane.b32.xlu0 %v782, 127
          %v786 = vpop.permute.xlu0 %785
          %v789 = vadd.f32 %v767, %v784
          %v790 = vadd.f32 %v768, %v786
          %v791 = vstv %s770
          %v792 = vmul.f32 %v791, %v475
          %v793 = vmul.f32 %v791, %v476
          %v794 = vmul.f32 %v791, %v477
          %v798 = vrot.slane %v792, 2
          %v799 = vrot.slane %v793, 2
          %v800 = vsel %vm534, %v798, %v799
          %v801 = vrot.slane %v794, 2
          %v802 = vsel %vm534, %v799, %v801
          %803 = vrot.lane.b32.xlu0 %v800, 127
          %v804 = vpop.permute.xlu0 %803
          %805 = vrot.lane.b32.xlu0 %v802, 127
          %v806 = vpop.permute.xlu0 %805
          %v809 = vadd.f32 %v789, %v804
          %v810 = vadd.f32 %v790, %v806
          %s811 = sld [smem:[#allocation5 + $0x16]]
          %s812 = sld [smem:[#allocation5 + $0x47]]
          %v813 = vstv %s811
          %v814 = vmul.f32 %v813, %v472
          %v815 = vmul.f32 %v813, %v473
          %v816 = vmul.f32 %v813, %v474
          %v820 = vrot.slane %v814, 3
          %v821 = vrot.slane %v815, 3
          %v822 = vsel %vm569, %v820, %v821
          %v823 = vrot.slane %v816, 3
          %v824 = vsel %vm569, %v821, %v823
          %825 = vrot.lane.b32.xlu0 %v822, 127
          %v826 = vpop.permute.xlu0 %825
          %827 = vrot.lane.b32.xlu0 %v824, 127
          %v828 = vpop.permute.xlu0 %827
          %v831 = vadd.f32 %v809, %v826
          %v832 = vadd.f32 %v810, %v828
          %v833 = vstv %s812
          %v834 = vmul.f32 %v833, %v475
          %v835 = vmul.f32 %v833, %v476
          %v836 = vmul.f32 %v833, %v477
          %v840 = vrot.slane %v834, 3
          %v841 = vrot.slane %v835, 3
          %v842 = vsel %vm569, %v840, %v841
          %v843 = vrot.slane %v836, 3
          %v844 = vsel %vm569, %v841, %v843
          %845 = vrot.lane.b32.xlu0 %v842, 127
          %v846 = vpop.permute.xlu0 %845
          %847 = vrot.lane.b32.xlu0 %v844, 127
          %v848 = vpop.permute.xlu0 %847
          %v851 = vadd.f32 %v831, %v846
          %v852 = vadd.f32 %v832, %v848
          %s853 = sld [smem:[#allocation5 + $0x1d]]
          %s854 = sld [smem:[#allocation5 + $0x4e]]
          %v855 = vstv %s853
          %v856 = vmul.f32 %v855, %v472
          %v857 = vmul.f32 %v855, %v473
          %v858 = vmul.f32 %v855, %v474
          %v862 = vrot.slane %v856, 4
          %v863 = vrot.slane %v857, 4
          %v864 = vsel %vm199, %v862, %v863
          %v865 = vrot.slane %v858, 4
          %v866 = vsel %vm199, %v863, %v865
          %867 = vrot.lane.b32.xlu0 %v864, 127
          %v868 = vpop.permute.xlu0 %867
          %869 = vrot.lane.b32.xlu0 %v866, 127
          %v870 = vpop.permute.xlu0 %869
          %v873 = vadd.f32 %v851, %v868
          %v874 = vadd.f32 %v852, %v870
          %v875 = vstv %s854
          %v876 = vmul.f32 %v875, %v475
          %v877 = vmul.f32 %v875, %v476
          %v878 = vmul.f32 %v875, %v477
          %v882 = vrot.slane %v876, 4
          %v883 = vrot.slane %v877, 4
          %v884 = vsel %vm199, %v882, %v883
          %v885 = vrot.slane %v878, 4
          %v886 = vsel %vm199, %v883, %v885
          %887 = vrot.lane.b32.xlu0 %v884, 127
          %v888 = vpop.permute.xlu0 %887
          %889 = vrot.lane.b32.xlu0 %v886, 127
          %v890 = vpop.permute.xlu0 %889
          %v893 = vadd.f32 %v873, %v888
          %v894 = vadd.f32 %v874, %v890
          %s895 = sld [smem:[#allocation5 + $0x24]]
          %s896 = sld [smem:[#allocation5 + $0x55]]
          %v897 = vstv %s895
          %v898 = vmul.f32 %v897, %v472
          %v899 = vmul.f32 %v897, %v473
          %v900 = vmul.f32 %v897, %v474
          %v904 = vrot.slane %v898, 5
          %v905 = vrot.slane %v899, 5
          %v906 = vsel %vm638, %v904, %v905
          %v907 = vrot.slane %v900, 5
          %v908 = vsel %vm638, %v905, %v907
          %909 = vrot.lane.b32.xlu0 %v906, 127
          %v910 = vpop.permute.xlu0 %909
          %911 = vrot.lane.b32.xlu0 %v908, 127
          %v912 = vpop.permute.xlu0 %911
          %v915 = vadd.f32 %v893, %v910
          %v916 = vadd.f32 %v894, %v912
          %v917 = vstv %s896
          %v918 = vmul.f32 %v917, %v475
          %v919 = vmul.f32 %v917, %v476
          %v920 = vmul.f32 %v917, %v477
          %v924 = vrot.slane %v918, 5
          %v925 = vrot.slane %v919, 5
          %v926 = vsel %vm638, %v924, %v925
          %v927 = vrot.slane %v920, 5
          %v928 = vsel %vm638, %v925, %v927
          %929 = vrot.lane.b32.xlu0 %v926, 127
          %v930 = vpop.permute.xlu0 %929
          %931 = vrot.lane.b32.xlu0 %v928, 127
          %v932 = vpop.permute.xlu0 %931
          %v935 = vadd.f32 %v915, %v930
          %v936 = vadd.f32 %v916, %v932
          %s937 = sld [smem:[#allocation5 + $0x2b]]
          %s938 = sld [smem:[#allocation5 + $0x5c]]
          %v939 = vstv %s937
          %v940 = vmul.f32 %v939, %v472
          %v941 = vmul.f32 %v939, %v473
          %v942 = vmul.f32 %v939, %v474
          %v946 = vrot.slane %v940, 6
          %v947 = vrot.slane %v941, 6
          %v948 = vsel %vm673, %v946, %v947
          %v949 = vrot.slane %v942, 6
          %v950 = vsel %vm673, %v947, %v949
          %951 = vrot.lane.b32.xlu0 %v948, 127
          %v952 = vpop.permute.xlu0 %951
          %953 = vrot.lane.b32.xlu0 %v950, 127
          %v954 = vpop.permute.xlu0 %953
          %v957 = vadd.f32 %v935, %v952
          %v958 = vadd.f32 %v936, %v954
          %v959 = vstv %s938
          %v960 = vmul.f32 %v959, %v475
          %v961 = vmul.f32 %v959, %v476
          %v962 = vmul.f32 %v959, %v477
          %v966 = vrot.slane %v960, 6
          %v967 = vrot.slane %v961, 6
          %v968 = vsel %vm673, %v966, %v967
          %v969 = vrot.slane %v962, 6
          %v970 = vsel %vm673, %v967, %v969
          %971 = vrot.lane.b32.xlu0 %v968, 127
          %v972 = vpop.permute.xlu0 %971
          %973 = vrot.lane.b32.xlu0 %v970, 127
          %v974 = vpop.permute.xlu0 %973
          %v977 = vadd.f32 %v957, %v972
          %v978 = vadd.f32 %v958, %v974
          %s979 = sld [smem:[#allocation5 + $0x2]]
          %s980 = sld [smem:[#allocation5 + $0x33]]
          %v981 = vstv %s979
          %v982 = vmul.f32 %v981, %v472
          %v983 = vmul.f32 %v981, %v473
          %986 = vrot.lane.b32.xlu0 %v982, 126
          %v987 = vpop.permute.xlu0 %986
          %988 = vrot.lane.b32.xlu0 %v983, 126
          %v989 = vpop.permute.xlu0 %988
          %v992 = vadd.f32 %v977, %v987
          %v993 = vadd.f32 %v978, %v989
          %v994 = vstv %s980
          %v995 = vmul.f32 %v994, %v475
          %v996 = vmul.f32 %v994, %v476
          %999 = vrot.lane.b32.xlu0 %v995, 126
          %v1000 = vpop.permute.xlu0 %999
          %1001 = vrot.lane.b32.xlu0 %v996, 126
          %v1002 = vpop.permute.xlu0 %1001
          %v1005 = vadd.f32 %v992, %v1000
          %v1006 = vadd.f32 %v993, %v1002
          %s1007 = sld [smem:[#allocation5 + $0x9]]
          %s1008 = sld [smem:[#allocation5 + $0x3a]]
          %v1009 = vstv %s1007
          %v1010 = vmul.f32 %v1009, %v472
          %v1011 = vmul.f32 %v1009, %v473
          %v1012 = vmul.f32 %v1009, %v474
          %v1016 = vrot.slane %v1010, 1
          %v1017 = vrot.slane %v1011, 1
          %v1018 = vsel %vm499, %v1016, %v1017
          %v1019 = vrot.slane %v1012, 1
          %v1020 = vsel %vm499, %v1017, %v1019
          %1021 = vrot.lane.b32.xlu0 %v1018, 126
          %v1022 = vpop.permute.xlu0 %1021
          %1023 = vrot.lane.b32.xlu0 %v1020, 126
          %v1024 = vpop.permute.xlu0 %1023
          %v1027 = vadd.f32 %v1005, %v1022
          %v1028 = vadd.f32 %v1006, %v1024
          %v1029 = vstv %s1008
          %v1030 = vmul.f32 %v1029, %v475
          %v1031 = vmul.f32 %v1029, %v476
          %v1032 = vmul.f32 %v1029, %v477
          %v1036 = vrot.slane %v1030, 1
          %v1037 = vrot.slane %v1031, 1
          %v1038 = vsel %vm499, %v1036, %v1037
          %v1039 = vrot.slane %v1032, 1
          %v1040 = vsel %vm499, %v1037, %v1039
          %1041 = vrot.lane.b32.xlu0 %v1038, 126
          %v1042 = vpop.permute.xlu0 %1041
          %1043 = vrot.lane.b32.xlu0 %v1040, 126
          %v1044 = vpop.permute.xlu0 %1043
          %v1047 = vadd.f32 %v1027, %v1042
          %v1048 = vadd.f32 %v1028, %v1044
          %s1049 = sld [smem:[#allocation5 + $0x10]]
          %s1050 = sld [smem:[#allocation5 + $0x41]]
          %v1051 = vstv %s1049
          %v1052 = vmul.f32 %v1051, %v472
          %v1053 = vmul.f32 %v1051, %v473
          %v1054 = vmul.f32 %v1051, %v474
          %v1058 = vrot.slane %v1052, 2
          %v1059 = vrot.slane %v1053, 2
          %v1060 = vsel %vm534, %v1058, %v1059
          %v1061 = vrot.slane %v1054, 2
          %v1062 = vsel %vm534, %v1059, %v1061
          %1063 = vrot.lane.b32.xlu0 %v1060, 126
          %v1064 = vpop.permute.xlu0 %1063
          %1065 = vrot.lane.b32.xlu0 %v1062, 126
          %v1066 = vpop.permute.xlu0 %1065
          %v1069 = vadd.f32 %v1047, %v1064
          %v1070 = vadd.f32 %v1048, %v1066
          %v1071 = vstv %s1050
          %v1072 = vmul.f32 %v1071, %v475
          %v1073 = vmul.f32 %v1071, %v476
          %v1074 = vmul.f32 %v1071, %v477
          %v1078 = vrot.slane %v1072, 2
          %v1079 = vrot.slane %v1073, 2
          %v1080 = vsel %vm534, %v1078, %v1079
          %v1081 = vrot.slane %v1074, 2
          %v1082 = vsel %vm534, %v1079, %v1081
          %1083 = vrot.lane.b32.xlu0 %v1080, 126
          %v1084 = vpop.permute.xlu0 %1083
          %1085 = vrot.lane.b32.xlu0 %v1082, 126
          %v1086 = vpop.permute.xlu0 %1085
          %v1089 = vadd.f32 %v1069, %v1084
          %v1090 = vadd.f32 %v1070, %v1086
          %s1091 = sld [smem:[#allocation5 + $0x17]]
          %s1092 = sld [smem:[#allocation5 + $0x48]]
          %v1093 = vstv %s1091
          %v1094 = vmul.f32 %v1093, %v472
          %v1095 = vmul.f32 %v1093, %v473
          %v1096 = vmul.f32 %v1093, %v474
          %v1100 = vrot.slane %v1094, 3
          %v1101 = vrot.slane %v1095, 3
          %v1102 = vsel %vm569, %v1100, %v1101
          %v1103 = vrot.slane %v1096, 3
          %v1104 = vsel %vm569, %v1101, %v1103
          %1105 = vrot.lane.b32.xlu0 %v1102, 126
          %v1106 = vpop.permute.xlu0 %1105
          %1107 = vrot.lane.b32.xlu0 %v1104, 126
          %v1108 = vpop.permute.xlu0 %1107
          %v1111 = vadd.f32 %v1089, %v1106
          %v1112 = vadd.f32 %v1090, %v1108
          %v1113 = vstv %s1092
          %v1114 = vmul.f32 %v1113, %v475
          %v1115 = vmul.f32 %v1113, %v476
          %v1116 = vmul.f32 %v1113, %v477
          %v1120 = vrot.slane %v1114, 3
          %v1121 = vrot.slane %v1115, 3
          %v1122 = vsel %vm569, %v1120, %v1121
          %v1123 = vrot.slane %v1116, 3
          %v1124 = vsel %vm569, %v1121, %v1123
          %1125 = vrot.lane.b32.xlu0 %v1122, 126
          %v1126 = vpop.permute.xlu0 %1125
          %1127 = vrot.lane.b32.xlu0 %v1124, 126
          %v1128 = vpop.permute.xlu0 %1127
          %v1131 = vadd.f32 %v1111, %v1126
          %v1132 = vadd.f32 %v1112, %v1128
          %s1133 = sld [smem:[#allocation5 + $0x1e]]
          %s1134 = sld [smem:[#allocation5 + $0x4f]]
          %v1135 = vstv %s1133
          %v1136 = vmul.f32 %v1135, %v472
          %v1137 = vmul.f32 %v1135, %v473
          %v1138 = vmul.f32 %v1135, %v474
          %v1142 = vrot.slane %v1136, 4
          %v1143 = vrot.slane %v1137, 4
          %v1144 = vsel %vm199, %v1142, %v1143
          %v1145 = vrot.slane %v1138, 4
          %v1146 = vsel %vm199, %v1143, %v1145
          %1147 = vrot.lane.b32.xlu0 %v1144, 126
          %v1148 = vpop.permute.xlu0 %1147
          %1149 = vrot.lane.b32.xlu0 %v1146, 126
          %v1150 = vpop.permute.xlu0 %1149
          %v1153 = vadd.f32 %v1131, %v1148
          %v1154 = vadd.f32 %v1132, %v1150
          %v1155 = vstv %s1134
          %v1156 = vmul.f32 %v1155, %v475
          %v1157 = vmul.f32 %v1155, %v476
          %v1158 = vmul.f32 %v1155, %v477
          %v1162 = vrot.slane %v1156, 4
          %v1163 = vrot.slane %v1157, 4
          %v1164 = vsel %vm199, %v1162, %v1163
          %v1165 = vrot.slane %v1158, 4
          %v1166 = vsel %vm199, %v1163, %v1165
          %1167 = vrot.lane.b32.xlu0 %v1164, 126
          %v1168 = vpop.permute.xlu0 %1167
          %1169 = vrot.lane.b32.xlu0 %v1166, 126
          %v1170 = vpop.permute.xlu0 %1169
          %v1173 = vadd.f32 %v1153, %v1168
          %v1174 = vadd.f32 %v1154, %v1170
          %s1175 = sld [smem:[#allocation5 + $0x25]]
          %s1176 = sld [smem:[#allocation5 + $0x56]]
          %v1177 = vstv %s1175
          %v1178 = vmul.f32 %v1177, %v472
          %v1179 = vmul.f32 %v1177, %v473
          %v1180 = vmul.f32 %v1177, %v474
          %v1184 = vrot.slane %v1178, 5
          %v1185 = vrot.slane %v1179, 5
          %v1186 = vsel %vm638, %v1184, %v1185
          %v1187 = vrot.slane %v1180, 5
          %v1188 = vsel %vm638, %v1185, %v1187
          %1189 = vrot.lane.b32.xlu0 %v1186, 126
          %v1190 = vpop.permute.xlu0 %1189
          %1191 = vrot.lane.b32.xlu0 %v1188, 126
          %v1192 = vpop.permute.xlu0 %1191
          %v1195 = vadd.f32 %v1173, %v1190
          %v1196 = vadd.f32 %v1174, %v1192
          %v1197 = vstv %s1176
          %v1198 = vmul.f32 %v1197, %v475
          %v1199 = vmul.f32 %v1197, %v476
          %v1200 = vmul.f32 %v1197, %v477
          %v1204 = vrot.slane %v1198, 5
          %v1205 = vrot.slane %v1199, 5
          %v1206 = vsel %vm638, %v1204, %v1205
          %v1207 = vrot.slane %v1200, 5
          %v1208 = vsel %vm638, %v1205, %v1207
          %1209 = vrot.lane.b32.xlu0 %v1206, 126
          %v1210 = vpop.permute.xlu0 %1209
          %1211 = vrot.lane.b32.xlu0 %v1208, 126
          %v1212 = vpop.permute.xlu0 %1211
          %v1215 = vadd.f32 %v1195, %v1210
          %v1216 = vadd.f32 %v1196, %v1212
          %s1217 = sld [smem:[#allocation5 + $0x2c]]
          %s1218 = sld [smem:[#allocation5 + $0x5d]]
          %v1219 = vstv %s1217
          %v1220 = vmul.f32 %v1219, %v472
          %v1221 = vmul.f32 %v1219, %v473
          %v1222 = vmul.f32 %v1219, %v474
          %v1226 = vrot.slane %v1220, 6
          %v1227 = vrot.slane %v1221, 6
          %v1228 = vsel %vm673, %v1226, %v1227
          %v1229 = vrot.slane %v1222, 6
          %v1230 = vsel %vm673, %v1227, %v1229
          %1231 = vrot.lane.b32.xlu0 %v1228, 126
          %v1232 = vpop.permute.xlu0 %1231
          %1233 = vrot.lane.b32.xlu0 %v1230, 126
          %v1234 = vpop.permute.xlu0 %1233
          %v1237 = vadd.f32 %v1215, %v1232
          %v1238 = vadd.f32 %v1216, %v1234
          %v1239 = vstv %s1218
          %v1240 = vmul.f32 %v1239, %v475
          %v1241 = vmul.f32 %v1239, %v476
          %v1242 = vmul.f32 %v1239, %v477
          %v1246 = vrot.slane %v1240, 6
          %v1247 = vrot.slane %v1241, 6
          %v1248 = vsel %vm673, %v1246, %v1247
          %v1249 = vrot.slane %v1242, 6
          %v1250 = vsel %vm673, %v1247, %v1249
          %1251 = vrot.lane.b32.xlu0 %v1248, 126
          %v1252 = vpop.permute.xlu0 %1251
          %1253 = vrot.lane.b32.xlu0 %v1250, 126
          %v1254 = vpop.permute.xlu0 %1253
          %v1257 = vadd.f32 %v1237, %v1252
          %v1258 = vadd.f32 %v1238, %v1254
          %s1259 = sld [smem:[#allocation5 + $0x3]]
          %s1260 = sld [smem:[#allocation5 + $0x34]]
          %v1261 = vstv %s1259
          %v1262 = vmul.f32 %v1261, %v472
          %v1263 = vmul.f32 %v1261, %v473
          %1266 = vrot.lane.b32.xlu0 %v1262, 125
          %v1267 = vpop.permute.xlu0 %1266
          %1268 = vrot.lane.b32.xlu0 %v1263, 125
          %v1269 = vpop.permute.xlu0 %1268
          %v1272 = vadd.f32 %v1257, %v1267
          %v1273 = vadd.f32 %v1258, %v1269
          %v1274 = vstv %s1260
          %v1275 = vmul.f32 %v1274, %v475
          %v1276 = vmul.f32 %v1274, %v476
          %1279 = vrot.lane.b32.xlu0 %v1275, 125
          %v1280 = vpop.permute.xlu0 %1279
          %1281 = vrot.lane.b32.xlu0 %v1276, 125
          %v1282 = vpop.permute.xlu0 %1281
          %v1285 = vadd.f32 %v1272, %v1280
          %v1286 = vadd.f32 %v1273, %v1282
          %s1287 = sld [smem:[#allocation5 + $0xa]]
          %s1288 = sld [smem:[#allocation5 + $0x3b]]
          %v1289 = vstv %s1287
          %v1290 = vmul.f32 %v1289, %v472
          %v1291 = vmul.f32 %v1289, %v473
          %v1292 = vmul.f32 %v1289, %v474
          %v1296 = vrot.slane %v1290, 1
          %v1297 = vrot.slane %v1291, 1
          %v1298 = vsel %vm499, %v1296, %v1297
          %v1299 = vrot.slane %v1292, 1
          %v1300 = vsel %vm499, %v1297, %v1299
          %1301 = vrot.lane.b32.xlu0 %v1298, 125
          %v1302 = vpop.permute.xlu0 %1301
          %1303 = vrot.lane.b32.xlu0 %v1300, 125
          %v1304 = vpop.permute.xlu0 %1303
          %v1307 = vadd.f32 %v1285, %v1302
          %v1308 = vadd.f32 %v1286, %v1304
          %v1309 = vstv %s1288
          %v1310 = vmul.f32 %v1309, %v475
          %v1311 = vmul.f32 %v1309, %v476
          %v1312 = vmul.f32 %v1309, %v477
          %v1316 = vrot.slane %v1310, 1
          %v1317 = vrot.slane %v1311, 1
          %v1318 = vsel %vm499, %v1316, %v1317
          %v1319 = vrot.slane %v1312, 1
          %v1320 = vsel %vm499, %v1317, %v1319
          %1321 = vrot.lane.b32.xlu0 %v1318, 125
          %v1322 = vpop.permute.xlu0 %1321
          %1323 = vrot.lane.b32.xlu0 %v1320, 125
          %v1324 = vpop.permute.xlu0 %1323
          %v1327 = vadd.f32 %v1307, %v1322
          %v1328 = vadd.f32 %v1308, %v1324
          %s1329 = sld [smem:[#allocation5 + $0x11]]
          %s1330 = sld [smem:[#allocation5 + $0x42]]
          %v1331 = vstv %s1329
          %v1332 = vmul.f32 %v1331, %v472
          %v1333 = vmul.f32 %v1331, %v473
          %v1334 = vmul.f32 %v1331, %v474
          %v1338 = vrot.slane %v1332, 2
          %v1339 = vrot.slane %v1333, 2
          %v1340 = vsel %vm534, %v1338, %v1339
          %v1341 = vrot.slane %v1334, 2
          %v1342 = vsel %vm534, %v1339, %v1341
          %1343 = vrot.lane.b32.xlu0 %v1340, 125
          %v1344 = vpop.permute.xlu0 %1343
          %1345 = vrot.lane.b32.xlu0 %v1342, 125
          %v1346 = vpop.permute.xlu0 %1345
          %v1349 = vadd.f32 %v1327, %v1344
          %v1350 = vadd.f32 %v1328, %v1346
          %v1351 = vstv %s1330
          %v1352 = vmul.f32 %v1351, %v475
          %v1353 = vmul.f32 %v1351, %v476
          %v1354 = vmul.f32 %v1351, %v477
          %v1358 = vrot.slane %v1352, 2
          %v1359 = vrot.slane %v1353, 2
          %v1360 = vsel %vm534, %v1358, %v1359
          %v1361 = vrot.slane %v1354, 2
          %v1362 = vsel %vm534, %v1359, %v1361
          %1363 = vrot.lane.b32.xlu0 %v1360, 125
          %v1364 = vpop.permute.xlu0 %1363
          %1365 = vrot.lane.b32.xlu0 %v1362, 125
          %v1366 = vpop.permute.xlu0 %1365
          %v1369 = vadd.f32 %v1349, %v1364
          %v1370 = vadd.f32 %v1350, %v1366
          %s1371 = sld [smem:[#allocation5 + $0x18]]
          %s1372 = sld [smem:[#allocation5 + $0x49]]
          %v1373 = vstv %s1371
          %v1374 = vmul.f32 %v1373, %v472
          %v1375 = vmul.f32 %v1373, %v473
          %v1376 = vmul.f32 %v1373, %v474
          %v1380 = vrot.slane %v1374, 3
          %v1381 = vrot.slane %v1375, 3
          %v1382 = vsel %vm569, %v1380, %v1381
          %v1383 = vrot.slane %v1376, 3
          %v1384 = vsel %vm569, %v1381, %v1383
          %1385 = vrot.lane.b32.xlu0 %v1382, 125
          %v1386 = vpop.permute.xlu0 %1385
          %1387 = vrot.lane.b32.xlu0 %v1384, 125
          %v1388 = vpop.permute.xlu0 %1387
          %v1391 = vadd.f32 %v1369, %v1386
          %v1392 = vadd.f32 %v1370, %v1388
          %v1393 = vstv %s1372
          %v1394 = vmul.f32 %v1393, %v475
          %v1395 = vmul.f32 %v1393, %v476
          %v1396 = vmul.f32 %v1393, %v477
          %v1400 = vrot.slane %v1394, 3
          %v1401 = vrot.slane %v1395, 3
          %v1402 = vsel %vm569, %v1400, %v1401
          %v1403 = vrot.slane %v1396, 3
          %v1404 = vsel %vm569, %v1401, %v1403
          %1405 = vrot.lane.b32.xlu0 %v1402, 125
          %v1406 = vpop.permute.xlu0 %1405
          %1407 = vrot.lane.b32.xlu0 %v1404, 125
          %v1408 = vpop.permute.xlu0 %1407
          %v1411 = vadd.f32 %v1391, %v1406
          %v1412 = vadd.f32 %v1392, %v1408
          %s1413 = sld [smem:[#allocation5 + $0x1f]]
          %s1414 = sld [smem:[#allocation5 + $0x50]]
          %v1415 = vstv %s1413
          %v1416 = vmul.f32 %v1415, %v472
          %v1417 = vmul.f32 %v1415, %v473
          %v1418 = vmul.f32 %v1415, %v474
          %v1422 = vrot.slane %v1416, 4
          %v1423 = vrot.slane %v1417, 4
          %v1424 = vsel %vm199, %v1422, %v1423
          %v1425 = vrot.slane %v1418, 4
          %v1426 = vsel %vm199, %v1423, %v1425
          %1427 = vrot.lane.b32.xlu0 %v1424, 125
          %v1428 = vpop.permute.xlu0 %1427
          %1429 = vrot.lane.b32.xlu0 %v1426, 125
          %v1430 = vpop.permute.xlu0 %1429
          %v1433 = vadd.f32 %v1411, %v1428
          %v1434 = vadd.f32 %v1412, %v1430
          %v1435 = vstv %s1414
          %v1436 = vmul.f32 %v1435, %v475
          %v1437 = vmul.f32 %v1435, %v476
          %v1438 = vmul.f32 %v1435, %v477
          %v1442 = vrot.slane %v1436, 4
          %v1443 = vrot.slane %v1437, 4
          %v1444 = vsel %vm199, %v1442, %v1443
          %v1445 = vrot.slane %v1438, 4
          %v1446 = vsel %vm199, %v1443, %v1445
          %1447 = vrot.lane.b32.xlu0 %v1444, 125
          %v1448 = vpop.permute.xlu0 %1447
          %1449 = vrot.lane.b32.xlu0 %v1446, 125
          %v1450 = vpop.permute.xlu0 %1449
          %v1453 = vadd.f32 %v1433, %v1448
          %v1454 = vadd.f32 %v1434, %v1450
          %s1455 = sld [smem:[#allocation5 + $0x26]]
          %s1456 = sld [smem:[#allocation5 + $0x57]]
          %v1457 = vstv %s1455
          %v1458 = vmul.f32 %v1457, %v472
          %v1459 = vmul.f32 %v1457, %v473
          %v1460 = vmul.f32 %v1457, %v474
          %v1464 = vrot.slane %v1458, 5
          %v1465 = vrot.slane %v1459, 5
          %v1466 = vsel %vm638, %v1464, %v1465
          %v1467 = vrot.slane %v1460, 5
          %v1468 = vsel %vm638, %v1465, %v1467
          %1469 = vrot.lane.b32.xlu0 %v1466, 125
          %v1470 = vpop.permute.xlu0 %1469
          %1471 = vrot.lane.b32.xlu0 %v1468, 125
          %v1472 = vpop.permute.xlu0 %1471
          %v1475 = vadd.f32 %v1453, %v1470
          %v1476 = vadd.f32 %v1454, %v1472
          %v1477 = vstv %s1456
          %v1478 = vmul.f32 %v1477, %v475
          %v1479 = vmul.f32 %v1477, %v476
          %v1480 = vmul.f32 %v1477, %v477
          %v1484 = vrot.slane %v1478, 5
          %v1485 = vrot.slane %v1479, 5
          %v1486 = vsel %vm638, %v1484, %v1485
          %v1487 = vrot.slane %v1480, 5
          %v1488 = vsel %vm638, %v1485, %v1487
          %1489 = vrot.lane.b32.xlu0 %v1486, 125
          %v1490 = vpop.permute.xlu0 %1489
          %1491 = vrot.lane.b32.xlu0 %v1488, 125
          %v1492 = vpop.permute.xlu0 %1491
          %v1495 = vadd.f32 %v1475, %v1490
          %v1496 = vadd.f32 %v1476, %v1492
          %s1497 = sld [smem:[#allocation5 + $0x2d]]
          %s1498 = sld [smem:[#allocation5 + $0x5e]]
          %v1499 = vstv %s1497
          %v1500 = vmul.f32 %v1499, %v472
          %v1501 = vmul.f32 %v1499, %v473
          %v1502 = vmul.f32 %v1499, %v474
          %v1506 = vrot.slane %v1500, 6
          %v1507 = vrot.slane %v1501, 6
          %v1508 = vsel %vm673, %v1506, %v1507
          %v1509 = vrot.slane %v1502, 6
          %v1510 = vsel %vm673, %v1507, %v1509
          %1511 = vrot.lane.b32.xlu0 %v1508, 125
          %v1512 = vpop.permute.xlu0 %1511
          %1513 = vrot.lane.b32.xlu0 %v1510, 125
          %v1514 = vpop.permute.xlu0 %1513
          %v1517 = vadd.f32 %v1495, %v1512
          %v1518 = vadd.f32 %v1496, %v1514
          %v1519 = vstv %s1498
          %v1520 = vmul.f32 %v1519, %v475
          %v1521 = vmul.f32 %v1519, %v476
          %v1522 = vmul.f32 %v1519, %v477
          %v1526 = vrot.slane %v1520, 6
          %v1527 = vrot.slane %v1521, 6
          %v1528 = vsel %vm673, %v1526, %v1527
          %v1529 = vrot.slane %v1522, 6
          %v1530 = vsel %vm673, %v1527, %v1529
          %1531 = vrot.lane.b32.xlu0 %v1528, 125
          %v1532 = vpop.permute.xlu0 %1531
          %1533 = vrot.lane.b32.xlu0 %v1530, 125
          %v1534 = vpop.permute.xlu0 %1533
          %v1537 = vadd.f32 %v1517, %v1532
          %v1538 = vadd.f32 %v1518, %v1534
          %s1539 = sld [smem:[#allocation5 + $0x4]]
          %s1540 = sld [smem:[#allocation5 + $0x35]]
          %v1541 = vstv %s1539
          %v1542 = vmul.f32 %v1541, %v472
          %v1543 = vmul.f32 %v1541, %v473
          %1546 = vrot.lane.b32.xlu0 %v1542, 124
          %v1547 = vpop.permute.xlu0 %1546
          %1548 = vrot.lane.b32.xlu0 %v1543, 124
          %v1549 = vpop.permute.xlu0 %1548
          %v1552 = vadd.f32 %v1537, %v1547
          %v1553 = vadd.f32 %v1538, %v1549
          %v1554 = vstv %s1540
          %v1555 = vmul.f32 %v1554, %v475
          %v1556 = vmul.f32 %v1554, %v476
          %1559 = vrot.lane.b32.xlu0 %v1555, 124
          %v1560 = vpop.permute.xlu0 %1559
          %1561 = vrot.lane.b32.xlu0 %v1556, 124
          %v1562 = vpop.permute.xlu0 %1561
          %v1565 = vadd.f32 %v1552, %v1560
          %v1566 = vadd.f32 %v1553, %v1562
          %s1567 = sld [smem:[#allocation5 + $0xb]]
          %s1568 = sld [smem:[#allocation5 + $0x3c]]
          %v1569 = vstv %s1567
          %v1570 = vmul.f32 %v1569, %v472
          %v1571 = vmul.f32 %v1569, %v473
          %v1572 = vmul.f32 %v1569, %v474
          %v1576 = vrot.slane %v1570, 1
          %v1577 = vrot.slane %v1571, 1
          %v1578 = vsel %vm499, %v1576, %v1577
          %v1579 = vrot.slane %v1572, 1
          %v1580 = vsel %vm499, %v1577, %v1579
          %1581 = vrot.lane.b32.xlu0 %v1578, 124
          %v1582 = vpop.permute.xlu0 %1581
          %1583 = vrot.lane.b32.xlu0 %v1580, 124
          %v1584 = vpop.permute.xlu0 %1583
          %v1587 = vadd.f32 %v1565, %v1582
          %v1588 = vadd.f32 %v1566, %v1584
          %v1589 = vstv %s1568
          %v1590 = vmul.f32 %v1589, %v475
          %v1591 = vmul.f32 %v1589, %v476
          %v1592 = vmul.f32 %v1589, %v477
          %v1596 = vrot.slane %v1590, 1
          %v1597 = vrot.slane %v1591, 1
          %v1598 = vsel %vm499, %v1596, %v1597
          %v1599 = vrot.slane %v1592, 1
          %v1600 = vsel %vm499, %v1597, %v1599
          %1601 = vrot.lane.b32.xlu0 %v1598, 124
          %v1602 = vpop.permute.xlu0 %1601
          %1603 = vrot.lane.b32.xlu0 %v1600, 124
          %v1604 = vpop.permute.xlu0 %1603
          %v1607 = vadd.f32 %v1587, %v1602
          %v1608 = vadd.f32 %v1588, %v1604
          %s1609 = sld [smem:[#allocation5 + $0x12]]
          %s1610 = sld [smem:[#allocation5 + $0x43]]
          %v1611 = vstv %s1609
          %v1612 = vmul.f32 %v1611, %v472
          %v1613 = vmul.f32 %v1611, %v473
          %v1614 = vmul.f32 %v1611, %v474
          %v1618 = vrot.slane %v1612, 2
          %v1619 = vrot.slane %v1613, 2
          %v1620 = vsel %vm534, %v1618, %v1619
          %v1621 = vrot.slane %v1614, 2
          %v1622 = vsel %vm534, %v1619, %v1621
          %1623 = vrot.lane.b32.xlu0 %v1620, 124
          %v1624 = vpop.permute.xlu0 %1623
          %1625 = vrot.lane.b32.xlu0 %v1622, 124
          %v1626 = vpop.permute.xlu0 %1625
          %v1629 = vadd.f32 %v1607, %v1624
          %v1630 = vadd.f32 %v1608, %v1626
          %v1631 = vstv %s1610
          %v1632 = vmul.f32 %v1631, %v475
          %v1633 = vmul.f32 %v1631, %v476
          %v1634 = vmul.f32 %v1631, %v477
          %v1638 = vrot.slane %v1632, 2
          %v1639 = vrot.slane %v1633, 2
          %v1640 = vsel %vm534, %v1638, %v1639
          %v1641 = vrot.slane %v1634, 2
          %v1642 = vsel %vm534, %v1639, %v1641
          %1643 = vrot.lane.b32.xlu0 %v1640, 124
          %v1644 = vpop.permute.xlu0 %1643
          %1645 = vrot.lane.b32.xlu0 %v1642, 124
          %v1646 = vpop.permute.xlu0 %1645
          %v1649 = vadd.f32 %v1629, %v1644
          %v1650 = vadd.f32 %v1630, %v1646
          %s1651 = sld [smem:[#allocation5 + $0x19]]
          %s1652 = sld [smem:[#allocation5 + $0x4a]]
          %v1653 = vstv %s1651
          %v1654 = vmul.f32 %v1653, %v472
          %v1655 = vmul.f32 %v1653, %v473
          %v1656 = vmul.f32 %v1653, %v474
          %v1660 = vrot.slane %v1654, 3
          %v1661 = vrot.slane %v1655, 3
          %v1662 = vsel %vm569, %v1660, %v1661
          %v1663 = vrot.slane %v1656, 3
          %v1664 = vsel %vm569, %v1661, %v1663
          %1665 = vrot.lane.b32.xlu0 %v1662, 124
          %v1666 = vpop.permute.xlu0 %1665
          %1667 = vrot.lane.b32.xlu0 %v1664, 124
          %v1668 = vpop.permute.xlu0 %1667
          %v1671 = vadd.f32 %v1649, %v1666
          %v1672 = vadd.f32 %v1650, %v1668
          %v1673 = vstv %s1652
          %v1674 = vmul.f32 %v1673, %v475
          %v1675 = vmul.f32 %v1673, %v476
          %v1676 = vmul.f32 %v1673, %v477
          %v1680 = vrot.slane %v1674, 3
          %v1681 = vrot.slane %v1675, 3
          %v1682 = vsel %vm569, %v1680, %v1681
          %v1683 = vrot.slane %v1676, 3
          %v1684 = vsel %vm569, %v1681, %v1683
          %1685 = vrot.lane.b32.xlu0 %v1682, 124
          %v1686 = vpop.permute.xlu0 %1685
          %1687 = vrot.lane.b32.xlu0 %v1684, 124
          %v1688 = vpop.permute.xlu0 %1687
          %v1691 = vadd.f32 %v1671, %v1686
          %v1692 = vadd.f32 %v1672, %v1688
          %s1693 = sld [smem:[#allocation5 + $0x20]]
          %s1694 = sld [smem:[#allocation5 + $0x51]]
          %v1695 = vstv %s1693
          %v1696 = vmul.f32 %v1695, %v472
          %v1697 = vmul.f32 %v1695, %v473
          %v1698 = vmul.f32 %v1695, %v474
          %v1702 = vrot.slane %v1696, 4
          %v1703 = vrot.slane %v1697, 4
          %v1704 = vsel %vm199, %v1702, %v1703
          %v1705 = vrot.slane %v1698, 4
          %v1706 = vsel %vm199, %v1703, %v1705
          %1707 = vrot.lane.b32.xlu0 %v1704, 124
          %v1708 = vpop.permute.xlu0 %1707
          %1709 = vrot.lane.b32.xlu0 %v1706, 124
          %v1710 = vpop.permute.xlu0 %1709
          %v1713 = vadd.f32 %v1691, %v1708
          %v1714 = vadd.f32 %v1692, %v1710
          %v1715 = vstv %s1694
          %v1716 = vmul.f32 %v1715, %v475
          %v1717 = vmul.f32 %v1715, %v476
          %v1718 = vmul.f32 %v1715, %v477
          %v1722 = vrot.slane %v1716, 4
          %v1723 = vrot.slane %v1717, 4
          %v1724 = vsel %vm199, %v1722, %v1723
          %v1725 = vrot.slane %v1718, 4
          %v1726 = vsel %vm199, %v1723, %v1725
          %1727 = vrot.lane.b32.xlu0 %v1724, 124
          %v1728 = vpop.permute.xlu0 %1727
          %1729 = vrot.lane.b32.xlu0 %v1726, 124
          %v1730 = vpop.permute.xlu0 %1729
          %v1733 = vadd.f32 %v1713, %v1728
          %v1734 = vadd.f32 %v1714, %v1730
          %s1735 = sld [smem:[#allocation5 + $0x27]]
          %s1736 = sld [smem:[#allocation5 + $0x58]]
          %v1737 = vstv %s1735
          %v1738 = vmul.f32 %v1737, %v472
          %v1739 = vmul.f32 %v1737, %v473
          %v1740 = vmul.f32 %v1737, %v474
          %v1744 = vrot.slane %v1738, 5
          %v1745 = vrot.slane %v1739, 5
          %v1746 = vsel %vm638, %v1744, %v1745
          %v1747 = vrot.slane %v1740, 5
          %v1748 = vsel %vm638, %v1745, %v1747
          %1749 = vrot.lane.b32.xlu0 %v1746, 124
          %v1750 = vpop.permute.xlu0 %1749
          %1751 = vrot.lane.b32.xlu0 %v1748, 124
          %v1752 = vpop.permute.xlu0 %1751
          %v1755 = vadd.f32 %v1733, %v1750
          %v1756 = vadd.f32 %v1734, %v1752
          %v1757 = vstv %s1736
          %v1758 = vmul.f32 %v1757, %v475
          %v1759 = vmul.f32 %v1757, %v476
          %v1760 = vmul.f32 %v1757, %v477
          %v1764 = vrot.slane %v1758, 5
          %v1765 = vrot.slane %v1759, 5
          %v1766 = vsel %vm638, %v1764, %v1765
          %v1767 = vrot.slane %v1760, 5
          %v1768 = vsel %vm638, %v1765, %v1767
          %1769 = vrot.lane.b32.xlu0 %v1766, 124
          %v1770 = vpop.permute.xlu0 %1769
          %1771 = vrot.lane.b32.xlu0 %v1768, 124
          %v1772 = vpop.permute.xlu0 %1771
          %v1775 = vadd.f32 %v1755, %v1770
          %v1776 = vadd.f32 %v1756, %v1772
          %s1777 = sld [smem:[#allocation5 + $0x2e]]
          %s1778 = sld [smem:[#allocation5 + $0x5f]]
          %v1779 = vstv %s1777
          %v1780 = vmul.f32 %v1779, %v472
          %v1781 = vmul.f32 %v1779, %v473
          %v1782 = vmul.f32 %v1779, %v474
          %v1786 = vrot.slane %v1780, 6
          %v1787 = vrot.slane %v1781, 6
          %v1788 = vsel %vm673, %v1786, %v1787
          %v1789 = vrot.slane %v1782, 6
          %v1790 = vsel %vm673, %v1787, %v1789
          %1791 = vrot.lane.b32.xlu0 %v1788, 124
          %v1792 = vpop.permute.xlu0 %1791
          %1793 = vrot.lane.b32.xlu0 %v1790, 124
          %v1794 = vpop.permute.xlu0 %1793
          %v1797 = vadd.f32 %v1775, %v1792
          %v1798 = vadd.f32 %v1776, %v1794
          %v1799 = vstv %s1778
          %v1800 = vmul.f32 %v1799, %v475
          %v1801 = vmul.f32 %v1799, %v476
          %v1802 = vmul.f32 %v1799, %v477
          %v1806 = vrot.slane %v1800, 6
          %v1807 = vrot.slane %v1801, 6
          %v1808 = vsel %vm673, %v1806, %v1807
          %v1809 = vrot.slane %v1802, 6
          %v1810 = vsel %vm673, %v1807, %v1809
          %1811 = vrot.lane.b32.xlu0 %v1808, 124
          %v1812 = vpop.permute.xlu0 %1811
          %1813 = vrot.lane.b32.xlu0 %v1810, 124
          %v1814 = vpop.permute.xlu0 %1813
          %v1817 = vadd.f32 %v1797, %v1812
          %v1818 = vadd.f32 %v1798, %v1814
          %s1819 = sld [smem:[#allocation5 + $0x5]]
          %s1820 = sld [smem:[#allocation5 + $0x36]]
          %v1821 = vstv %s1819
          %v1822 = vmul.f32 %v1821, %v472
          %v1823 = vmul.f32 %v1821, %v473
          %1826 = vrot.lane.b32.xlu0 %v1822, 123
          %v1827 = vpop.permute.xlu0 %1826
          %1828 = vrot.lane.b32.xlu0 %v1823, 123
          %v1829 = vpop.permute.xlu0 %1828
          %v1832 = vadd.f32 %v1817, %v1827
          %v1833 = vadd.f32 %v1818, %v1829
          %v1834 = vstv %s1820
          %v1835 = vmul.f32 %v1834, %v475
          %v1836 = vmul.f32 %v1834, %v476
          %1839 = vrot.lane.b32.xlu0 %v1835, 123
          %v1840 = vpop.permute.xlu0 %1839
          %1841 = vrot.lane.b32.xlu0 %v1836, 123
          %v1842 = vpop.permute.xlu0 %1841
          %v1845 = vadd.f32 %v1832, %v1840
          %v1846 = vadd.f32 %v1833, %v1842
          %s1847 = sld [smem:[#allocation5 + $0xc]]
          %s1848 = sld [smem:[#allocation5 + $0x3d]]
          %v1849 = vstv %s1847
          %v1850 = vmul.f32 %v1849, %v472
          %v1851 = vmul.f32 %v1849, %v473
          %v1852 = vmul.f32 %v1849, %v474
          %v1856 = vrot.slane %v1850, 1
          %v1857 = vrot.slane %v1851, 1
          %v1858 = vsel %vm499, %v1856, %v1857
          %v1859 = vrot.slane %v1852, 1
          %v1860 = vsel %vm499, %v1857, %v1859
          %1861 = vrot.lane.b32.xlu0 %v1858, 123
          %v1862 = vpop.permute.xlu0 %1861
          %1863 = vrot.lane.b32.xlu0 %v1860, 123
          %v1864 = vpop.permute.xlu0 %1863
          %v1867 = vadd.f32 %v1845, %v1862
          %v1868 = vadd.f32 %v1846, %v1864
          %v1869 = vstv %s1848
          %v1870 = vmul.f32 %v1869, %v475
          %v1871 = vmul.f32 %v1869, %v476
          %v1872 = vmul.f32 %v1869, %v477
          %v1876 = vrot.slane %v1870, 1
          %v1877 = vrot.slane %v1871, 1
          %v1878 = vsel %vm499, %v1876, %v1877
          %v1879 = vrot.slane %v1872, 1
          %v1880 = vsel %vm499, %v1877, %v1879
          %1881 = vrot.lane.b32.xlu0 %v1878, 123
          %v1882 = vpop.permute.xlu0 %1881
          %1883 = vrot.lane.b32.xlu0 %v1880, 123
          %v1884 = vpop.permute.xlu0 %1883
          %v1887 = vadd.f32 %v1867, %v1882
          %v1888 = vadd.f32 %v1868, %v1884
          %s1889 = sld [smem:[#allocation5 + $0x13]]
          %s1890 = sld [smem:[#allocation5 + $0x44]]
          %v1891 = vstv %s1889
          %v1892 = vmul.f32 %v1891, %v472
          %v1893 = vmul.f32 %v1891, %v473
          %v1894 = vmul.f32 %v1891, %v474
          %v1898 = vrot.slane %v1892, 2
          %v1899 = vrot.slane %v1893, 2
          %v1900 = vsel %vm534, %v1898, %v1899
          %v1901 = vrot.slane %v1894, 2
          %v1902 = vsel %vm534, %v1899, %v1901
          %1903 = vrot.lane.b32.xlu0 %v1900, 123
          %v1904 = vpop.permute.xlu0 %1903
          %1905 = vrot.lane.b32.xlu0 %v1902, 123
          %v1906 = vpop.permute.xlu0 %1905
          %v1909 = vadd.f32 %v1887, %v1904
          %v1910 = vadd.f32 %v1888, %v1906
          %v1911 = vstv %s1890
          %v1912 = vmul.f32 %v1911, %v475
          %v1913 = vmul.f32 %v1911, %v476
          %v1914 = vmul.f32 %v1911, %v477
          %v1918 = vrot.slane %v1912, 2
          %v1919 = vrot.slane %v1913, 2
          %v1920 = vsel %vm534, %v1918, %v1919
          %v1921 = vrot.slane %v1914, 2
          %v1922 = vsel %vm534, %v1919, %v1921
          %1923 = vrot.lane.b32.xlu0 %v1920, 123
          %v1924 = vpop.permute.xlu0 %1923
          %1925 = vrot.lane.b32.xlu0 %v1922, 123
          %v1926 = vpop.permute.xlu0 %1925
          %v1929 = vadd.f32 %v1909, %v1924
          %v1930 = vadd.f32 %v1910, %v1926
          %s1931 = sld [smem:[#allocation5 + $0x1a]]
          %s1932 = sld [smem:[#allocation5 + $0x4b]]
          %v1933 = vstv %s1931
          %v1934 = vmul.f32 %v1933, %v472
          %v1935 = vmul.f32 %v1933, %v473
          %v1936 = vmul.f32 %v1933, %v474
          %v1940 = vrot.slane %v1934, 3
          %v1941 = vrot.slane %v1935, 3
          %v1942 = vsel %vm569, %v1940, %v1941
          %v1943 = vrot.slane %v1936, 3
          %v1944 = vsel %vm569, %v1941, %v1943
          %1945 = vrot.lane.b32.xlu0 %v1942, 123
          %v1946 = vpop.permute.xlu0 %1945
          %1947 = vrot.lane.b32.xlu0 %v1944, 123
          %v1948 = vpop.permute.xlu0 %1947
          %v1951 = vadd.f32 %v1929, %v1946
          %v1952 = vadd.f32 %v1930, %v1948
          %v1953 = vstv %s1932
          %v1954 = vmul.f32 %v1953, %v475
          %v1955 = vmul.f32 %v1953, %v476
          %v1956 = vmul.f32 %v1953, %v477
          %v1960 = vrot.slane %v1954, 3
          %v1961 = vrot.slane %v1955, 3
          %v1962 = vsel %vm569, %v1960, %v1961
          %v1963 = vrot.slane %v1956, 3
          %v1964 = vsel %vm569, %v1961, %v1963
          %1965 = vrot.lane.b32.xlu0 %v1962, 123
          %v1966 = vpop.permute.xlu0 %1965
          %1967 = vrot.lane.b32.xlu0 %v1964, 123
          %v1968 = vpop.permute.xlu0 %1967
          %v1971 = vadd.f32 %v1951, %v1966
          %v1972 = vadd.f32 %v1952, %v1968
          %s1973 = sld [smem:[#allocation5 + $0x21]]
          %s1974 = sld [smem:[#allocation5 + $0x52]]
          %v1975 = vstv %s1973
          %v1976 = vmul.f32 %v1975, %v472
          %v1977 = vmul.f32 %v1975, %v473
          %v1978 = vmul.f32 %v1975, %v474
          %v1982 = vrot.slane %v1976, 4
          %v1983 = vrot.slane %v1977, 4
          %v1984 = vsel %vm199, %v1982, %v1983
          %v1985 = vrot.slane %v1978, 4
          %v1986 = vsel %vm199, %v1983, %v1985
          %1987 = vrot.lane.b32.xlu0 %v1984, 123
          %v1988 = vpop.permute.xlu0 %1987
          %1989 = vrot.lane.b32.xlu0 %v1986, 123
          %v1990 = vpop.permute.xlu0 %1989
          %v1993 = vadd.f32 %v1971, %v1988
          %v1994 = vadd.f32 %v1972, %v1990
          %v1995 = vstv %s1974
          %v1996 = vmul.f32 %v1995, %v475
          %v1997 = vmul.f32 %v1995, %v476
          %v1998 = vmul.f32 %v1995, %v477
          %v2002 = vrot.slane %v1996, 4
          %v2003 = vrot.slane %v1997, 4
          %v2004 = vsel %vm199, %v2002, %v2003
          %v2005 = vrot.slane %v1998, 4
          %v2006 = vsel %vm199, %v2003, %v2005
          %2007 = vrot.lane.b32.xlu0 %v2004, 123
          %v2008 = vpop.permute.xlu0 %2007
          %2009 = vrot.lane.b32.xlu0 %v2006, 123
          %v2010 = vpop.permute.xlu0 %2009
          %v2013 = vadd.f32 %v1993, %v2008
          %v2014 = vadd.f32 %v1994, %v2010
          %s2015 = sld [smem:[#allocation5 + $0x28]]
          %s2016 = sld [smem:[#allocation5 + $0x59]]
          %v2017 = vstv %s2015
          %v2018 = vmul.f32 %v2017, %v472
          %v2019 = vmul.f32 %v2017, %v473
          %v2020 = vmul.f32 %v2017, %v474
          %v2024 = vrot.slane %v2018, 5
          %v2025 = vrot.slane %v2019, 5
          %v2026 = vsel %vm638, %v2024, %v2025
          %v2027 = vrot.slane %v2020, 5
          %v2028 = vsel %vm638, %v2025, %v2027
          %2029 = vrot.lane.b32.xlu0 %v2026, 123
          %v2030 = vpop.permute.xlu0 %2029
          %2031 = vrot.lane.b32.xlu0 %v2028, 123
          %v2032 = vpop.permute.xlu0 %2031
          %v2035 = vadd.f32 %v2013, %v2030
          %v2036 = vadd.f32 %v2014, %v2032
          %v2037 = vstv %s2016
          %v2038 = vmul.f32 %v2037, %v475
          %v2039 = vmul.f32 %v2037, %v476
          %v2040 = vmul.f32 %v2037, %v477
          %v2044 = vrot.slane %v2038, 5
          %v2045 = vrot.slane %v2039, 5
          %v2046 = vsel %vm638, %v2044, %v2045
          %v2047 = vrot.slane %v2040, 5
          %v2048 = vsel %vm638, %v2045, %v2047
          %2049 = vrot.lane.b32.xlu0 %v2046, 123
          %v2050 = vpop.permute.xlu0 %2049
          %2051 = vrot.lane.b32.xlu0 %v2048, 123
          %v2052 = vpop.permute.xlu0 %2051
          %v2055 = vadd.f32 %v2035, %v2050
          %v2056 = vadd.f32 %v2036, %v2052
          %s2057 = sld [smem:[#allocation5 + $0x2f]]
          %s2058 = sld [smem:[#allocation5 + $0x60]]
          %v2059 = vstv %s2057
          %v2060 = vmul.f32 %v2059, %v472
          %v2061 = vmul.f32 %v2059, %v473
          %v2062 = vmul.f32 %v2059, %v474
          %v2066 = vrot.slane %v2060, 6
          %v2067 = vrot.slane %v2061, 6
          %v2068 = vsel %vm673, %v2066, %v2067
          %v2069 = vrot.slane %v2062, 6
          %v2070 = vsel %vm673, %v2067, %v2069
          %2071 = vrot.lane.b32.xlu0 %v2068, 123
          %v2072 = vpop.permute.xlu0 %2071
          %2073 = vrot.lane.b32.xlu0 %v2070, 123
          %v2074 = vpop.permute.xlu0 %2073
          %v2077 = vadd.f32 %v2055, %v2072
          %v2078 = vadd.f32 %v2056, %v2074
          %v2079 = vstv %s2058
          %v2080 = vmul.f32 %v2079, %v475
          %v2081 = vmul.f32 %v2079, %v476
          %v2082 = vmul.f32 %v2079, %v477
          %v2086 = vrot.slane %v2080, 6
          %v2087 = vrot.slane %v2081, 6
          %v2088 = vsel %vm673, %v2086, %v2087
          %v2089 = vrot.slane %v2082, 6
          %v2090 = vsel %vm673, %v2087, %v2089
          %2091 = vrot.lane.b32.xlu0 %v2088, 123
          %v2092 = vpop.permute.xlu0 %2091
          %2093 = vrot.lane.b32.xlu0 %v2090, 123
          %v2094 = vpop.permute.xlu0 %2093
          %v2097 = vadd.f32 %v2077, %v2092
          %v2098 = vadd.f32 %v2078, %v2094
          %s2099 = sld [smem:[#allocation5 + $0x6]]
          %s2100 = sld [smem:[#allocation5 + $0x37]]
          %v2101 = vstv %s2099
          %v2102 = vmul.f32 %v2101, %v472
          %v2103 = vmul.f32 %v2101, %v473
          %2106 = vrot.lane.b32.xlu0 %v2102, 122
          %v2107 = vpop.permute.xlu0 %2106
          %2108 = vrot.lane.b32.xlu0 %v2103, 122
          %v2109 = vpop.permute.xlu0 %2108
          %v2112 = vadd.f32 %v2097, %v2107
          %v2113 = vadd.f32 %v2098, %v2109
          %v2114 = vstv %s2100
          %v2115 = vmul.f32 %v2114, %v475
          %v2116 = vmul.f32 %v2114, %v476
          %2119 = vrot.lane.b32.xlu0 %v2115, 122
          %v2120 = vpop.permute.xlu0 %2119
          %2121 = vrot.lane.b32.xlu0 %v2116, 122
          %v2122 = vpop.permute.xlu0 %2121
          %v2125 = vadd.f32 %v2112, %v2120
          %v2126 = vadd.f32 %v2113, %v2122
          %s2127 = sld [smem:[#allocation5 + $0xd]]
          %s2128 = sld [smem:[#allocation5 + $0x3e]]
          %v2129 = vstv %s2127
          %v2130 = vmul.f32 %v2129, %v472
          %v2131 = vmul.f32 %v2129, %v473
          %v2132 = vmul.f32 %v2129, %v474
          %v2136 = vrot.slane %v2130, 1
          %v2137 = vrot.slane %v2131, 1
          %v2138 = vsel %vm499, %v2136, %v2137
          %v2139 = vrot.slane %v2132, 1
          %v2140 = vsel %vm499, %v2137, %v2139
          %2141 = vrot.lane.b32.xlu0 %v2138, 122
          %v2142 = vpop.permute.xlu0 %2141
          %2143 = vrot.lane.b32.xlu0 %v2140, 122
          %v2144 = vpop.permute.xlu0 %2143
          %v2147 = vadd.f32 %v2125, %v2142
          %v2148 = vadd.f32 %v2126, %v2144
          %v2149 = vstv %s2128
          %v2150 = vmul.f32 %v2149, %v475
          %v2151 = vmul.f32 %v2149, %v476
          %v2152 = vmul.f32 %v2149, %v477
          %v2156 = vrot.slane %v2150, 1
          %v2157 = vrot.slane %v2151, 1
          %v2158 = vsel %vm499, %v2156, %v2157
          %v2159 = vrot.slane %v2152, 1
          %v2160 = vsel %vm499, %v2157, %v2159
          %2161 = vrot.lane.b32.xlu0 %v2158, 122
          %v2162 = vpop.permute.xlu0 %2161
          %2163 = vrot.lane.b32.xlu0 %v2160, 122
          %v2164 = vpop.permute.xlu0 %2163
          %v2167 = vadd.f32 %v2147, %v2162
          %v2168 = vadd.f32 %v2148, %v2164
          %s2169 = sld [smem:[#allocation5 + $0x14]]
          %s2170 = sld [smem:[#allocation5 + $0x45]]
          %v2171 = vstv %s2169
          %v2172 = vmul.f32 %v2171, %v472
          %v2173 = vmul.f32 %v2171, %v473
          %v2174 = vmul.f32 %v2171, %v474
          %v2178 = vrot.slane %v2172, 2
          %v2179 = vrot.slane %v2173, 2
          %v2180 = vsel %vm534, %v2178, %v2179
          %v2181 = vrot.slane %v2174, 2
          %v2182 = vsel %vm534, %v2179, %v2181
          %2183 = vrot.lane.b32.xlu0 %v2180, 122
          %v2184 = vpop.permute.xlu0 %2183
          %2185 = vrot.lane.b32.xlu0 %v2182, 122
          %v2186 = vpop.permute.xlu0 %2185
          %v2189 = vadd.f32 %v2167, %v2184
          %v2190 = vadd.f32 %v2168, %v2186
          %v2191 = vstv %s2170
          %v2192 = vmul.f32 %v2191, %v475
          %v2193 = vmul.f32 %v2191, %v476
          %v2194 = vmul.f32 %v2191, %v477
          %v2198 = vrot.slane %v2192, 2
          %v2199 = vrot.slane %v2193, 2
          %v2200 = vsel %vm534, %v2198, %v2199
          %v2201 = vrot.slane %v2194, 2
          %v2202 = vsel %vm534, %v2199, %v2201
          %2203 = vrot.lane.b32.xlu0 %v2200, 122
          %v2204 = vpop.permute.xlu0 %2203
          %2205 = vrot.lane.b32.xlu0 %v2202, 122
          %v2206 = vpop.permute.xlu0 %2205
          %v2209 = vadd.f32 %v2189, %v2204
          %v2210 = vadd.f32 %v2190, %v2206
          %s2211 = sld [smem:[#allocation5 + $0x1b]]
          %s2212 = sld [smem:[#allocation5 + $0x4c]]
          %v2213 = vstv %s2211
          %v2214 = vmul.f32 %v2213, %v472
          %v2215 = vmul.f32 %v2213, %v473
          %v2216 = vmul.f32 %v2213, %v474
          %v2220 = vrot.slane %v2214, 3
          %v2221 = vrot.slane %v2215, 3
          %v2222 = vsel %vm569, %v2220, %v2221
          %v2223 = vrot.slane %v2216, 3
          %v2224 = vsel %vm569, %v2221, %v2223
          %2225 = vrot.lane.b32.xlu0 %v2222, 122
          %v2226 = vpop.permute.xlu0 %2225
          %2227 = vrot.lane.b32.xlu0 %v2224, 122
          %v2228 = vpop.permute.xlu0 %2227
          %v2231 = vadd.f32 %v2209, %v2226
          %v2232 = vadd.f32 %v2210, %v2228
          %v2233 = vstv %s2212
          %v2234 = vmul.f32 %v2233, %v475
          %v2235 = vmul.f32 %v2233, %v476
          %v2236 = vmul.f32 %v2233, %v477
          %v2240 = vrot.slane %v2234, 3
          %v2241 = vrot.slane %v2235, 3
          %v2242 = vsel %vm569, %v2240, %v2241
          %v2243 = vrot.slane %v2236, 3
          %v2244 = vsel %vm569, %v2241, %v2243
          %2245 = vrot.lane.b32.xlu0 %v2242, 122
          %v2246 = vpop.permute.xlu0 %2245
          %2247 = vrot.lane.b32.xlu0 %v2244, 122
          %v2248 = vpop.permute.xlu0 %2247
          %v2251 = vadd.f32 %v2231, %v2246
          %v2252 = vadd.f32 %v2232, %v2248
          %s2253 = sld [smem:[#allocation5 + $0x22]]
          %s2254 = sld [smem:[#allocation5 + $0x53]]
          %v2255 = vstv %s2253
          %v2256 = vmul.f32 %v2255, %v472
          %v2257 = vmul.f32 %v2255, %v473
          %v2258 = vmul.f32 %v2255, %v474
          %v2262 = vrot.slane %v2256, 4
          %v2263 = vrot.slane %v2257, 4
          %v2264 = vsel %vm199, %v2262, %v2263
          %v2265 = vrot.slane %v2258, 4
          %v2266 = vsel %vm199, %v2263, %v2265
          %2267 = vrot.lane.b32.xlu0 %v2264, 122
          %v2268 = vpop.permute.xlu0 %2267
          %2269 = vrot.lane.b32.xlu0 %v2266, 122
          %v2270 = vpop.permute.xlu0 %2269
          %v2273 = vadd.f32 %v2251, %v2268
          %v2274 = vadd.f32 %v2252, %v2270
          %v2275 = vstv %s2254
          %v2276 = vmul.f32 %v2275, %v475
          %v2277 = vmul.f32 %v2275, %v476
          %v2278 = vmul.f32 %v2275, %v477
          %v2282 = vrot.slane %v2276, 4
          %v2283 = vrot.slane %v2277, 4
          %v2284 = vsel %vm199, %v2282, %v2283
          %v2285 = vrot.slane %v2278, 4
          %v2286 = vsel %vm199, %v2283, %v2285
          %2287 = vrot.lane.b32.xlu0 %v2284, 122
          %v2288 = vpop.permute.xlu0 %2287
          %2289 = vrot.lane.b32.xlu0 %v2286, 122
          %v2290 = vpop.permute.xlu0 %2289
          %v2293 = vadd.f32 %v2273, %v2288
          %v2294 = vadd.f32 %v2274, %v2290
          %s2295 = sld [smem:[#allocation5 + $0x29]]
          %s2296 = sld [smem:[#allocation5 + $0x5a]]
          %v2297 = vstv %s2295
          %v2298 = vmul.f32 %v2297, %v472
          %v2299 = vmul.f32 %v2297, %v473
          %v2300 = vmul.f32 %v2297, %v474
          %v2304 = vrot.slane %v2298, 5
          %v2305 = vrot.slane %v2299, 5
          %v2306 = vsel %vm638, %v2304, %v2305
          %v2307 = vrot.slane %v2300, 5
          %v2308 = vsel %vm638, %v2305, %v2307
          %2309 = vrot.lane.b32.xlu0 %v2306, 122
          %v2310 = vpop.permute.xlu0 %2309
          %2311 = vrot.lane.b32.xlu0 %v2308, 122
          %v2312 = vpop.permute.xlu0 %2311
          %v2315 = vadd.f32 %v2293, %v2310
          %v2316 = vadd.f32 %v2294, %v2312
          %v2317 = vstv %s2296
          %v2318 = vmul.f32 %v2317, %v475
          %v2319 = vmul.f32 %v2317, %v476
          %v2320 = vmul.f32 %v2317, %v477
          %v2324 = vrot.slane %v2318, 5
          %v2325 = vrot.slane %v2319, 5
          %v2326 = vsel %vm638, %v2324, %v2325
          %v2327 = vrot.slane %v2320, 5
          %v2328 = vsel %vm638, %v2325, %v2327
          %2329 = vrot.lane.b32.xlu0 %v2326, 122
          %v2330 = vpop.permute.xlu0 %2329
          %2331 = vrot.lane.b32.xlu0 %v2328, 122
          %v2332 = vpop.permute.xlu0 %2331
          %v2335 = vadd.f32 %v2315, %v2330
          %v2336 = vadd.f32 %v2316, %v2332
          %s2337 = sld [smem:[#allocation5 + $0x30]]
          %s2338 = sld [smem:[#allocation5 + $0x61]]
          %v2339 = vstv %s2337
          %v2340 = vmul.f32 %v2339, %v472
          %v2341 = vmul.f32 %v2339, %v473
          %v2342 = vmul.f32 %v2339, %v474
          %v2346 = vrot.slane %v2340, 6
          %v2347 = vrot.slane %v2341, 6
          %v2348 = vsel %vm673, %v2346, %v2347
          %v2349 = vrot.slane %v2342, 6
          %v2350 = vsel %vm673, %v2347, %v2349
          %2351 = vrot.lane.b32.xlu0 %v2348, 122
          %v2352 = vpop.permute.xlu0 %2351
          %2353 = vrot.lane.b32.xlu0 %v2350, 122
          %v2354 = vpop.permute.xlu0 %2353
          %v2357 = vadd.f32 %v2335, %v2352
          %v2358 = vadd.f32 %v2336, %v2354
          %v2359 = vstv %s2338
          %v2360 = vmul.f32 %v2359, %v475
          %v2361 = vmul.f32 %v2359, %v476
          %v2362 = vmul.f32 %v2359, %v477
          %v2366 = vrot.slane %v2360, 6
          %v2367 = vrot.slane %v2361, 6
          %v2368 = vsel %vm673, %v2366, %v2367
          %v2369 = vrot.slane %v2362, 6
          %v2370 = vsel %vm673, %v2367, %v2369
          %2371 = vrot.lane.b32.xlu0 %v2368, 122
          %v2372 = vpop.permute.xlu0 %2371
          %2373 = vrot.lane.b32.xlu0 %v2370, 122
          %v2374 = vpop.permute.xlu0 %2373
          %v2377 = vadd.f32 %v2357, %v2372
          %v2378 = vadd.f32 %v2358, %v2374
          %v2379 = vxor.u32 %v2377, 2147483648
          %v2380 = vxor.u32 %v2378, 2147483648
          %v2381 = vmul.f32 %v2379, 1.442695
          %v2382 = vpow.pop %v2381
          %v2383 = vmul.f32 %v2380, 1.442695
          %v2384 = vpow.pop %v2383
          %v2385 = vadd.f32 %v2382, 1.0
          %v2386 = vadd.f32 %v2384, 1.0
          %v2387 = vrcp.pop %v2385
          %v2388 = vmul.f32 %v2385, %v2387
          %v2389 = vsub.f32 1.0, %v2388
          %v2390 = vmul.f32 %v2387, %v2389
          %v2391 = vadd.f32 %v2387, %v2390
          %vm2392 = vweird.f32 %v2385
          %vm2393 = vweird.f32 %v2387
          %vm2394 = vmor %vm2392, %vm2393
          %v2395 = vsel %vm2394, %v2387, %v2391
          %v2396 = vand.u32 2147483647, %v2385
          %vm2397 = vcmp.eq.f32.partialorder %v2396, 8.507059e+37
          %v2398 = vand.u32 %v2385, 2147483648
          %v2399 = vor.u32 1.1754944e-38, %v2398
          %v2400 = vsel %vm2397, %v2399, %v2395
          %v2401 = vmul.f32 1.0, %v2400
          %v2402 = vrcp.pop %v2386
          %v2403 = vmul.f32 %v2386, %v2402
          %v2404 = vsub.f32 1.0, %v2403
          %v2405 = vmul.f32 %v2402, %v2404
          %v2406 = vadd.f32 %v2402, %v2405
          %vm2407 = vweird.f32 %v2386
          %vm2408 = vweird.f32 %v2402
          %vm2409 = vmor %vm2407, %vm2408
          %v2410 = vsel %vm2409, %v2402, %v2406
          %v2411 = vand.u32 2147483647, %v2386
          %vm2412 = vcmp.eq.f32.partialorder %v2411, 8.507059e+37
          %v2413 = vand.u32 %v2386, 2147483648
          %v2414 = vor.u32 1.1754944e-38, %v2413
          %v2415 = vsel %vm2412, %v2414, %v2410
          %v2416 = vmul.f32 1.0, %v2415
          %vm2417 = vcmp.lt.s32.totalorder %v251, 16
          %vm2418 = vmand %vm252, %vm2417
          %2419 = vst.msk [vmem:[%s191] sm:$0x1] %vm2418, %v2401
          %2421 = vst [vmem:[#allocation1] sm:$0xff] %v2401
          %s2422 = scalar_lea.vmem [#allocation1], 1
          %v2423 = vld [vmem:[%s2422] ss:$9 sm:$0xff]
          %2424 = vrot.lane.b32.xlu0 %v2423, 16
          %v2425 = vpop.permute.xlu0 %2424
          %vm2427 = vcmp.ge.s32.totalorder %v251, 16
          %vm2428 = vcmp.lt.s32.totalorder %v251, 32
          %vm2429 = vmand %vm2427, %vm2428
          %2430 = vst.msk [vmem:[%s191] sm:$0x1] %vm2429, %v2425
          %2431 = vst [vmem:[#allocation1] sm:$0xff] %v2401
          %s2432 = scalar_lea.vmem [#allocation1], 2
          %v2433 = vld [vmem:[%s2432] ss:$9 sm:$0xff]
          %2434 = vrot.lane.b32.xlu0 %v2433, 32
          %v2435 = vpop.permute.xlu0 %2434
          %vm2437 = vcmp.ge.s32.totalorder %v251, 32
          %vm2438 = vcmp.lt.s32.totalorder %v251, 48
          %vm2439 = vmand %vm2437, %vm2438
          %2440 = vst.msk [vmem:[%s191] sm:$0x1] %vm2439, %v2435
          %2441 = vst [vmem:[#allocation1] sm:$0xff] %v2401
          %s2442 = scalar_lea.vmem [#allocation1], 3
          %v2443 = vld [vmem:[%s2442] ss:$9 sm:$0xff]
          %2444 = vrot.lane.b32.xlu0 %v2443, 48
          %v2445 = vpop.permute.xlu0 %2444
          %vm2447 = vcmp.ge.s32.totalorder %v251, 48
          %vm2448 = vcmp.lt.s32.totalorder %v251, 64
          %vm2449 = vmand %vm2447, %vm2448
          %2450 = vst.msk [vmem:[%s191] sm:$0x1] %vm2449, %v2445
          %2451 = vst [vmem:[#allocation1] sm:$0xff] %v2401
          %s2452 = scalar_lea.vmem [#allocation1], 4
          %v2453 = vld [vmem:[%s2452] ss:$9 sm:$0xff]
          %2454 = vrot.lane.b32.xlu0 %v2453, 64
          %v2455 = vpop.permute.xlu0 %2454
          %vm2457 = vcmp.ge.s32.totalorder %v251, 64
          %vm2458 = vcmp.lt.s32.totalorder %v251, 80
          %vm2459 = vmand %vm2457, %vm2458
          %2460 = vst.msk [vmem:[%s191] sm:$0x1] %vm2459, %v2455
          %2461 = vst [vmem:[#allocation1] sm:$0xff] %v2401
          %s2462 = scalar_lea.vmem [#allocation1], 5
          %v2463 = vld [vmem:[%s2462] ss:$9 sm:$0xff]
          %2464 = vrot.lane.b32.xlu0 %v2463, 80
          %v2465 = vpop.permute.xlu0 %2464
          %vm2467 = vcmp.ge.s32.totalorder %v251, 80
          %vm2468 = vcmp.lt.s32.totalorder %v251, 96
          %vm2469 = vmand %vm2467, %vm2468
          %2470 = vst.msk [vmem:[%s191] sm:$0x1] %vm2469, %v2465
          %2471 = vst [vmem:[#allocation1] sm:$0xff] %v2401
          %s2472 = scalar_lea.vmem [#allocation1], 6
          %v2473 = vld [vmem:[%s2472] ss:$9 sm:$0xff]
          %2474 = vrot.lane.b32.xlu0 %v2473, 96
          %v2475 = vpop.permute.xlu0 %2474
          %vm2477 = vcmp.ge.s32.totalorder %v251, 96
          %vm2478 = vcmp.lt.s32.totalorder %v251, 112
          %vm2479 = vmand %vm2477, %vm2478
          %2480 = vst.msk [vmem:[%s191] sm:$0x1] %vm2479, %v2475
          %2481 = vst [vmem:[#allocation1] sm:$0xff] %v2401
          %s2482 = scalar_lea.vmem [#allocation1], 7
          %v2483 = vld [vmem:[%s2482] ss:$9 sm:$0xff]
          %2484 = vrot.lane.b32.xlu0 %v2483, 112
          %v2485 = vpop.permute.xlu0 %2484
          %vm2487 = vcmp.ge.s32.totalorder %v251, 112
          %vm2488 = vcmp.lt.s32.totalorder %v251, 128
          %vm2489 = vmand %vm2487, %vm2488
          %2490 = vst.msk [vmem:[%s191] sm:$0x1] %vm2489, %v2485
          %2491 = vst.msk [vmem:[%s191 + $0x1] sm:$0x1] %vm2418, %v2416
          %2493 = vst [vmem:[#allocation1] sm:$0xff] %v2416
          %s2494 = scalar_lea.vmem [#allocation1], 1
          %v2495 = vld [vmem:[%s2494] ss:$9 sm:$0xff]
          %2496 = vrot.lane.b32.xlu0 %v2495, 16
          %v2497 = vpop.permute.xlu0 %2496
          %2499 = vst.msk [vmem:[%s191 + $0x1] sm:$0x1] %vm2429, %v2497
          %2500 = vst [vmem:[#allocation1] sm:$0xff] %v2416
          %s2501 = scalar_lea.vmem [#allocation1], 2
          %v2502 = vld [vmem:[%s2501] ss:$9 sm:$0xff]
          %2503 = vrot.lane.b32.xlu0 %v2502, 32
          %v2504 = vpop.permute.xlu0 %2503
          %2506 = vst.msk [vmem:[%s191 + $0x1] sm:$0x1] %vm2439, %v2504
          %2507 = vst [vmem:[#allocation1] sm:$0xff] %v2416
          %s2508 = scalar_lea.vmem [#allocation1], 3
          %v2509 = vld [vmem:[%s2508] ss:$9 sm:$0xff]
          %2510 = vrot.lane.b32.xlu0 %v2509, 48
          %v2511 = vpop.permute.xlu0 %2510
          %2513 = vst.msk [vmem:[%s191 + $0x1] sm:$0x1] %vm2449, %v2511
          %2514 = vst [vmem:[#allocation1] sm:$0xff] %v2416
          %s2515 = scalar_lea.vmem [#allocation1], 4
          %v2516 = vld [vmem:[%s2515] ss:$9 sm:$0xff]
          %2517 = vrot.lane.b32.xlu0 %v2516, 64
          %v2518 = vpop.permute.xlu0 %2517
          %2520 = vst.msk [vmem:[%s191 + $0x1] sm:$0x1] %vm2459, %v2518
          %2521 = vst [vmem:[#allocation1] sm:$0xff] %v2416
          %s2522 = scalar_lea.vmem [#allocation1], 5
          %v2523 = vld [vmem:[%s2522] ss:$9 sm:$0xff]
          %2524 = vrot.lane.b32.xlu0 %v2523, 80
          %v2525 = vpop.permute.xlu0 %2524
          %2527 = vst.msk [vmem:[%s191 + $0x1] sm:$0x1] %vm2469, %v2525
          %2528 = vst [vmem:[#allocation1] sm:$0xff] %v2416
          %s2529 = scalar_lea.vmem [#allocation1], 6
          %v2530 = vld [vmem:[%s2529] ss:$9 sm:$0xff]
          %2531 = vrot.lane.b32.xlu0 %v2530, 96
          %v2532 = vpop.permute.xlu0 %2531
          %2534 = vst.msk [vmem:[%s191 + $0x1] sm:$0x1] %vm2479, %v2532
          %2535 = vst [vmem:[#allocation1] sm:$0xff] %v2416
          %s2536 = scalar_lea.vmem [#allocation1], 7
          %v2537 = vld [vmem:[%s2536] ss:$9 sm:$0xff]
          %2538 = vrot.lane.b32.xlu0 %v2537, 112
          %v2539 = vpop.permute.xlu0 %2538
          %2541 = vst.msk [vmem:[%s191 + $0x1] sm:$0x1] %vm2489, %v2539
        $region44: #{tpu_custom_call.1} parent=27 // pred_fallthru
          _
        %s2542 = sand.u32 %s89, 1
        %s2543 = scalar_lea.sflag [#allocation7], %s2542
        %s2544 = sand.u32 %s89, 1
        %s2545 = smul.addr %s2544, 2
        %s2546 = scalar_lea.vmem [#allocation10], %s2545
        // Predicated region
        $region45: #{tpu_custom_call.1} parent=27 // pred_check
          %p2547 = pneg %p99
        $region46: #{tpu_custom_call.1} parent=27 // pred_check_branch
          %2549 = sbr.rel (%p2547) target = $region48
        $region47: #{tpu_custom_call.1} parent=27 // pred_region
          %2551 = vsyncadd %s2543, 0
          %s2552 = smul.addr %s24, 2
          %s2553 = scalar_lea.hbm %s2, %s2552
          %s2555 = sshll.u32 %s2546, 4
          %s2556 = int_to_ptr.vmem [resolvable:$true] %s2555
          %s2557 = sshll.u32 %s2553, 4
          %s2558 = int_to_ptr.hbm [resolvable:$true] %s2557
          %2560 = dma.vmem_to_hbm [thread:$0]  %s2556, 32, %s2558, %s2543
        $region48: #{tpu_custom_call.1} parent=27 // pred_fallthru
          _
      $region28: #{tpu_custom_call.1} parent=5 // pred_fallthru
        _
      %p2561 = scmp.le.s32.totalorder 2, %s15
      // Predicated region
      $region49: #{tpu_custom_call.1} parent=5 // pred_check
        %p2562 = pneg %p2561
      $region50: #{tpu_custom_call.1} parent=5 // pred_check_branch
        %2564 = sbr.rel (%p2562) target = $region52
      $region51: #{tpu_custom_call.1} parent=5 // pred_region
        %s2565 = ssub.s32 %s15, 2
        // Predicated region
        $region53: #{tpu_custom_call.1} parent=51 // pred_check
          %p2566 = pneg %p105
        $region54: #{tpu_custom_call.1} parent=51 // pred_check_branch
          %2568 = sbr.rel (%p2566) target = $region56
        $region55: #{tpu_custom_call.1} parent=51 // pred_region
          %s2569 = sand.u32 %s90, 1
          %s2570 = scalar_lea.sflag [#allocation7], %s2569
          %s2571 = sand.u32 %s90, 1
          %s2572 = smul.addr %s2571, 2
          %s2573 = scalar_lea.vmem [#allocation10], %s2572
          %2575 = dma.done %s2570, 32
        $region56: #{tpu_custom_call.1} parent=51 // pred_fallthru
          _
      $region52: #{tpu_custom_call.1} parent=5 // pred_fallthru
        _
    $region6: #{tpu_custom_call.1} parent=1 // loop_footer
      %s19 = sadd.s32 1, %s15
    $region7: #{tpu_custom_call.1} parent=1 // loop_footer_branch
      %14 = sbr.rel target = $region3
    $region8: #{tpu_custom_call.1} parent=1 // loop_exit
      _
    %2576 = vsyncpa [#allocation6], 1
    %s2577 = scalar_lea.sflag [#allocation6], 1
    %2578 = vsyncpa %s2577, 1
    %2579 = vsyncpa [#allocation7], 1
    %s2580 = scalar_lea.sflag [#allocation7], 1
    %2581 = vsyncpa %s2580, 1
    %2582 = vsyncpa [#allocation8], 1
    %s2583 = scalar_lea.sflag [#allocation8], 1
    %2584 = vsyncpa %s2583, 1

</llo_original>
